<compile_context>
chip_gen: v7x
topology: tpu7x:2x2x1
jax: 0.10.0
libtpu: 0.0.40
codegen_flags: <defaults>
</compile_context>

<pallas_src>
import math
import functools

import jax
import jax.numpy as jnp
from jax.experimental import pallas as pl
from jax.experimental.pallas import tpu as pltpu

BN_EPS = 1e-5
LANE = 128                      # channel / K zero-padding target (lane width)
MAX_TILE_M = 128                # im2col rows per grid step (512 for prod shapes)
VMEM_LIMIT = 32 * 1024 * 1024   # safe on v5e/v6e/v7x


def _round_up(x, m):
    return ((x + m - 1) // m) * m


# ----------------------------------------------------------------------------
# Conv (as matmul) pass 1: y = patches @ w  (bf16 MXU, f32 acc) + BN moments.
# sum/ssq outputs keep a constant block index -> they stay VMEM-resident and
# accumulate across the M-tile grid (reduction axis must be "arbitrary").
# ----------------------------------------------------------------------------
def _conv_stats_kernel(p_ref, w_ref, y_ref, sum_ref, ssq_ref):
    y = jnp.dot(p_ref[...], w_ref[...], preferred_element_type=jnp.float32)
    y_ref[...] = y

    @pl.when(pl.program_id(0) == 0)
    def _init():
        sum_ref[...] = jnp.zeros_like(sum_ref)
        ssq_ref[...] = jnp.zeros_like(ssq_ref)

    sum_ref[...] += jnp.sum(y, axis=0, keepdims=True)
    ssq_ref[...] += jnp.sum(y * y, axis=0, keepdims=True)


# ----------------------------------------------------------------------------
# Conv pass 2: fused BatchNorm(scale/shift) + ReLU, lane-dense (128-ch) output.
# ----------------------------------------------------------------------------
def _bn_relu_kernel(y_ref, scale_ref, shift_ref, o_ref):
    y = y_ref[...] * scale_ref[...] + shift_ref[...]
    o_ref[...] = jnp.maximum(y, 0.0).astype(o_ref.dtype)


def _im2col_nhwc(x, kh, kw, sh, sw, ph, pw):
    """x: (N, H, W, C) -> (N*Ho*Wo, kh*kw*C) patches ordered [kh, kw, c]."""
    N, H, W, C = x.shape
    Ho = (H + 2 * ph - kh) // sh + 1
    Wo = (W + 2 * pw - kw) // sw + 1
    xp = jnp.pad(x, ((0, 0), (ph, ph), (pw, pw), (0, 0)))
    taps = []
    for i in range(kh):
        for j in range(kw):
            taps.append(xp[:, i:i + sh * Ho:sh, j:j + sw * Wo:sw, :])
    p = jnp.stack(taps, axis=3)                       # (N, Ho, Wo, kh*kw, C)
    return p.reshape(N * Ho * Wo, kh * kw * C), Ho, Wo


def conv_bn_relu(x, w, gamma, beta, stride):
    """x: (N, H, W, Cin) NHWC, w: (Cout, Cin, 3, 3) (PyTorch layout).
    Training-mode BatchNorm (biased batch stats over N*Ho*Wo) + ReLU.
    Conv bias omitted on purpose: exactly cancelled by the BN mean subtraction.
    Returns (N, Ho, Wo, Cout) in bfloat16."""
    N, H, W, Cin = x.shape
    Cout = w.shape[0]
    sh, sw = stride
    patches, Ho, Wo = _im2col_nhwc(x, 3, 3, sh, sw, 1, 1)

    M = N * Ho * Wo
    K = 9 * Cin
    KP = _round_up(K, LANE)                 # aligned MXU feed / vector loads
    CP = _round_up(Cout, LANE)              # lane-dense stores
    TM = min(MAX_TILE_M, _round_up(M, 8))
    MP = _round_up(M, TM)
    n_tiles = MP // TM

    # Zero padding keeps the math exact: padded rows/cols contribute 0 to the
    # matmul and to the BN moment sums (no bias => padded rows give y == 0).
    patches = jnp.pad(patches, ((0, MP - M), (0, KP - K))).astype(jnp.bfloat16)
    w2 = w.transpose(2, 3, 1, 0).reshape(K, Cout)     # rows ordered [kh, kw, cin]
    w2 = jnp.pad(w2, ((0, KP - K), (0, CP - Cout))).astype(jnp.bfloat16)

    y, s1, s2 = pl.pallas_call(
        _conv_stats_kernel,
        grid=(n_tiles,),
        in_specs=[
            pl.BlockSpec((TM, KP), lambda i: (i, 0)),
            pl.BlockSpec((KP, CP), lambda i: (0, 0)),
        ],
        out_specs=[
            pl.BlockSpec((TM, CP), lambda i: (i, 0)),
            pl.BlockSpec((1, CP), lambda i: (0, 0)),
            pl.BlockSpec((1, CP), lambda i: (0, 0)),
        ],
        out_shape=(
            jax.ShapeDtypeStruct((MP, CP), jnp.float32),
            jax.ShapeDtypeStruct((1, CP), jnp.float32),
            jax.ShapeDtypeStruct((1, CP), jnp.float32),
        ),
        compiler_params=pltpu.CompilerParams(
            dimension_semantics=("arbitrary",),   # cross-tile stat accumulation
            vmem_limit_bytes=VMEM_LIMIT),
    )(patches, w2)

    # Tiny per-channel epilogue in XLA: fold BN stats + affine into scale/shift.
    mean = s1[0] / M
    var = jnp.maximum(s2[0] / M - mean * mean, 0.0)   # biased (train-mode) var
    gamma_p = jnp.pad(gamma, (0, CP - Cout))
    beta_p = jnp.pad(beta, (0, CP - Cout))
    scale = gamma_p * jax.lax.rsqrt(var + BN_EPS)
    shift = beta_p - mean * scale

    out = pl.pallas_call(
        _bn_relu_kernel,
        grid=(n_tiles,),
        in_specs=[
            pl.BlockSpec((TM, CP), lambda i: (i, 0)),
            pl.BlockSpec((1, CP), lambda i: (0, 0)),
            pl.BlockSpec((1, CP), lambda i: (0, 0)),
        ],
        out_specs=pl.BlockSpec((TM, CP), lambda i: (i, 0)),
        out_shape=jax.ShapeDtypeStruct((MP, CP), jnp.bfloat16),
        compiler_params=pltpu.CompilerParams(
            dimension_semantics=("parallel",),
            vmem_limit_bytes=VMEM_LIMIT),
    )(y, scale.reshape(1, CP), shift.reshape(1, CP))

    # Un-pad; under jit the slice fuses into the next layer's im2col gather.
    return out[:M, :Cout].reshape(N, Ho, Wo, Cout)


# ----------------------------------------------------------------------------
# Batch-invariant q projection: q = pe @ Wp^T + b   (hoisted out of the grid).
# ----------------------------------------------------------------------------
def _q_proj_kernel(pe_ref, w_ref, b_ref, q_ref):
    q = jnp.dot(pe_ref[...], w_ref[...], preferred_element_type=jnp.float32)
    q_ref[...] = (q + b_ref[...]).astype(q_ref.dtype)


def q_project(pe, proj_w, proj_b):
    T, E = pe.shape
    return pl.pallas_call(
        _q_proj_kernel,
        out_shape=jax.ShapeDtypeStruct((T, E), jnp.bfloat16),
        compiler_params=pltpu.CompilerParams(vmem_limit_bytes=VMEM_LIMIT),
    )(pe.astype(jnp.bfloat16), proj_w.T.astype(jnp.bfloat16),
      proj_b.reshape(1, E).astype(jnp.float32))


# ----------------------------------------------------------------------------
# Attention hot path: scores = softmax(q @ k^T / sqrt(E)),  vecs = scores @ v.
# Grid over the batch ("parallel": one batch per TensorCore on megacore parts);
# q has a constant block index, so it is DMA'd into VMEM only once.
# ----------------------------------------------------------------------------
def _attention_kernel(q_ref, k_ref, v_ref, vec_ref, score_ref, *, scale):
    q = q_ref[...]                                    # (T, E)   bf16
    k = k_ref[0]                                      # (HW, E)  bf16
    s = jax.lax.dot_general(q, k, (((1,), (1,)), ((), ())),
                            preferred_element_type=jnp.float32) * scale
    s = s - jnp.max(s, axis=-1, keepdims=True)
    e = jnp.exp(s)
    denom = jnp.sum(e, axis=-1, keepdims=True)
    p = e * pl.reciprocal(denom, approx=True)         # EUP slot, ~free
    score_ref[0] = p
    vec_ref[0] = jnp.dot(p.astype(jnp.bfloat16), v_ref[0],
                         preferred_element_type=jnp.float32)


def attention(q, k_flat, v_flat, e_true):
    N, HW, E = k_flat.shape
    T = q.shape[0]
    kern = functools.partial(_attention_kernel, scale=1.0 / math.sqrt(e_true))
    vecs, scores = pl.pallas_call(
        kern,
        grid=(N,),
        in_specs=[
            pl.BlockSpec((T, E), lambda n: (0, 0)),        # shared q, fetched once
            pl.BlockSpec((1, HW, E), lambda n: (n, 0, 0)),
            pl.BlockSpec((1, HW, E), lambda n: (n, 0, 0)),
        ],
        out_specs=[
            pl.BlockSpec((1, T, E), lambda n: (n, 0, 0)),
            pl.BlockSpec((1, T, HW), lambda n: (n, 0, 0)),  # HW=128: lane-dense
        ],
        out_shape=(
            jax.ShapeDtypeStruct((N, T, E), jnp.float32),
            jax.ShapeDtypeStruct((N, T, HW), jnp.float32),
        ),
        compiler_params=pltpu.CompilerParams(
            dimension_semantics=("parallel",),
            vmem_limit_bytes=VMEM_LIMIT),
    )(q, k_flat, v_flat)
    return vecs, scores


# ----------------------------------------------------------------------------
# Module-level glue (kept in XLA: gathers / reshapes / skip-adds only)
# ----------------------------------------------------------------------------
def upsample_nearest(x, size):
    """PyTorch 'nearest' upsampling: src = floor(dst * in / out). x is NHWC."""
    N, H, W, C = x.shape
    oh, ow = size
    ih = (jnp.arange(oh) * H) // oh
    iw = (jnp.arange(ow) * W) // ow
    return x[:, ih[:, None], iw[None, :], :]


def positional_encoding(max_len, d_model):
    position = jnp.arange(max_len, dtype=jnp.float32)[:, None]
    div_term = jnp.exp(jnp.arange(0, d_model, 2, dtype=jnp.float32)
                       * (-math.log(10000.0) / d_model))
    pe = jnp.zeros((max_len, d_model), jnp.float32)
    pe = pe.at[:, 0::2].set(jnp.sin(position * div_term))
    pe = pe.at[:, 1::2].set(jnp.cos(position * div_term))
    return pe   # q before projection == zeros + pe, identical for every batch


def init_params(key, in_channels, num_channels):
    enc_shapes = [(num_channels, in_channels), (num_channels, num_channels),
                  (num_channels, num_channels), (num_channels, num_channels)]
    dec_shapes = [(num_channels, num_channels), (num_channels, num_channels),
                  (num_channels, num_channels), (in_channels, num_channels)]
    params = {"enc": [], "dec": []}
    for name, shapes in (("enc", enc_shapes), ("dec", dec_shapes)):
        for co, ci in shapes:
            key, kw_ = jax.random.split(key)
            w = 0.05 * jax.random.normal(kw_, (co, ci, 3, 3), jnp.float32)
            gamma = jnp.ones((co,), jnp.float32)    # BN affine defaults
            beta = jnp.zeros((co,), jnp.float32)
            # Conv bias omitted: mathematically cancelled by train-mode BN.
            params[name].append((w, gamma, beta))
    key, kw_, kb_ = jax.random.split(key, 3)
    params["proj_w"] = 0.05 * jax.random.normal(kw_, (in_channels, in_channels),
                                                jnp.float32)
    params["proj_b"] = 0.05 * jax.random.normal(kb_, (in_channels,), jnp.float32)
    return params


def position_attention_forward(x, params, max_length, h, w):
    """x: (N, E, H, W) NCHW float32 (PyTorch interface).
    Returns (attn_vecs (N, T, E), attn_scores (N, T, H, W))."""
    N, E, H, W = x.shape
    x_nhwc = jnp.transpose(x, (0, 2, 3, 1))     # single layout change at entry
    k = x_nhwc
    features = []
    enc_strides = [(1, 2), (2, 2), (2, 2), (2, 2)]
    for (wgt, g, bt), stride in zip(params["enc"], enc_strides):
        k = conv_bn_relu(k, wgt, g, bt, stride)
        features.append(k)

    n_dec = len(params["dec"])
    dec_sizes = [None, None, None, (h, w)]
    for i, (wgt, g, bt) in enumerate(params["dec"]):
        _, kh_, kw_, _ = k.shape
        size = dec_sizes[i] if dec_sizes[i] is not None else (2 * kh_, 2 * kw_)
        k = upsample_nearest(k, size)
        k = conv_bn_relu(k, wgt, g, bt, (1, 1))
        if i < n_dec - 1:
            k = k + features[n_dec - 2 - i]

    # q = project(pos_encoding(zeros)); batch-invariant -> computed exactly once.
    pe = positional_encoding(max_length, E)
    q = q_project(pe, params["proj_w"], params["proj_b"])       # (T, E) bf16

    # NHWC: k and v flatten with zero transposes.
    k_flat = k.reshape(N, H * W, E).astype(jnp.bfloat16)
    v_flat = x_nhwc.reshape(N, H * W, E).astype(jnp.bfloat16)
    # Dropout has p=0.0 -> no-op.
    vecs, scores = attention(q, k_flat, v_flat, E)
    return vecs, scores.reshape(N, max_length, H, W)


if __name__ == "__main__":
    # Small, self-consistent shapes: in_channels E=32, num_channels=8,
    # feature map h=8, w=16, batch N=2, max_length T=8.
    N, E, H, W = 2, 32, 8, 16
    NUM_CH = 8
    MAX_LEN = 8

    key = jax.random.PRNGKey(0)
    key, kx = jax.random.split(key)
    x = jax.random.normal(kx, (N, E, H, W), jnp.float32)
    params = init_params(key, in_channels=E, num_channels=NUM_CH)

    fwd = jax.jit(functools.partial(position_attention_forward,
                                    max_length=MAX_LEN, h=H, w=W))
    attn_vecs, attn_scores = fwd(x, params)
    attn_vecs = jax.block_until_ready(attn_vecs)
    attn_scores = jax.block_until_ready(attn_scores)

    assert attn_vecs.shape == (N, MAX_LEN, E)
    assert attn_scores.shape == (N, MAX_LEN, H, W)
    assert bool(jnp.all(jnp.isfinite(attn_vecs)))
    assert bool(jnp.all(jnp.isfinite(attn_scores)))
    # Softmax rows must sum to ~1 (approx EUP reciprocal -> loose tolerance).
    row_sums = attn_scores.reshape(N, MAX_LEN, -1).sum(-1)
    assert bool(jnp.allclose(row_sums, 1.0, atol=1e-2))
    print("KERNEL_OK")
</pallas_src>

<mosaic_0001>
module attributes {stable_mosaic.version = 11 : i64} {
  func.func @_conv_stats_kernel(%arg0: i32, %arg1: memref<128x384xbf16, #tpu.memory_space<vmem>>, %arg2: memref<384x128xbf16, #tpu.memory_space<vmem>>, %arg3: memref<128x128xf32, #tpu.memory_space<vmem>>, %arg4: memref<1x128xf32, #tpu.memory_space<vmem>>, %arg5: memref<1x128xf32, #tpu.memory_space<vmem>>) attributes {dimension_semantics = [#tpu.dimension_semantics<arbitrary>], iteration_bounds = array<i64: 1>, scalar_prefetch = 0 : i64, scratch_operands = 0 : i64, tpu.core_type = #tpu.core_type<tc>, window_params = [{transform_indices = @transform_0, window_bounds = array<i64: 128, 384>}, {pipeline_mode = #tpu.pipeline_mode<synchronous>, transform_indices = @transform_1, window_bounds = array<i64: 384, 128>}, {transform_indices = @transform_2, window_bounds = array<i64: 128, 128>}, {pipeline_mode = #tpu.pipeline_mode<synchronous>, transform_indices = @transform_3, window_bounds = array<i64: 1, 128>}, {pipeline_mode = #tpu.pipeline_mode<synchronous>, transform_indices = @transform_4, window_bounds = array<i64: 1, 128>}]} {
    %c0 = arith.constant 0 : index
    %c0_0 = arith.constant 0 : index
    %0 = vector.load %arg1[%c0, %c0_0] : memref<128x384xbf16, #tpu.memory_space<vmem>>, vector<128x384xbf16>
    %c0_1 = arith.constant 0 : index
    %c0_2 = arith.constant 0 : index
    %1 = vector.load %arg2[%c0_1, %c0_2] : memref<384x128xbf16, #tpu.memory_space<vmem>>, vector<384x128xbf16>
    %cst = arith.constant dense<0.000000e+00> : vector<128x128xf32>
    %2 = tpu.matmul %0, %1, %cst {dimension_numbers = #tpu.dot_dimension_numbers<[1], [0], [0], [1], [0, 0, 1, 1], [], []>} : vector<128x384xbf16>, vector<384x128xbf16>, vector<128x128xf32> -> vector<128x128xf32>
    %c0_3 = arith.constant 0 : index
    %c0_4 = arith.constant 0 : index
    %3 = vector.load %arg3[%c0_3, %c0_4] : memref<128x128xf32, #tpu.memory_space<vmem>>, vector<128x128xf32>
    tpu.vector_store %arg3[%c0_3, %c0_4], %2 {strides = array<i32>} : memref<128x128xf32, #tpu.memory_space<vmem>>, vector<128x128xf32>,
    %c0_i32 = arith.constant 0 : i32
    %4 = arith.cmpi eq, %arg0, %c0_i32 : i32
    %5 = arith.extui %4 : i1 to i32
    %c0_i32_5 = arith.constant 0 : i32
    %6 = arith.cmpi ne, %5, %c0_i32_5 : i32
    scf.if %6 {
      %cst_16 = arith.constant 0.000000e+00 : f32
      %18 = vector.broadcast %cst_16 : f32 to vector<1x128xf32>
      %c0_17 = arith.constant 0 : index
      %c0_18 = arith.constant 0 : index
      %19 = vector.load %arg4[%c0_17, %c0_18] : memref<1x128xf32, #tpu.memory_space<vmem>>, vector<1x128xf32>
      tpu.vector_store %arg4[%c0_17, %c0_18], %18 {strides = array<i32>} : memref<1x128xf32, #tpu.memory_space<vmem>>, vector<1x128xf32>,
      %cst_19 = arith.constant 0.000000e+00 : f32
      %20 = vector.broadcast %cst_19 : f32 to vector<1x128xf32>
      %c0_20 = arith.constant 0 : index
      %c0_21 = arith.constant 0 : index
      %21 = vector.load %arg5[%c0_20, %c0_21] : memref<1x128xf32, #tpu.memory_space<vmem>>, vector<1x128xf32>
      tpu.vector_store %arg5[%c0_20, %c0_21], %20 {strides = array<i32>} : memref<1x128xf32, #tpu.memory_space<vmem>>, vector<1x128xf32>,
    } else {
    }
    %c0_6 = arith.constant 0 : index
    %c0_7 = arith.constant 0 : index
    %7 = vector.load %arg4[%c0_6, %c0_7] : memref<1x128xf32, #tpu.memory_space<vmem>>, vector<1x128xf32>
    %cst_8 = arith.constant dense<0.000000e+00> : vector<128xf32>
    %8 = vector.multi_reduction <add>, %2, %cst_8 [0] : vector<128x128xf32> to vector<128xf32>
    %9 = vector.shape_cast %8 : vector<128xf32> to vector<1x128xf32>
    %10 = arith.addf %7, %9 : vector<1x128xf32>
    %c0_9 = arith.constant 0 : index
    %c0_10 = arith.constant 0 : index
    %11 = vector.load %arg4[%c0_9, %c0_10] : memref<1x128xf32, #tpu.memory_space<vmem>>, vector<1x128xf32>
    tpu.vector_store %arg4[%c0_9, %c0_10], %10 {strides = array<i32>} : memref<1x128xf32, #tpu.memory_space<vmem>>, vector<1x128xf32>,
    %c0_11 = arith.constant 0 : index
    %c0_12 = arith.constant 0 : index
    %12 = vector.load %arg5[%c0_11, %c0_12] : memref<1x128xf32, #tpu.memory_space<vmem>>, vector<1x128xf32>
    %13 = arith.mulf %2, %2 : vector<128x128xf32>
    %cst_13 = arith.constant dense<0.000000e+00> : vector<128xf32>
    %14 = vector.multi_reduction <add>, %13, %cst_13 [0] : vector<128x128xf32> to vector<128xf32>
    %15 = vector.shape_cast %14 : vector<128xf32> to vector<1x128xf32>
    %16 = arith.addf %12, %15 : vector<1x128xf32>
    %c0_14 = arith.constant 0 : index
    %c0_15 = arith.constant 0 : index
    %17 = vector.load %arg5[%c0_14, %c0_15] : memref<1x128xf32, #tpu.memory_space<vmem>>, vector<1x128xf32>
    tpu.vector_store %arg5[%c0_14, %c0_15], %16 {strides = array<i32>} : memref<1x128xf32, #tpu.memory_space<vmem>>, vector<1x128xf32>,
    return
  }
  func.func @transform_0(%arg0: i32) -> (i32, i32) {
    %c0_i32 = arith.constant 0 : i32
    %c0_i32_0 = arith.constant 0 : i32
    return %arg0, %c0_i32 : i32, i32
  }
  func.func @transform_1(%arg0: i32) -> (i32, i32) {
    %c0_i32 = arith.constant 0 : i32
    %c0_i32_0 = arith.constant 0 : i32
    %c0_i32_1 = arith.constant 0 : i32
    return %c0_i32, %c0_i32_0 : i32, i32
  }
  func.func @transform_2(%arg0: i32) -> (i32, i32) {
    %c0_i32 = arith.constant 0 : i32
    %c0_i32_0 = arith.constant 0 : i32
    return %arg0, %c0_i32 : i32, i32
  }
  func.func @transform_3(%arg0: i32) -> (i32, i32) {
    %c0_i32 = arith.constant 0 : i32
    %c0_i32_0 = arith.constant 0 : i32
    %c0_i32_1 = arith.constant 0 : i32
    return %c0_i32, %c0_i32_0 : i32, i32
  }
  func.func @transform_4(%arg0: i32) -> (i32, i32) {
    %c0_i32 = arith.constant 0 : i32
    %c0_i32_0 = arith.constant 0 : i32
    %c0_i32_1 = arith.constant 0 : i32
    return %c0_i32, %c0_i32_0 : i32, i32
  }
}

module attributes {stable_mosaic.version = 11 : i64} {
  func.func @_bn_relu_kernel(%arg0: i32, %arg1: memref<128x128xf32, #tpu.memory_space<vmem>>, %arg2: memref<1x128xf32, #tpu.memory_space<vmem>>, %arg3: memref<1x128xf32, #tpu.memory_space<vmem>>, %arg4: memref<128x128xbf16, #tpu.memory_space<vmem>>) attributes {dimension_semantics = [#tpu.dimension_semantics<parallel>], iteration_bounds = array<i64: 1>, scalar_prefetch = 0 : i64, scratch_operands = 0 : i64, tpu.core_type = #tpu.core_type<tc>, window_params = [{transform_indices = @transform_0, window_bounds = array<i64: 128, 128>}, {pipeline_mode = #tpu.pipeline_mode<synchronous>, transform_indices = @transform_1, window_bounds = array<i64: 1, 128>}, {pipeline_mode = #tpu.pipeline_mode<synchronous>, transform_indices = @transform_2, window_bounds = array<i64: 1, 128>}, {transform_indices = @transform_3, window_bounds = array<i64: 128, 128>}]} {
    %c0 = arith.constant 0 : index
    %c0_0 = arith.constant 0 : index
    %0 = vector.load %arg1[%c0, %c0_0] : memref<128x128xf32, #tpu.memory_space<vmem>>, vector<128x128xf32>
    %c0_1 = arith.constant 0 : index
    %c0_2 = arith.constant 0 : index
    %1 = vector.load %arg2[%c0_1, %c0_2] : memref<1x128xf32, #tpu.memory_space<vmem>>, vector<1x128xf32>
    %2 = vector.broadcast %1 : vector<1x128xf32> to vector<128x128xf32>
    %3 = arith.mulf %0, %2 : vector<128x128xf32>
    %c0_3 = arith.constant 0 : index
    %c0_4 = arith.constant 0 : index
    %4 = vector.load %arg3[%c0_3, %c0_4] : memref<1x128xf32, #tpu.memory_space<vmem>>, vector<1x128xf32>
    %5 = vector.broadcast %4 : vector<1x128xf32> to vector<128x128xf32>
    %6 = arith.addf %3, %5 : vector<128x128xf32>
    %cst = arith.constant 0.000000e+00 : f32
    %7 = vector.broadcast %cst : f32 to vector<128x128xf32>
    %8 = arith.maximumf %6, %7 : vector<128x128xf32>
    %9 = arith.truncf %8 : vector<128x128xf32> to vector<128x128xbf16>
    %c0_5 = arith.constant 0 : index
    %c0_6 = arith.constant 0 : index
    %10 = vector.load %arg4[%c0_5, %c0_6] : memref<128x128xbf16, #tpu.memory_space<vmem>>, vector<128x128xbf16>
    tpu.vector_store %arg4[%c0_5, %c0_6], %9 {strides = array<i32>} : memref<128x128xbf16, #tpu.memory_space<vmem>>, vector<128x128xbf16>,
    return
  }
  func.func @transform_0(%arg0: i32) -> (i32, i32) {
    %c0_i32 = arith.constant 0 : i32
    %c0_i32_0 = arith.constant 0 : i32
    return %arg0, %c0_i32 : i32, i32
  }
  func.func @transform_1(%arg0: i32) -> (i32, i32) {
    %c0_i32 = arith.constant 0 : i32
    %c0_i32_0 = arith.constant 0 : i32
    %c0_i32_1 = arith.constant 0 : i32
    return %c0_i32, %c0_i32_0 : i32, i32
  }
  func.func @transform_2(%arg0: i32) -> (i32, i32) {
    %c0_i32 = arith.constant 0 : i32
    %c0_i32_0 = arith.constant 0 : i32
    %c0_i32_1 = arith.constant 0 : i32
    return %c0_i32, %c0_i32_0 : i32, i32
  }
  func.func @transform_3(%arg0: i32) -> (i32, i32) {
    %c0_i32 = arith.constant 0 : i32
    %c0_i32_0 = arith.constant 0 : i32
    return %arg0, %c0_i32 : i32, i32
  }
}

module attributes {stable_mosaic.version = 11 : i64} {
  func.func @_conv_stats_kernel(%arg0: i32, %arg1: memref<32x128xbf16, #tpu.memory_space<vmem>>, %arg2: memref<128x128xbf16, #tpu.memory_space<vmem>>, %arg3: memref<32x128xf32, #tpu.memory_space<vmem>>, %arg4: memref<1x128xf32, #tpu.memory_space<vmem>>, %arg5: memref<1x128xf32, #tpu.memory_space<vmem>>) attributes {dimension_semantics = [#tpu.dimension_semantics<arbitrary>], iteration_bounds = array<i64: 1>, scalar_prefetch = 0 : i64, scratch_operands = 0 : i64, tpu.core_type = #tpu.core_type<tc>, window_params = [{transform_indices = @transform_0, window_bounds = array<i64: 32, 128>}, {pipeline_mode = #tpu.pipeline_mode<synchronous>, transform_indices = @transform_1, window_bounds = array<i64: 128, 128>}, {transform_indices = @transform_2, window_bounds = array<i64: 32, 128>}, {pipeline_mode = #tpu.pipeline_mode<synchronous>, transform_indices = @transform_3, window_bounds = array<i64: 1, 128>}, {pipeline_mode = #tpu.pipeline_mode<synchronous>, transform_indices = @transform_4, window_bounds = array<i64: 1, 128>}]} {
    %c0 = arith.constant 0 : index
    %c0_0 = arith.constant 0 : index
    %0 = vector.load %arg1[%c0, %c0_0] : memref<32x128xbf16, #tpu.memory_space<vmem>>, vector<32x128xbf16>
    %c0_1 = arith.constant 0 : index
    %c0_2 = arith.constant 0 : index
    %1 = vector.load %arg2[%c0_1, %c0_2] : memref<128x128xbf16, #tpu.memory_space<vmem>>, vector<128x128xbf16>
    %cst = arith.constant dense<0.000000e+00> : vector<32x128xf32>
    %2 = tpu.matmul %0, %1, %cst {dimension_numbers = #tpu.dot_dimension_numbers<[1], [0], [0], [1], [0, 0, 1, 1], [], []>} : vector<32x128xbf16>, vector<128x128xbf16>, vector<32x128xf32> -> vector<32x128xf32>
    %c0_3 = arith.constant 0 : index
    %c0_4 = arith.constant 0 : index
    %3 = vector.load %arg3[%c0_3, %c0_4] : memref<32x128xf32, #tpu.memory_space<vmem>>, vector<32x128xf32>
    tpu.vector_store %arg3[%c0_3, %c0_4], %2 {strides = array<i32>} : memref<32x128xf32, #tpu.memory_space<vmem>>, vector<32x128xf32>,
    %c0_i32 = arith.constant 0 : i32
    %4 = arith.cmpi eq, %arg0, %c0_i32 : i32
    %5 = arith.extui %4 : i1 to i32
    %c0_i32_5 = arith.constant 0 : i32
    %6 = arith.cmpi ne, %5, %c0_i32_5 : i32
    scf.if %6 {
      %cst_16 = arith.constant 0.000000e+00 : f32
      %18 = vector.broadcast %cst_16 : f32 to vector<1x128xf32>
      %c0_17 = arith.constant 0 : index
      %c0_18 = arith.constant 0 : index
      %19 = vector.load %arg4[%c0_17, %c0_18] : memref<1x128xf32, #tpu.memory_space<vmem>>, vector<1x128xf32>
      tpu.vector_store %arg4[%c0_17, %c0_18], %18 {strides = array<i32>} : memref<1x128xf32, #tpu.memory_space<vmem>>, vector<1x128xf32>,
      %cst_19 = arith.constant 0.000000e+00 : f32
      %20 = vector.broadcast %cst_19 : f32 to vector<1x128xf32>
      %c0_20 = arith.constant 0 : index
      %c0_21 = arith.constant 0 : index
      %21 = vector.load %arg5[%c0_20, %c0_21] : memref<1x128xf32, #tpu.memory_space<vmem>>, vector<1x128xf32>
      tpu.vector_store %arg5[%c0_20, %c0_21], %20 {strides = array<i32>} : memref<1x128xf32, #tpu.memory_space<vmem>>, vector<1x128xf32>,
    } else {
    }
    %c0_6 = arith.constant 0 : index
    %c0_7 = arith.constant 0 : index
    %7 = vector.load %arg4[%c0_6, %c0_7] : memref<1x128xf32, #tpu.memory_space<vmem>>, vector<1x128xf32>
    %cst_8 = arith.constant dense<0.000000e+00> : vector<128xf32>
    %8 = vector.multi_reduction <add>, %2, %cst_8 [0] : vector<32x128xf32> to vector<128xf32>
    %9 = vector.shape_cast %8 : vector<128xf32> to vector<1x128xf32>
    %10 = arith.addf %7, %9 : vector<1x128xf32>
    %c0_9 = arith.constant 0 : index
    %c0_10 = arith.constant 0 : index
    %11 = vector.load %arg4[%c0_9, %c0_10] : memref<1x128xf32, #tpu.memory_space<vmem>>, vector<1x128xf32>
    tpu.vector_store %arg4[%c0_9, %c0_10], %10 {strides = array<i32>} : memref<1x128xf32, #tpu.memory_space<vmem>>, vector<1x128xf32>,
    %c0_11 = arith.constant 0 : index
    %c0_12 = arith.constant 0 : index
    %12 = vector.load %arg5[%c0_11, %c0_12] : memref<1x128xf32, #tpu.memory_space<vmem>>, vector<1x128xf32>
    %13 = arith.mulf %2, %2 : vector<32x128xf32>
    %cst_13 = arith.constant dense<0.000000e+00> : vector<128xf32>
    %14 = vector.multi_reduction <add>, %13, %cst_13 [0] : vector<32x128xf32> to vector<128xf32>
    %15 = vector.shape_cast %14 : vector<128xf32> to vector<1x128xf32>
    %16 = arith.addf %12, %15 : vector<1x128xf32>
    %c0_14 = arith.constant 0 : index
    %c0_15 = arith.constant 0 : index
    %17 = vector.load %arg5[%c0_14, %c0_15] : memref<1x128xf32, #tpu.memory_space<vmem>>, vector<1x128xf32>
    tpu.vector_store %arg5[%c0_14, %c0_15], %16 {strides = array<i32>} : memref<1x128xf32, #tpu.memory_space<vmem>>, vector<1x128xf32>,
    return
  }
  func.func @transform_0(%arg0: i32) -> (i32, i32) {
    %c0_i32 = arith.constant 0 : i32
    %c0_i32_0 = arith.constant 0 : i32
    return %arg0, %c0_i32 : i32, i32
  }
  func.func @transform_1(%arg0: i32) -> (i32, i32) {
    %c0_i32 = arith.constant 0 : i32
    %c0_i32_0 = arith.constant 0 : i32
    %c0_i32_1 = arith.constant 0 : i32
    return %c0_i32, %c0_i32_0 : i32, i32
  }
  func.func @transform_2(%arg0: i32) -> (i32, i32) {
    %c0_i32 = arith.constant 0 : i32
    %c0_i32_0 = arith.constant 0 : i32
    return %arg0, %c0_i32 : i32, i32
  }
  func.func @transform_3(%arg0: i32) -> (i32, i32) {
    %c0_i32 = arith.constant 0 : i32
    %c0_i32_0 = arith.constant 0 : i32
    %c0_i32_1 = arith.constant 0 : i32
    return %c0_i32, %c0_i32_0 : i32, i32
  }
  func.func @transform_4(%arg0: i32) -> (i32, i32) {
    %c0_i32 = arith.constant 0 : i32
    %c0_i32_0 = arith.constant 0 : i32
    %c0_i32_1 = arith.constant 0 : i32
    return %c0_i32, %c0_i32_0 : i32, i32
  }
}

module attributes {stable_mosaic.version = 11 : i64} {
  func.func @_bn_relu_kernel(%arg0: i32, %arg1: memref<32x128xf32, #tpu.memory_space<vmem>>, %arg2: memref<1x128xf32, #tpu.memory_space<vmem>>, %arg3: memref<1x128xf32, #tpu.memory_space<vmem>>, %arg4: memref<32x128xbf16, #tpu.memory_space<vmem>>) attributes {dimension_semantics = [#tpu.dimension_semantics<parallel>], iteration_bounds = array<i64: 1>, scalar_prefetch = 0 : i64, scratch_operands = 0 : i64, tpu.core_type = #tpu.core_type<tc>, window_params = [{transform_indices = @transform_0, window_bounds = array<i64: 32, 128>}, {pipeline_mode = #tpu.pipeline_mode<synchronous>, transform_indices = @transform_1, window_bounds = array<i64: 1, 128>}, {pipeline_mode = #tpu.pipeline_mode<synchronous>, transform_indices = @transform_2, window_bounds = array<i64: 1, 128>}, {transform_indices = @transform_3, window_bounds = array<i64: 32, 128>}]} {
    %c0 = arith.constant 0 : index
    %c0_0 = arith.constant 0 : index
    %0 = vector.load %arg1[%c0, %c0_0] : memref<32x128xf32, #tpu.memory_space<vmem>>, vector<32x128xf32>
    %c0_1 = arith.constant 0 : index
    %c0_2 = arith.constant 0 : index
    %1 = vector.load %arg2[%c0_1, %c0_2] : memref<1x128xf32, #tpu.memory_space<vmem>>, vector<1x128xf32>
    %2 = vector.broadcast %1 : vector<1x128xf32> to vector<32x128xf32>
    %3 = arith.mulf %0, %2 : vector<32x128xf32>
    %c0_3 = arith.constant 0 : index
    %c0_4 = arith.constant 0 : index
    %4 = vector.load %arg3[%c0_3, %c0_4] : memref<1x128xf32, #tpu.memory_space<vmem>>, vector<1x128xf32>
    %5 = vector.broadcast %4 : vector<1x128xf32> to vector<32x128xf32>
    %6 = arith.addf %3, %5 : vector<32x128xf32>
    %cst = arith.constant 0.000000e+00 : f32
    %7 = vector.broadcast %cst : f32 to vector<32x128xf32>
    %8 = arith.maximumf %6, %7 : vector<32x128xf32>
    %9 = arith.truncf %8 : vector<32x128xf32> to vector<32x128xbf16>
    %c0_5 = arith.constant 0 : index
    %c0_6 = arith.constant 0 : index
    %10 = vector.load %arg4[%c0_5, %c0_6] : memref<32x128xbf16, #tpu.memory_space<vmem>>, vector<32x128xbf16>
    tpu.vector_store %arg4[%c0_5, %c0_6], %9 {strides = array<i32>} : memref<32x128xbf16, #tpu.memory_space<vmem>>, vector<32x128xbf16>,
    return
  }
  func.func @transform_0(%arg0: i32) -> (i32, i32) {
    %c0_i32 = arith.constant 0 : i32
    %c0_i32_0 = arith.constant 0 : i32
    return %arg0, %c0_i32 : i32, i32
  }
  func.func @transform_1(%arg0: i32) -> (i32, i32) {
    %c0_i32 = arith.constant 0 : i32
    %c0_i32_0 = arith.constant 0 : i32
    %c0_i32_1 = arith.constant 0 : i32
    return %c0_i32, %c0_i32_0 : i32, i32
  }
  func.func @transform_2(%arg0: i32) -> (i32, i32) {
    %c0_i32 = arith.constant 0 : i32
    %c0_i32_0 = arith.constant 0 : i32
    %c0_i32_1 = arith.constant 0 : i32
    return %c0_i32, %c0_i32_0 : i32, i32
  }
  func.func @transform_3(%arg0: i32) -> (i32, i32) {
    %c0_i32 = arith.constant 0 : i32
    %c0_i32_0 = arith.constant 0 : i32
    return %arg0, %c0_i32 : i32, i32
  }
}

module attributes {stable_mosaic.version = 11 : i64} {
  func.func @_bn_relu_kernel(%arg0: i32, %arg1: memref<8x128xf32, #tpu.memory_space<vmem>>, %arg2: memref<1x128xf32, #tpu.memory_space<vmem>>, %arg3: memref<1x128xf32, #tpu.memory_space<vmem>>, %arg4: memref<8x128xbf16, #tpu.memory_space<vmem>>) attributes {dimension_semantics = [#tpu.dimension_semantics<parallel>], iteration_bounds = array<i64: 1>, scalar_prefetch = 0 : i64, scratch_operands = 0 : i64, tpu.core_type = #tpu.core_type<tc>, window_params = [{transform_indices = @transform_0, window_bounds = array<i64: 8, 128>}, {pipeline_mode = #tpu.pipeline_mode<synchronous>, transform_indices = @transform_1, window_bounds = array<i64: 1, 128>}, {pipeline_mode = #tpu.pipeline_mode<synchronous>, transform_indices = @transform_2, window_bounds = array<i64: 1, 128>}, {transform_indices = @transform_3, window_bounds = array<i64: 8, 128>}]} {
    %c0 = arith.constant 0 : index
    %c0_0 = arith.constant 0 : index
    %0 = vector.load %arg1[%c0, %c0_0] : memref<8x128xf32, #tpu.memory_space<vmem>>, vector<8x128xf32>
    %c0_1 = arith.constant 0 : index
    %c0_2 = arith.constant 0 : index
    %1 = vector.load %arg2[%c0_1, %c0_2] : memref<1x128xf32, #tpu.memory_space<vmem>>, vector<1x128xf32>
    %2 = vector.broadcast %1 : vector<1x128xf32> to vector<8x128xf32>
    %3 = arith.mulf %0, %2 : vector<8x128xf32>
    %c0_3 = arith.constant 0 : index
    %c0_4 = arith.constant 0 : index
    %4 = vector.load %arg3[%c0_3, %c0_4] : memref<1x128xf32, #tpu.memory_space<vmem>>, vector<1x128xf32>
    %5 = vector.broadcast %4 : vector<1x128xf32> to vector<8x128xf32>
    %6 = arith.addf %3, %5 : vector<8x128xf32>
    %cst = arith.constant 0.000000e+00 : f32
    %7 = vector.broadcast %cst : f32 to vector<8x128xf32>
    %8 = arith.maximumf %6, %7 : vector<8x128xf32>
    %9 = arith.truncf %8 : vector<8x128xf32> to vector<8x128xbf16>
    %c0_5 = arith.constant 0 : index
    %c0_6 = arith.constant 0 : index
    %10 = vector.load %arg4[%c0_5, %c0_6] : memref<8x128xbf16, #tpu.memory_space<vmem>>, vector<8x128xbf16>
    tpu.vector_store %arg4[%c0_5, %c0_6], %9 {strides = array<i32>} : memref<8x128xbf16, #tpu.memory_space<vmem>>, vector<8x128xbf16>,
    return
  }
  func.func @transform_0(%arg0: i32) -> (i32, i32) {
    %c0_i32 = arith.constant 0 : i32
    %c0_i32_0 = arith.constant 0 : i32
    return %arg0, %c0_i32 : i32, i32
  }
  func.func @transform_1(%arg0: i32) -> (i32, i32) {
    %c0_i32 = arith.constant 0 : i32
    %c0_i32_0 = arith.constant 0 : i32
    %c0_i32_1 = arith.constant 0 : i32
    return %c0_i32, %c0_i32_0 : i32, i32
  }
  func.func @transform_2(%arg0: i32) -> (i32, i32) {
    %c0_i32 = arith.constant 0 : i32
    %c0_i32_0 = arith.constant 0 : i32
    %c0_i32_1 = arith.constant 0 : i32
    return %c0_i32, %c0_i32_0 : i32, i32
  }
  func.func @transform_3(%arg0: i32) -> (i32, i32) {
    %c0_i32 = arith.constant 0 : i32
    %c0_i32_0 = arith.constant 0 : i32
    return %arg0, %c0_i32 : i32, i32
  }
}

module attributes {stable_mosaic.version = 11 : i64} {
  func.func @_conv_stats_kernel(%arg0: i32, %arg1: memref<8x128xbf16, #tpu.memory_space<vmem>>, %arg2: memref<128x128xbf16, #tpu.memory_space<vmem>>, %arg3: memref<8x128xf32, #tpu.memory_space<vmem>>, %arg4: memref<1x128xf32, #tpu.memory_space<vmem>>, %arg5: memref<1x128xf32, #tpu.memory_space<vmem>>) attributes {dimension_semantics = [#tpu.dimension_semantics<arbitrary>], iteration_bounds = array<i64: 1>, scalar_prefetch = 0 : i64, scratch_operands = 0 : i64, tpu.core_type = #tpu.core_type<tc>, window_params = [{transform_indices = @transform_0, window_bounds = array<i64: 8, 128>}, {pipeline_mode = #tpu.pipeline_mode<synchronous>, transform_indices = @transform_1, window_bounds = array<i64: 128, 128>}, {transform_indices = @transform_2, window_bounds = array<i64: 8, 128>}, {pipeline_mode = #tpu.pipeline_mode<synchronous>, transform_indices = @transform_3, window_bounds = array<i64: 1, 128>}, {pipeline_mode = #tpu.pipeline_mode<synchronous>, transform_indices = @transform_4, window_bounds = array<i64: 1, 128>}]} {
    %c0 = arith.constant 0 : index
    %c0_0 = arith.constant 0 : index
    %0 = vector.load %arg1[%c0, %c0_0] : memref<8x128xbf16, #tpu.memory_space<vmem>>, vector<8x128xbf16>
    %c0_1 = arith.constant 0 : index
    %c0_2 = arith.constant 0 : index
    %1 = vector.load %arg2[%c0_1, %c0_2] : memref<128x128xbf16, #tpu.memory_space<vmem>>, vector<128x128xbf16>
    %cst = arith.constant dense<0.000000e+00> : vector<8x128xf32>
    %2 = tpu.matmul %0, %1, %cst {dimension_numbers = #tpu.dot_dimension_numbers<[1], [0], [0], [1], [0, 0, 1, 1], [], []>} : vector<8x128xbf16>, vector<128x128xbf16>, vector<8x128xf32> -> vector<8x128xf32>
    %c0_3 = arith.constant 0 : index
    %c0_4 = arith.constant 0 : index
    %3 = vector.load %arg3[%c0_3, %c0_4] : memref<8x128xf32, #tpu.memory_space<vmem>>, vector<8x128xf32>
    tpu.vector_store %arg3[%c0_3, %c0_4], %2 {strides = array<i32>} : memref<8x128xf32, #tpu.memory_space<vmem>>, vector<8x128xf32>,
    %c0_i32 = arith.constant 0 : i32
    %4 = arith.cmpi eq, %arg0, %c0_i32 : i32
    %5 = arith.extui %4 : i1 to i32
    %c0_i32_5 = arith.constant 0 : i32
    %6 = arith.cmpi ne, %5, %c0_i32_5 : i32
    scf.if %6 {
      %cst_16 = arith.constant 0.000000e+00 : f32
      %18 = vector.broadcast %cst_16 : f32 to vector<1x128xf32>
      %c0_17 = arith.constant 0 : index
      %c0_18 = arith.constant 0 : index
      %19 = vector.load %arg4[%c0_17, %c0_18] : memref<1x128xf32, #tpu.memory_space<vmem>>, vector<1x128xf32>
      tpu.vector_store %arg4[%c0_17, %c0_18], %18 {strides = array<i32>} : memref<1x128xf32, #tpu.memory_space<vmem>>, vector<1x128xf32>,
      %cst_19 = arith.constant 0.000000e+00 : f32
      %20 = vector.broadcast %cst_19 : f32 to vector<1x128xf32>
      %c0_20 = arith.constant 0 : index
      %c0_21 = arith.constant 0 : index
      %21 = vector.load %arg5[%c0_20, %c0_21] : memref<1x128xf32, #tpu.memory_space<vmem>>, vector<1x128xf32>
      tpu.vector_store %arg5[%c0_20, %c0_21], %20 {strides = array<i32>} : memref<1x128xf32, #tpu.memory_space<vmem>>, vector<1x128xf32>,
    } else {
    }
    %c0_6 = arith.constant 0 : index
    %c0_7 = arith.constant 0 : index
    %7 = vector.load %arg4[%c0_6, %c0_7] : memref<1x128xf32, #tpu.memory_space<vmem>>, vector<1x128xf32>
    %cst_8 = arith.constant dense<0.000000e+00> : vector<128xf32>
    %8 = vector.multi_reduction <add>, %2, %cst_8 [0] : vector<8x128xf32> to vector<128xf32>
    %9 = vector.shape_cast %8 : vector<128xf32> to vector<1x128xf32>
    %10 = arith.addf %7, %9 : vector<1x128xf32>
    %c0_9 = arith.constant 0 : index
    %c0_10 = arith.constant 0 : index
    %11 = vector.load %arg4[%c0_9, %c0_10] : memref<1x128xf32, #tpu.memory_space<vmem>>, vector<1x128xf32>
    tpu.vector_store %arg4[%c0_9, %c0_10], %10 {strides = array<i32>} : memref<1x128xf32, #tpu.memory_space<vmem>>, vector<1x128xf32>,
    %c0_11 = arith.constant 0 : index
    %c0_12 = arith.constant 0 : index
    %12 = vector.load %arg5[%c0_11, %c0_12] : memref<1x128xf32, #tpu.memory_space<vmem>>, vector<1x128xf32>
    %13 = arith.mulf %2, %2 : vector<8x128xf32>
    %cst_13 = arith.constant dense<0.000000e+00> : vector<128xf32>
    %14 = vector.multi_reduction <add>, %13, %cst_13 [0] : vector<8x128xf32> to vector<128xf32>
    %15 = vector.shape_cast %14 : vector<128xf32> to vector<1x128xf32>
    %16 = arith.addf %12, %15 : vector<1x128xf32>
    %c0_14 = arith.constant 0 : index
    %c0_15 = arith.constant 0 : index
    %17 = vector.load %arg5[%c0_14, %c0_15] : memref<1x128xf32, #tpu.memory_space<vmem>>, vector<1x128xf32>
    tpu.vector_store %arg5[%c0_14, %c0_15], %16 {strides = array<i32>} : memref<1x128xf32, #tpu.memory_space<vmem>>, vector<1x128xf32>,
    return
  }
  func.func @transform_0(%arg0: i32) -> (i32, i32) {
    %c0_i32 = arith.constant 0 : i32
    %c0_i32_0 = arith.constant 0 : i32
    return %arg0, %c0_i32 : i32, i32
  }
  func.func @transform_1(%arg0: i32) -> (i32, i32) {
    %c0_i32 = arith.constant 0 : i32
    %c0_i32_0 = arith.constant 0 : i32
    %c0_i32_1 = arith.constant 0 : i32
    return %c0_i32, %c0_i32_0 : i32, i32
  }
  func.func @transform_2(%arg0: i32) -> (i32, i32) {
    %c0_i32 = arith.constant 0 : i32
    %c0_i32_0 = arith.constant 0 : i32
    return %arg0, %c0_i32 : i32, i32
  }
  func.func @transform_3(%arg0: i32) -> (i32, i32) {
    %c0_i32 = arith.constant 0 : i32
    %c0_i32_0 = arith.constant 0 : i32
    %c0_i32_1 = arith.constant 0 : i32
    return %c0_i32, %c0_i32_0 : i32, i32
  }
  func.func @transform_4(%arg0: i32) -> (i32, i32) {
    %c0_i32 = arith.constant 0 : i32
    %c0_i32_0 = arith.constant 0 : i32
    %c0_i32_1 = arith.constant 0 : i32
    return %c0_i32, %c0_i32_0 : i32, i32
  }
}

module attributes {stable_mosaic.version = 11 : i64} {
  func.func @_conv_stats_kernel(%arg0: i32, %arg1: memref<128x128xbf16, #tpu.memory_space<vmem>>, %arg2: memref<128x128xbf16, #tpu.memory_space<vmem>>, %arg3: memref<128x128xf32, #tpu.memory_space<vmem>>, %arg4: memref<1x128xf32, #tpu.memory_space<vmem>>, %arg5: memref<1x128xf32, #tpu.memory_space<vmem>>) attributes {dimension_semantics = [#tpu.dimension_semantics<arbitrary>], iteration_bounds = array<i64: 1>, scalar_prefetch = 0 : i64, scratch_operands = 0 : i64, tpu.core_type = #tpu.core_type<tc>, window_params = [{transform_indices = @transform_0, window_bounds = array<i64: 128, 128>}, {pipeline_mode = #tpu.pipeline_mode<synchronous>, transform_indices = @transform_1, window_bounds = array<i64: 128, 128>}, {transform_indices = @transform_2, window_bounds = array<i64: 128, 128>}, {pipeline_mode = #tpu.pipeline_mode<synchronous>, transform_indices = @transform_3, window_bounds = array<i64: 1, 128>}, {pipeline_mode = #tpu.pipeline_mode<synchronous>, transform_indices = @transform_4, window_bounds = array<i64: 1, 128>}]} {
    %c0 = arith.constant 0 : index
    %c0_0 = arith.constant 0 : index
    %0 = vector.load %arg1[%c0, %c0_0] : memref<128x128xbf16, #tpu.memory_space<vmem>>, vector<128x128xbf16>
    %c0_1 = arith.constant 0 : index
    %c0_2 = arith.constant 0 : index
    %1 = vector.load %arg2[%c0_1, %c0_2] : memref<128x128xbf16, #tpu.memory_space<vmem>>, vector<128x128xbf16>
    %cst = arith.constant dense<0.000000e+00> : vector<128x128xf32>
    %2 = tpu.matmul %0, %1, %cst {dimension_numbers = #tpu.dot_dimension_numbers<[1], [0], [0], [1], [0, 0, 1, 1], [], []>} : vector<128x128xbf16>, vector<128x128xbf16>, vector<128x128xf32> -> vector<128x128xf32>
    %c0_3 = arith.constant 0 : index
    %c0_4 = arith.constant 0 : index
    %3 = vector.load %arg3[%c0_3, %c0_4] : memref<128x128xf32, #tpu.memory_space<vmem>>, vector<128x128xf32>
    tpu.vector_store %arg3[%c0_3, %c0_4], %2 {strides = array<i32>} : memref<128x128xf32, #tpu.memory_space<vmem>>, vector<128x128xf32>,
    %c0_i32 = arith.constant 0 : i32
    %4 = arith.cmpi eq, %arg0, %c0_i32 : i32
    %5 = arith.extui %4 : i1 to i32
    %c0_i32_5 = arith.constant 0 : i32
    %6 = arith.cmpi ne, %5, %c0_i32_5 : i32
    scf.if %6 {
      %cst_16 = arith.constant 0.000000e+00 : f32
      %18 = vector.broadcast %cst_16 : f32 to vector<1x128xf32>
      %c0_17 = arith.constant 0 : index
      %c0_18 = arith.constant 0 : index
      %19 = vector.load %arg4[%c0_17, %c0_18] : memref<1x128xf32, #tpu.memory_space<vmem>>, vector<1x128xf32>
      tpu.vector_store %arg4[%c0_17, %c0_18], %18 {strides = array<i32>} : memref<1x128xf32, #tpu.memory_space<vmem>>, vector<1x128xf32>,
      %cst_19 = arith.constant 0.000000e+00 : f32
      %20 = vector.broadcast %cst_19 : f32 to vector<1x128xf32>
      %c0_20 = arith.constant 0 : index
      %c0_21 = arith.constant 0 : index
      %21 = vector.load %arg5[%c0_20, %c0_21] : memref<1x128xf32, #tpu.memory_space<vmem>>, vector<1x128xf32>
      tpu.vector_store %arg5[%c0_20, %c0_21], %20 {strides = array<i32>} : memref<1x128xf32, #tpu.memory_space<vmem>>, vector<1x128xf32>,
    } else {
    }
    %c0_6 = arith.constant 0 : index
    %c0_7 = arith.constant 0 : index
    %7 = vector.load %arg4[%c0_6, %c0_7] : memref<1x128xf32, #tpu.memory_space<vmem>>, vector<1x128xf32>
    %cst_8 = arith.constant dense<0.000000e+00> : vector<128xf32>
    %8 = vector.multi_reduction <add>, %2, %cst_8 [0] : vector<128x128xf32> to vector<128xf32>
    %9 = vector.shape_cast %8 : vector<128xf32> to vector<1x128xf32>
    %10 = arith.addf %7, %9 : vector<1x128xf32>
    %c0_9 = arith.constant 0 : index
    %c0_10 = arith.constant 0 : index
    %11 = vector.load %arg4[%c0_9, %c0_10] : memref<1x128xf32, #tpu.memory_space<vmem>>, vector<1x128xf32>
    tpu.vector_store %arg4[%c0_9, %c0_10], %10 {strides = array<i32>} : memref<1x128xf32, #tpu.memory_space<vmem>>, vector<1x128xf32>,
    %c0_11 = arith.constant 0 : index
    %c0_12 = arith.constant 0 : index
    %12 = vector.load %arg5[%c0_11, %c0_12] : memref<1x128xf32, #tpu.memory_space<vmem>>, vector<1x128xf32>
    %13 = arith.mulf %2, %2 : vector<128x128xf32>
    %cst_13 = arith.constant dense<0.000000e+00> : vector<128xf32>
    %14 = vector.multi_reduction <add>, %13, %cst_13 [0] : vector<128x128xf32> to vector<128xf32>
    %15 = vector.shape_cast %14 : vector<128xf32> to vector<1x128xf32>
    %16 = arith.addf %12, %15 : vector<1x128xf32>
    %c0_14 = arith.constant 0 : index
    %c0_15 = arith.constant 0 : index
    %17 = vector.load %arg5[%c0_14, %c0_15] : memref<1x128xf32, #tpu.memory_space<vmem>>, vector<1x128xf32>
    tpu.vector_store %arg5[%c0_14, %c0_15], %16 {strides = array<i32>} : memref<1x128xf32, #tpu.memory_space<vmem>>, vector<1x128xf32>,
    return
  }
  func.func @transform_0(%arg0: i32) -> (i32, i32) {
    %c0_i32 = arith.constant 0 : i32
    %c0_i32_0 = arith.constant 0 : i32
    return %arg0, %c0_i32 : i32, i32
  }
  func.func @transform_1(%arg0: i32) -> (i32, i32) {
    %c0_i32 = arith.constant 0 : i32
    %c0_i32_0 = arith.constant 0 : i32
    %c0_i32_1 = arith.constant 0 : i32
    return %c0_i32, %c0_i32_0 : i32, i32
  }
  func.func @transform_2(%arg0: i32) -> (i32, i32) {
    %c0_i32 = arith.constant 0 : i32
    %c0_i32_0 = arith.constant 0 : i32
    return %arg0, %c0_i32 : i32, i32
  }
  func.func @transform_3(%arg0: i32) -> (i32, i32) {
    %c0_i32 = arith.constant 0 : i32
    %c0_i32_0 = arith.constant 0 : i32
    %c0_i32_1 = arith.constant 0 : i32
    return %c0_i32, %c0_i32_0 : i32, i32
  }
  func.func @transform_4(%arg0: i32) -> (i32, i32) {
    %c0_i32 = arith.constant 0 : i32
    %c0_i32_0 = arith.constant 0 : i32
    %c0_i32_1 = arith.constant 0 : i32
    return %c0_i32, %c0_i32_0 : i32, i32
  }
}

module attributes {stable_mosaic.version = 11 : i64} {
  func.func @_bn_relu_kernel(%arg0: i32, %arg1: memref<128x128xf32, #tpu.memory_space<vmem>>, %arg2: memref<1x128xf32, #tpu.memory_space<vmem>>, %arg3: memref<1x128xf32, #tpu.memory_space<vmem>>, %arg4: memref<128x128xbf16, #tpu.memory_space<vmem>>) attributes {dimension_semantics = [#tpu.dimension_semantics<parallel>], iteration_bounds = array<i64: 2>, scalar_prefetch = 0 : i64, scratch_operands = 0 : i64, tpu.core_type = #tpu.core_type<tc>, window_params = [{transform_indices = @transform_0, window_bounds = array<i64: 128, 128>}, {pipeline_mode = #tpu.pipeline_mode<synchronous>, transform_indices = @transform_1, window_bounds = array<i64: 1, 128>}, {pipeline_mode = #tpu.pipeline_mode<synchronous>, transform_indices = @transform_2, window_bounds = array<i64: 1, 128>}, {transform_indices = @transform_3, window_bounds = array<i64: 128, 128>}]} {
    %c0 = arith.constant 0 : index
    %c0_0 = arith.constant 0 : index
    %0 = vector.load %arg1[%c0, %c0_0] : memref<128x128xf32, #tpu.memory_space<vmem>>, vector<128x128xf32>
    %c0_1 = arith.constant 0 : index
    %c0_2 = arith.constant 0 : index
    %1 = vector.load %arg2[%c0_1, %c0_2] : memref<1x128xf32, #tpu.memory_space<vmem>>, vector<1x128xf32>
    %2 = vector.broadcast %1 : vector<1x128xf32> to vector<128x128xf32>
    %3 = arith.mulf %0, %2 : vector<128x128xf32>
    %c0_3 = arith.constant 0 : index
    %c0_4 = arith.constant 0 : index
    %4 = vector.load %arg3[%c0_3, %c0_4] : memref<1x128xf32, #tpu.memory_space<vmem>>, vector<1x128xf32>
    %5 = vector.broadcast %4 : vector<1x128xf32> to vector<128x128xf32>
    %6 = arith.addf %3, %5 : vector<128x128xf32>
    %cst = arith.constant 0.000000e+00 : f32
    %7 = vector.broadcast %cst : f32 to vector<128x128xf32>
    %8 = arith.maximumf %6, %7 : vector<128x128xf32>
    %9 = arith.truncf %8 : vector<128x128xf32> to vector<128x128xbf16>
    %c0_5 = arith.constant 0 : index
    %c0_6 = arith.constant 0 : index
    %10 = vector.load %arg4[%c0_5, %c0_6] : memref<128x128xbf16, #tpu.memory_space<vmem>>, vector<128x128xbf16>
    tpu.vector_store %arg4[%c0_5, %c0_6], %9 {strides = array<i32>} : memref<128x128xbf16, #tpu.memory_space<vmem>>, vector<128x128xbf16>,
    return
  }
  func.func @transform_0(%arg0: i32) -> (i32, i32) {
    %c0_i32 = arith.constant 0 : i32
    %c0_i32_0 = arith.constant 0 : i32
    return %arg0, %c0_i32 : i32, i32
  }
  func.func @transform_1(%arg0: i32) -> (i32, i32) {
    %c0_i32 = arith.constant 0 : i32
    %c0_i32_0 = arith.constant 0 : i32
    %c0_i32_1 = arith.constant 0 : i32
    return %c0_i32, %c0_i32_0 : i32, i32
  }
  func.func @transform_2(%arg0: i32) -> (i32, i32) {
    %c0_i32 = arith.constant 0 : i32
    %c0_i32_0 = arith.constant 0 : i32
    %c0_i32_1 = arith.constant 0 : i32
    return %c0_i32, %c0_i32_0 : i32, i32
  }
  func.func @transform_3(%arg0: i32) -> (i32, i32) {
    %c0_i32 = arith.constant 0 : i32
    %c0_i32_0 = arith.constant 0 : i32
    return %arg0, %c0_i32 : i32, i32
  }
}

module attributes {stable_mosaic.version = 11 : i64} {
  func.func @_conv_stats_kernel(%arg0: i32, %arg1: memref<128x128xbf16, #tpu.memory_space<vmem>>, %arg2: memref<128x128xbf16, #tpu.memory_space<vmem>>, %arg3: memref<128x128xf32, #tpu.memory_space<vmem>>, %arg4: memref<1x128xf32, #tpu.memory_space<vmem>>, %arg5: memref<1x128xf32, #tpu.memory_space<vmem>>) attributes {dimension_semantics = [#tpu.dimension_semantics<arbitrary>], iteration_bounds = array<i64: 2>, scalar_prefetch = 0 : i64, scratch_operands = 0 : i64, tpu.core_type = #tpu.core_type<tc>, window_params = [{transform_indices = @transform_0, window_bounds = array<i64: 128, 128>}, {pipeline_mode = #tpu.pipeline_mode<synchronous>, transform_indices = @transform_1, window_bounds = array<i64: 128, 128>}, {transform_indices = @transform_2, window_bounds = array<i64: 128, 128>}, {pipeline_mode = #tpu.pipeline_mode<synchronous>, transform_indices = @transform_3, window_bounds = array<i64: 1, 128>}, {pipeline_mode = #tpu.pipeline_mode<synchronous>, transform_indices = @transform_4, window_bounds = array<i64: 1, 128>}]} {
    %c0 = arith.constant 0 : index
    %c0_0 = arith.constant 0 : index
    %0 = vector.load %arg1[%c0, %c0_0] : memref<128x128xbf16, #tpu.memory_space<vmem>>, vector<128x128xbf16>
    %c0_1 = arith.constant 0 : index
    %c0_2 = arith.constant 0 : index
    %1 = vector.load %arg2[%c0_1, %c0_2] : memref<128x128xbf16, #tpu.memory_space<vmem>>, vector<128x128xbf16>
    %cst = arith.constant dense<0.000000e+00> : vector<128x128xf32>
    %2 = tpu.matmul %0, %1, %cst {dimension_numbers = #tpu.dot_dimension_numbers<[1], [0], [0], [1], [0, 0, 1, 1], [], []>} : vector<128x128xbf16>, vector<128x128xbf16>, vector<128x128xf32> -> vector<128x128xf32>
    %c0_3 = arith.constant 0 : index
    %c0_4 = arith.constant 0 : index
    %3 = vector.load %arg3[%c0_3, %c0_4] : memref<128x128xf32, #tpu.memory_space<vmem>>, vector<128x128xf32>
    tpu.vector_store %arg3[%c0_3, %c0_4], %2 {strides = array<i32>} : memref<128x128xf32, #tpu.memory_space<vmem>>, vector<128x128xf32>,
    %c0_i32 = arith.constant 0 : i32
    %4 = arith.cmpi eq, %arg0, %c0_i32 : i32
    %5 = arith.extui %4 : i1 to i32
    %c0_i32_5 = arith.constant 0 : i32
    %6 = arith.cmpi ne, %5, %c0_i32_5 : i32
    scf.if %6 {
      %cst_16 = arith.constant 0.000000e+00 : f32
      %18 = vector.broadcast %cst_16 : f32 to vector<1x128xf32>
      %c0_17 = arith.constant 0 : index
      %c0_18 = arith.constant 0 : index
      %19 = vector.load %arg4[%c0_17, %c0_18] : memref<1x128xf32, #tpu.memory_space<vmem>>, vector<1x128xf32>
      tpu.vector_store %arg4[%c0_17, %c0_18], %18 {strides = array<i32>} : memref<1x128xf32, #tpu.memory_space<vmem>>, vector<1x128xf32>,
      %cst_19 = arith.constant 0.000000e+00 : f32
      %20 = vector.broadcast %cst_19 : f32 to vector<1x128xf32>
      %c0_20 = arith.constant 0 : index
      %c0_21 = arith.constant 0 : index
      %21 = vector.load %arg5[%c0_20, %c0_21] : memref<1x128xf32, #tpu.memory_space<vmem>>, vector<1x128xf32>
      tpu.vector_store %arg5[%c0_20, %c0_21], %20 {strides = array<i32>} : memref<1x128xf32, #tpu.memory_space<vmem>>, vector<1x128xf32>,
    } else {
    }
    %c0_6 = arith.constant 0 : index
    %c0_7 = arith.constant 0 : index
    %7 = vector.load %arg4[%c0_6, %c0_7] : memref<1x128xf32, #tpu.memory_space<vmem>>, vector<1x128xf32>
    %cst_8 = arith.constant dense<0.000000e+00> : vector<128xf32>
    %8 = vector.multi_reduction <add>, %2, %cst_8 [0] : vector<128x128xf32> to vector<128xf32>
    %9 = vector.shape_cast %8 : vector<128xf32> to vector<1x128xf32>
    %10 = arith.addf %7, %9 : vector<1x128xf32>
    %c0_9 = arith.constant 0 : index
    %c0_10 = arith.constant 0 : index
    %11 = vector.load %arg4[%c0_9, %c0_10] : memref<1x128xf32, #tpu.memory_space<vmem>>, vector<1x128xf32>
    tpu.vector_store %arg4[%c0_9, %c0_10], %10 {strides = array<i32>} : memref<1x128xf32, #tpu.memory_space<vmem>>, vector<1x128xf32>,
    %c0_11 = arith.constant 0 : index
    %c0_12 = arith.constant 0 : index
    %12 = vector.load %arg5[%c0_11, %c0_12] : memref<1x128xf32, #tpu.memory_space<vmem>>, vector<1x128xf32>
    %13 = arith.mulf %2, %2 : vector<128x128xf32>
    %cst_13 = arith.constant dense<0.000000e+00> : vector<128xf32>
    %14 = vector.multi_reduction <add>, %13, %cst_13 [0] : vector<128x128xf32> to vector<128xf32>
    %15 = vector.shape_cast %14 : vector<128xf32> to vector<1x128xf32>
    %16 = arith.addf %12, %15 : vector<1x128xf32>
    %c0_14 = arith.constant 0 : index
    %c0_15 = arith.constant 0 : index
    %17 = vector.load %arg5[%c0_14, %c0_15] : memref<1x128xf32, #tpu.memory_space<vmem>>, vector<1x128xf32>
    tpu.vector_store %arg5[%c0_14, %c0_15], %16 {strides = array<i32>} : memref<1x128xf32, #tpu.memory_space<vmem>>, vector<1x128xf32>,
    return
  }
  func.func @transform_0(%arg0: i32) -> (i32, i32) {
    %c0_i32 = arith.constant 0 : i32
    %c0_i32_0 = arith.constant 0 : i32
    return %arg0, %c0_i32 : i32, i32
  }
  func.func @transform_1(%arg0: i32) -> (i32, i32) {
    %c0_i32 = arith.constant 0 : i32
    %c0_i32_0 = arith.constant 0 : i32
    %c0_i32_1 = arith.constant 0 : i32
    return %c0_i32, %c0_i32_0 : i32, i32
  }
  func.func @transform_2(%arg0: i32) -> (i32, i32) {
    %c0_i32 = arith.constant 0 : i32
    %c0_i32_0 = arith.constant 0 : i32
    return %arg0, %c0_i32 : i32, i32
  }
  func.func @transform_3(%arg0: i32) -> (i32, i32) {
    %c0_i32 = arith.constant 0 : i32
    %c0_i32_0 = arith.constant 0 : i32
    %c0_i32_1 = arith.constant 0 : i32
    return %c0_i32, %c0_i32_0 : i32, i32
  }
  func.func @transform_4(%arg0: i32) -> (i32, i32) {
    %c0_i32 = arith.constant 0 : i32
    %c0_i32_0 = arith.constant 0 : i32
    %c0_i32_1 = arith.constant 0 : i32
    return %c0_i32, %c0_i32_0 : i32, i32
  }
}

module attributes {stable_mosaic.version = 11 : i64} {
  func.func @_q_proj_kernel(%arg0: memref<8x32xbf16, #tpu.memory_space<vmem>>, %arg1: memref<32x32xbf16, #tpu.memory_space<vmem>>, %arg2: memref<1x32xf32, #tpu.memory_space<vmem>>, %arg3: memref<8x32xbf16, #tpu.memory_space<vmem>>) attributes {dimension_semantics = [], scalar_prefetch = 0 : i64, scratch_operands = 0 : i64, tpu.core_type = #tpu.core_type<tc>} {
    %c0 = arith.constant 0 : index
    %c0_0 = arith.constant 0 : index
    %0 = vector.load %arg0[%c0, %c0_0] : memref<8x32xbf16, #tpu.memory_space<vmem>>, vector<8x32xbf16>
    %c0_1 = arith.constant 0 : index
    %c0_2 = arith.constant 0 : index
    %1 = vector.load %arg1[%c0_1, %c0_2] : memref<32x32xbf16, #tpu.memory_space<vmem>>, vector<32x32xbf16>
    %cst = arith.constant dense<0.000000e+00> : vector<8x32xf32>
    %2 = tpu.matmul %0, %1, %cst {dimension_numbers = #tpu.dot_dimension_numbers<[1], [0], [0], [1], [0, 0, 1, 1], [], []>} : vector<8x32xbf16>, vector<32x32xbf16>, vector<8x32xf32> -> vector<8x32xf32>
    %c0_3 = arith.constant 0 : index
    %c0_4 = arith.constant 0 : index
    %3 = vector.load %arg2[%c0_3, %c0_4] : memref<1x32xf32, #tpu.memory_space<vmem>>, vector<1x32xf32>
    %4 = vector.broadcast %3 : vector<1x32xf32> to vector<8x32xf32>
    %5 = arith.addf %2, %4 : vector<8x32xf32>
    %6 = arith.truncf %5 : vector<8x32xf32> to vector<8x32xbf16>
    %c0_5 = arith.constant 0 : index
    %c0_6 = arith.constant 0 : index
    %7 = vector.load %arg3[%c0_5, %c0_6] : memref<8x32xbf16, #tpu.memory_space<vmem>>, vector<8x32xbf16>
    tpu.vector_store %arg3[%c0_5, %c0_6], %6 {strides = array<i32>} : memref<8x32xbf16, #tpu.memory_space<vmem>>, vector<8x32xbf16>,
    return
  }
}

module attributes {stable_mosaic.version = 11 : i64} {
  func.func @_attention_kernel(%arg0: i32, %arg1: memref<8x32xbf16, #tpu.memory_space<vmem>>, %arg2: memref<1x128x32xbf16, #tpu.memory_space<vmem>>, %arg3: memref<1x128x32xbf16, #tpu.memory_space<vmem>>, %arg4: memref<1x8x32xf32, #tpu.memory_space<vmem>>, %arg5: memref<1x8x128xf32, #tpu.memory_space<vmem>>) attributes {dimension_semantics = [#tpu.dimension_semantics<parallel>], iteration_bounds = array<i64: 2>, scalar_prefetch = 0 : i64, scratch_operands = 0 : i64, tpu.core_type = #tpu.core_type<tc>, window_params = [{pipeline_mode = #tpu.pipeline_mode<synchronous>, transform_indices = @transform_0, window_bounds = array<i64: 8, 32>}, {transform_indices = @transform_1, window_bounds = array<i64: 1, 128, 32>}, {transform_indices = @transform_2, window_bounds = array<i64: 1, 128, 32>}, {transform_indices = @transform_3, window_bounds = array<i64: 1, 8, 32>}, {transform_indices = @transform_4, window_bounds = array<i64: 1, 8, 128>}]} {
    %c0 = arith.constant 0 : index
    %c0_0 = arith.constant 0 : index
    %0 = vector.load %arg1[%c0, %c0_0] : memref<8x32xbf16, #tpu.memory_space<vmem>>, vector<8x32xbf16>
    %c0_1 = arith.constant 0 : index
    %c0_2 = arith.constant 0 : index
    %c0_3 = arith.constant 0 : index
    %1 = vector.load %arg2[%c0_1, %c0_2, %c0_3] : memref<1x128x32xbf16, #tpu.memory_space<vmem>>, vector<1x128x32xbf16>
    %2 = vector.shape_cast %1 : vector<1x128x32xbf16> to vector<128x32xbf16>
    %cst = arith.constant dense<0.000000e+00> : vector<8x128xf32>
    %3 = tpu.matmul %0, %2, %cst {dimension_numbers = #tpu.dot_dimension_numbers<[1], [1], [0], [0], [0, 0, 1, 0], [], []>} : vector<8x32xbf16>, vector<128x32xbf16>, vector<8x128xf32> -> vector<8x128xf32>
    %cst_4 = arith.constant 0.176776692 : f32
    %4 = vector.broadcast %cst_4 : f32 to vector<8x128xf32>
    %5 = arith.mulf %3, %4 : vector<8x128xf32>
    %cst_5 = arith.constant dense<0xFF800000> : vector<8xf32>
    %6 = vector.multi_reduction <maximumf>, %5, %cst_5 [1] : vector<8x128xf32> to vector<8xf32>
    %7 = vector.shape_cast %6 : vector<8xf32> to vector<8x1xf32>
    %8 = vector.broadcast %7 : vector<8x1xf32> to vector<8x128xf32>
    %9 = arith.subf %5, %8 : vector<8x128xf32>
    %10 = math.exp %9 : vector<8x128xf32>
    %cst_6 = arith.constant dense<0.000000e+00> : vector<8xf32>
    %11 = vector.multi_reduction <add>, %10, %cst_6 [1] : vector<8x128xf32> to vector<8xf32>
    %12 = vector.shape_cast %11 : vector<8xf32> to vector<8x1xf32>
    %13 = tpu.reciprocal %12 {approx = true} : vector<8x1xf32> -> vector<8x1xf32>
    %14 = vector.broadcast %13 : vector<8x1xf32> to vector<8x128xf32>
    %15 = arith.mulf %10, %14 : vector<8x128xf32>
    %c0_7 = arith.constant 0 : index
    %c0_8 = arith.constant 0 : index
    %c0_9 = arith.constant 0 : index
    %16 = vector.load %arg5[%c0_7, %c0_8, %c0_9] : memref<1x8x128xf32, #tpu.memory_space<vmem>>, vector<1x8x128xf32>
    %17 = vector.shape_cast %16 : vector<1x8x128xf32> to vector<8x128xf32>
    %18 = vector.shape_cast %15 : vector<8x128xf32> to vector<1x8x128xf32>
    tpu.vector_store %arg5[%c0_7, %c0_8, %c0_9], %18 {strides = array<i32>} : memref<1x8x128xf32, #tpu.memory_space<vmem>>, vector<1x8x128xf32>,
    %19 = arith.truncf %15 : vector<8x128xf32> to vector<8x128xbf16>
    %c0_10 = arith.constant 0 : index
    %c0_11 = arith.constant 0 : index
    %c0_12 = arith.constant 0 : index
    %20 = vector.load %arg3[%c0_10, %c0_11, %c0_12] : memref<1x128x32xbf16, #tpu.memory_space<vmem>>, vector<1x128x32xbf16>
    %21 = vector.shape_cast %20 : vector<1x128x32xbf16> to vector<128x32xbf16>
    %cst_13 = arith.constant dense<0.000000e+00> : vector<8x32xf32>
    %22 = tpu.matmul %19, %21, %cst_13 {dimension_numbers = #tpu.dot_dimension_numbers<[1], [0], [0], [1], [0, 0, 1, 1], [], []>} : vector<8x128xbf16>, vector<128x32xbf16>, vector<8x32xf32> -> vector<8x32xf32>
    %c0_14 = arith.constant 0 : index
    %c0_15 = arith.constant 0 : index
    %c0_16 = arith.constant 0 : index
    %23 = vector.load %arg4[%c0_14, %c0_15, %c0_16] : memref<1x8x32xf32, #tpu.memory_space<vmem>>, vector<1x8x32xf32>
    %24 = vector.shape_cast %23 : vector<1x8x32xf32> to vector<8x32xf32>
    %25 = vector.shape_cast %22 : vector<8x32xf32> to vector<1x8x32xf32>
    tpu.vector_store %arg4[%c0_14, %c0_15, %c0_16], %25 {strides = array<i32>} : memref<1x8x32xf32, #tpu.memory_space<vmem>>, vector<1x8x32xf32>,
    return
  }
  func.func @transform_0(%arg0: i32) -> (i32, i32) {
    %c0_i32 = arith.constant 0 : i32
    %c0_i32_0 = arith.constant 0 : i32
    %c0_i32_1 = arith.constant 0 : i32
    return %c0_i32, %c0_i32_0 : i32, i32
  }
  func.func @transform_1(%arg0: i32) -> (i32, i32, i32) {
    %c0_i32 = arith.constant 0 : i32
    %c0_i32_0 = arith.constant 0 : i32
    %c0_i32_1 = arith.constant 0 : i32
    return %arg0, %c0_i32, %c0_i32_0 : i32, i32, i32
  }
  func.func @transform_2(%arg0: i32) -> (i32, i32, i32) {
    %c0_i32 = arith.constant 0 : i32
    %c0_i32_0 = arith.constant 0 : i32
    %c0_i32_1 = arith.constant 0 : i32
    return %arg0, %c0_i32, %c0_i32_0 : i32, i32, i32
  }
  func.func @transform_3(%arg0: i32) -> (i32, i32, i32) {
    %c0_i32 = arith.constant 0 : i32
    %c0_i32_0 = arith.constant 0 : i32
    %c0_i32_1 = arith.constant 0 : i32
    return %arg0, %c0_i32, %c0_i32_0 : i32, i32, i32
  }
  func.func @transform_4(%arg0: i32) -> (i32, i32, i32) {
    %c0_i32 = arith.constant 0 : i32
    %c0_i32_0 = arith.constant 0 : i32
    %c0_i32_1 = arith.constant 0 : i32
    return %arg0, %c0_i32, %c0_i32_0 : i32, i32, i32
  }
}

</mosaic_0001>

<llo_original>
// kernel: position_attention_forward.19
$region0: #{position_attention_forward.19}
  #allocation0 [shape = 'u32[]', space=smem, size = 0x4, offset = 0x4, fixed_abs, tag = 'smem constant byte address 0x4 - core index']
  #allocation1 [shape = 'u32[144,128]{1,0:T(1,128)}', space=vmem, size = 0x12000, scoped, tag = 'internal scratch']
  %s0 = inlined_call_operand.vmem [shape: f32[128,128], index: 0, kind: input, shape index: {}]
  %s1 = inlined_call_operand.vmem [shape: f32[1,128], index: 1, kind: input, shape index: {}]
  %s2 = inlined_call_operand.vmem [shape: f32[1,128], index: 2, kind: input, shape index: {}]
  %s3 = inlined_call_operand.vmem [shape: bf16[128,128], index: 3, kind: output, shape index: {}]
  %s4 = sld [smem:[#allocation0]]
  $region22: #{position_attention_forward.19} parent=0
    _
  %s6 = ssub.s32 1, %s4
  %s7 = scalar_select 0, %s6, %s4
  // Predicated region
  $region2: #{position_attention_forward.19} parent=0 // pred_check
    _
  $region3: #{position_attention_forward.19} parent=0 // pred_check_branch
    %9 = sbr.rel (0) target = $region5
  $region4: #{position_attention_forward.19} parent=0 // pred_region
    _
  $region5: #{position_attention_forward.19} parent=0 // pred_fallthru
    _
  // Predicated region
  $region6: #{position_attention_forward.19} parent=0 // pred_check
    _
  $region7: #{position_attention_forward.19} parent=0 // pred_check_branch
    %11 = sbr.rel (0) target = $region9
  $region8: #{position_attention_forward.19} parent=0 // pred_region
    _
  $region9: #{position_attention_forward.19} parent=0 // pred_fallthru
    _
  // Predicated region
  $region10: #{position_attention_forward.19} parent=0 // pred_check
    _
  $region11: #{position_attention_forward.19} parent=0 // pred_check_branch
    %13 = sbr.rel (0) target = $region13
  $region12: #{position_attention_forward.19} parent=0 // pred_region
    _
  $region13: #{position_attention_forward.19} parent=0 // pred_fallthru
    _
  %v14 = vld [vmem:[%s0] sm:$0xff]
  %v15 = vld [vmem:[%s0 + $0x8] sm:$0xff]
  %v16 = vld [vmem:[%s0 + $0x10] sm:$0xff]
  %v17 = vld [vmem:[%s0 + $0x18] sm:$0xff]
  %v18 = vld [vmem:[%s0 + $0x20] sm:$0xff]
  %v19 = vld [vmem:[%s0 + $0x28] sm:$0xff]
  %v20 = vld [vmem:[%s0 + $0x30] sm:$0xff]
  %v21 = vld [vmem:[%s0 + $0x38] sm:$0xff]
  %v22 = vld [vmem:[%s0 + $0x40] sm:$0xff]
  %v23 = vld [vmem:[%s0 + $0x48] sm:$0xff]
  %v24 = vld [vmem:[%s0 + $0x50] sm:$0xff]
  %v25 = vld [vmem:[%s0 + $0x58] sm:$0xff]
  %v26 = vld [vmem:[%s0 + $0x60] sm:$0xff]
  %v27 = vld [vmem:[%s0 + $0x68] sm:$0xff]
  %v28 = vld [vmem:[%s0 + $0x70] sm:$0xff]
  %v29 = vld [vmem:[%s0 + $0x78] sm:$0xff]
  %v30 = vld [vmem:[%s1] sm:$0x1]
  %v32 = vlaneseq
  %v33 = vshrl.u32 %v32, 7
  %v34 = vsub.s32 0, %v33
  %v35 = vrot.slane %v30, %v34
  %v37 = vmul.f32 %v14, %v35
  %v38 = vmul.f32 %v15, %v35
  %v39 = vmul.f32 %v16, %v35
  %v40 = vmul.f32 %v17, %v35
  %v41 = vmul.f32 %v18, %v35
  %v42 = vmul.f32 %v19, %v35
  %v43 = vmul.f32 %v20, %v35
  %v44 = vmul.f32 %v21, %v35
  %v45 = vmul.f32 %v22, %v35
  %v46 = vmul.f32 %v23, %v35
  %v47 = vmul.f32 %v24, %v35
  %v48 = vmul.f32 %v25, %v35
  %v49 = vmul.f32 %v26, %v35
  %v50 = vmul.f32 %v27, %v35
  %v51 = vmul.f32 %v28, %v35
  %v52 = vmul.f32 %v29, %v35
  %v53 = vld [vmem:[%s2] sm:$0x1]
  %v55 = vlaneseq
  %v56 = vshrl.u32 %v55, 7
  %v57 = vsub.s32 0, %v56
  %v58 = vrot.slane %v53, %v57
  %v60 = vadd.f32 %v37, %v58
  %v61 = vadd.f32 %v38, %v58
  %v62 = vadd.f32 %v39, %v58
  %v63 = vadd.f32 %v40, %v58
  %v64 = vadd.f32 %v41, %v58
  %v65 = vadd.f32 %v42, %v58
  %v66 = vadd.f32 %v43, %v58
  %v67 = vadd.f32 %v44, %v58
  %v68 = vadd.f32 %v45, %v58
  %v69 = vadd.f32 %v46, %v58
  %v70 = vadd.f32 %v47, %v58
  %v71 = vadd.f32 %v48, %v58
  %v72 = vadd.f32 %v49, %v58
  %v73 = vadd.f32 %v50, %v58
  %v74 = vadd.f32 %v51, %v58
  %v75 = vadd.f32 %v52, %v58
  %v76 = vmax.f32 %v60, 0.0
  %v77 = vmax.f32 %v61, 0.0
  %v78 = vmax.f32 %v62, 0.0
  %v79 = vmax.f32 %v63, 0.0
  %v80 = vmax.f32 %v64, 0.0
  %v81 = vmax.f32 %v65, 0.0
  %v82 = vmax.f32 %v66, 0.0
  %v83 = vmax.f32 %v67, 0.0
  %v84 = vmax.f32 %v68, 0.0
  %v85 = vmax.f32 %v69, 0.0
  %v86 = vmax.f32 %v70, 0.0
  %v87 = vmax.f32 %v71, 0.0
  %v88 = vmax.f32 %v72, 0.0
  %v89 = vmax.f32 %v73, 0.0
  %v90 = vmax.f32 %v74, 0.0
  %v91 = vmax.f32 %v75, 0.0
  %v92 = vpack.c.bf16 %v77, %v76
  %v93 = vpack.c.bf16 %v79, %v78
  %v94 = vpack.c.bf16 %v81, %v80
  %v95 = vpack.c.bf16 %v83, %v82
  %v96 = vpack.c.bf16 %v85, %v84
  %v97 = vpack.c.bf16 %v87, %v86
  %v98 = vpack.c.bf16 %v89, %v88
  %v99 = vpack.c.bf16 %v91, %v90
  %v108 = vunpack.c.l.b16 %v92
  %v109 = vunpack.c.h.b16 %v92
  %v110 = vunpack.c.l.b16 %v93
  %v111 = vunpack.c.h.b16 %v93
  %v112 = vunpack.c.l.b16 %v94
  %v113 = vunpack.c.h.b16 %v94
  %v114 = vunpack.c.l.b16 %v95
  %v115 = vunpack.c.h.b16 %v95
  %v116 = vunpack.c.l.b16 %v96
  %v117 = vunpack.c.h.b16 %v96
  %v118 = vunpack.c.l.b16 %v97
  %v119 = vunpack.c.h.b16 %v97
  %v120 = vunpack.c.l.b16 %v98
  %v121 = vunpack.c.h.b16 %v98
  %v122 = vunpack.c.l.b16 %v99
  %v123 = vunpack.c.h.b16 %v99
  %v124 = vpack.c.b16 %v108, %v108
  %v125 = vpack.c.b16 %v109, %v109
  %v126 = vpack.c.b16 %v110, %v110
  %v127 = vpack.c.b16 %v111, %v111
  %v128 = vpack.c.b16 %v112, %v112
  %v129 = vpack.c.b16 %v113, %v113
  %v130 = vpack.c.b16 %v114, %v114
  %v131 = vpack.c.b16 %v115, %v115
  %v132 = vpack.c.b16 %v116, %v116
  %v133 = vpack.c.b16 %v117, %v117
  %v134 = vpack.c.b16 %v118, %v118
  %v135 = vpack.c.b16 %v119, %v119
  %v136 = vpack.c.b16 %v120, %v120
  %v137 = vpack.c.b16 %v121, %v121
  %v138 = vpack.c.b16 %v122, %v122
  %v139 = vpack.c.b16 %v123, %v123
  %156 = vst [vmem:[%s3] sm:$0xf] %v124
  %157 = vst [vmem:[%s3 + $0x4] sm:$0xf] %v125
  %158 = vst [vmem:[%s3 + $0x8] sm:$0xf] %v126
  %159 = vst [vmem:[%s3 + $0xc] sm:$0xf] %v127
  %160 = vst [vmem:[%s3 + $0x10] sm:$0xf] %v128
  %161 = vst [vmem:[%s3 + $0x14] sm:$0xf] %v129
  %162 = vst [vmem:[%s3 + $0x18] sm:$0xf] %v130
  %163 = vst [vmem:[%s3 + $0x1c] sm:$0xf] %v131
  %164 = vst [vmem:[%s3 + $0x20] sm:$0xf] %v132
  %165 = vst [vmem:[%s3 + $0x24] sm:$0xf] %v133
  %166 = vst [vmem:[%s3 + $0x28] sm:$0xf] %v134
  %167 = vst [vmem:[%s3 + $0x2c] sm:$0xf] %v135
  %168 = vst [vmem:[%s3 + $0x30] sm:$0xf] %v136
  %169 = vst [vmem:[%s3 + $0x34] sm:$0xf] %v137
  %170 = vst [vmem:[%s3 + $0x38] sm:$0xf] %v138
  %171 = vst [vmem:[%s3 + $0x3c] sm:$0xf] %v139
  // Predicated region
  $region14: #{position_attention_forward.19} parent=0 // pred_check
    _
  $region15: #{position_attention_forward.19} parent=0 // pred_check_branch
    %173 = sbr.rel (0) target = $region17
  $region16: #{position_attention_forward.19} parent=0 // pred_region
    _
  $region17: #{position_attention_forward.19} parent=0 // pred_fallthru
    _
  // Predicated region
  $region18: #{position_attention_forward.19} parent=0 // pred_check
    _
  $region19: #{position_attention_forward.19} parent=0 // pred_check_branch
    %175 = sbr.rel (0) target = $region21
  $region20: #{position_attention_forward.19} parent=0 // pred_region
    _
  $region21: #{position_attention_forward.19} parent=0 // pred_fallthru
    _

// kernel: position_attention_forward.18
$region0: #{position_attention_forward.18}
  #allocation0 [shape = 'u32[]', space=smem, size = 0x4, offset = 0x4, fixed_abs, tag = 'smem constant byte address 0x4 - core index']
  #allocation1 [shape = 'u32[144,128]{1,0:T(1,128)}', space=vmem, size = 0x12000, scoped, tag = 'internal scratch']
  %s0 = inlined_call_operand.vmem [shape: bf16[128,384], index: 0, kind: input, shape index: {}]
  %s1 = inlined_call_operand.vmem [shape: bf16[384,128], index: 1, kind: input, shape index: {}]
  %s2 = inlined_call_operand.vmem [shape: f32[128,128], index: 2, kind: output, shape index: {0}]
  %s3 = inlined_call_operand.vmem [shape: f32[1,128], index: 3, kind: output, shape index: {1}]
  %s4 = inlined_call_operand.vmem [shape: f32[1,128], index: 4, kind: output, shape index: {2}]
  %5 = xla_tuple %s2, %s3, %s4
  %s6 = sld [smem:[#allocation0]]
  $region38: #{position_attention_forward.18} parent=0
    _
  %s8 = ssub.s32 1, %s6
  %s9 = scalar_select 0, %s8, %s6
  // Predicated region
  $region2: #{position_attention_forward.18} parent=0 // pred_check
    _
  $region3: #{position_attention_forward.18} parent=0 // pred_check_branch
    %11 = sbr.rel (0) target = $region5
  $region4: #{position_attention_forward.18} parent=0 // pred_region
    _
  $region5: #{position_attention_forward.18} parent=0 // pred_fallthru
    _
  // Predicated region
  $region6: #{position_attention_forward.18} parent=0 // pred_check
    _
  $region7: #{position_attention_forward.18} parent=0 // pred_check_branch
    %13 = sbr.rel (0) target = $region9
  $region8: #{position_attention_forward.18} parent=0 // pred_region
    _
  $region9: #{position_attention_forward.18} parent=0 // pred_fallthru
    _
  %v15 = vld [vmem:[%s0] sm:$0xff]
  %v16 = vld [vmem:[%s0 + $0x8] sm:$0xf]
  %v17 = vld [vmem:[%s0 + $0xc] sm:$0xff]
  %v18 = vld [vmem:[%s0 + $0x14] sm:$0xf]
  %v19 = vld [vmem:[%s0 + $0x18] sm:$0xff]
  %v20 = vld [vmem:[%s0 + $0x20] sm:$0xf]
  %v21 = vld [vmem:[%s0 + $0x24] sm:$0xff]
  %v22 = vld [vmem:[%s0 + $0x2c] sm:$0xf]
  %v23 = vld [vmem:[%s0 + $0x30] sm:$0xff]
  %v24 = vld [vmem:[%s0 + $0x38] sm:$0xf]
  %v25 = vld [vmem:[%s0 + $0x3c] sm:$0xff]
  %v26 = vld [vmem:[%s0 + $0x44] sm:$0xf]
  %v27 = vld [vmem:[%s0 + $0x48] sm:$0xff]
  %v28 = vld [vmem:[%s0 + $0x50] sm:$0xf]
  %v29 = vld [vmem:[%s0 + $0x54] sm:$0xff]
  %v30 = vld [vmem:[%s0 + $0x5c] sm:$0xf]
  %v31 = vld [vmem:[%s0 + $0x60] sm:$0xff]
  %v32 = vld [vmem:[%s0 + $0x68] sm:$0xf]
  %v33 = vld [vmem:[%s0 + $0x6c] sm:$0xff]
  %v34 = vld [vmem:[%s0 + $0x74] sm:$0xf]
  %v35 = vld [vmem:[%s0 + $0x78] sm:$0xff]
  %v36 = vld [vmem:[%s0 + $0x80] sm:$0xf]
  %v37 = vld [vmem:[%s0 + $0x84] sm:$0xff]
  %v38 = vld [vmem:[%s0 + $0x8c] sm:$0xf]
  %v39 = vld [vmem:[%s0 + $0x90] sm:$0xff]
  %v40 = vld [vmem:[%s0 + $0x98] sm:$0xf]
  %v41 = vld [vmem:[%s0 + $0x9c] sm:$0xff]
  %v42 = vld [vmem:[%s0 + $0xa4] sm:$0xf]
  %v43 = vld [vmem:[%s0 + $0xa8] sm:$0xff]
  %v44 = vld [vmem:[%s0 + $0xb0] sm:$0xf]
  %v45 = vld [vmem:[%s0 + $0xb4] sm:$0xff]
  %v46 = vld [vmem:[%s0 + $0xbc] sm:$0xf]
  %v47 = vld [vmem:[%s1] sm:$0xf]
  %v48 = vld [vmem:[%s1 + $0x4] sm:$0xf]
  %v49 = vld [vmem:[%s1 + $0x8] sm:$0xf]
  %v50 = vld [vmem:[%s1 + $0xc] sm:$0xf]
  %v51 = vld [vmem:[%s1 + $0x10] sm:$0xf]
  %v52 = vld [vmem:[%s1 + $0x14] sm:$0xf]
  %v53 = vld [vmem:[%s1 + $0x18] sm:$0xf]
  %v54 = vld [vmem:[%s1 + $0x1c] sm:$0xf]
  %v55 = vld [vmem:[%s1 + $0x20] sm:$0xf]
  %v56 = vld [vmem:[%s1 + $0x24] sm:$0xf]
  %v57 = vld [vmem:[%s1 + $0x28] sm:$0xf]
  %v58 = vld [vmem:[%s1 + $0x2c] sm:$0xf]
  %v59 = vld [vmem:[%s1 + $0x30] sm:$0xf]
  %v60 = vld [vmem:[%s1 + $0x34] sm:$0xf]
  %v61 = vld [vmem:[%s1 + $0x38] sm:$0xf]
  %v62 = vld [vmem:[%s1 + $0x3c] sm:$0xf]
  %v63 = vld [vmem:[%s1 + $0x40] sm:$0xf]
  %v64 = vld [vmem:[%s1 + $0x44] sm:$0xf]
  %v65 = vld [vmem:[%s1 + $0x48] sm:$0xf]
  %v66 = vld [vmem:[%s1 + $0x4c] sm:$0xf]
  %v67 = vld [vmem:[%s1 + $0x50] sm:$0xf]
  %v68 = vld [vmem:[%s1 + $0x54] sm:$0xf]
  %v69 = vld [vmem:[%s1 + $0x58] sm:$0xf]
  %v70 = vld [vmem:[%s1 + $0x5c] sm:$0xf]
  %v71 = vld [vmem:[%s1 + $0x60] sm:$0xf]
  %v72 = vld [vmem:[%s1 + $0x64] sm:$0xf]
  %v73 = vld [vmem:[%s1 + $0x68] sm:$0xf]
  %v74 = vld [vmem:[%s1 + $0x6c] sm:$0xf]
  %v75 = vld [vmem:[%s1 + $0x70] sm:$0xf]
  %v76 = vld [vmem:[%s1 + $0x74] sm:$0xf]
  %v77 = vld [vmem:[%s1 + $0x78] sm:$0xf]
  %v78 = vld [vmem:[%s1 + $0x7c] sm:$0xf]
  %v79 = vld [vmem:[%s1 + $0x80] sm:$0xf]
  %v80 = vld [vmem:[%s1 + $0x84] sm:$0xf]
  %v81 = vld [vmem:[%s1 + $0x88] sm:$0xf]
  %v82 = vld [vmem:[%s1 + $0x8c] sm:$0xf]
  %v83 = vld [vmem:[%s1 + $0x90] sm:$0xf]
  %v84 = vld [vmem:[%s1 + $0x94] sm:$0xf]
  %v85 = vld [vmem:[%s1 + $0x98] sm:$0xf]
  %v86 = vld [vmem:[%s1 + $0x9c] sm:$0xf]
  %v87 = vld [vmem:[%s1 + $0xa0] sm:$0xf]
  %v88 = vld [vmem:[%s1 + $0xa4] sm:$0xf]
  %v89 = vld [vmem:[%s1 + $0xa8] sm:$0xf]
  %v90 = vld [vmem:[%s1 + $0xac] sm:$0xf]
  %v91 = vld [vmem:[%s1 + $0xb0] sm:$0xf]
  %v92 = vld [vmem:[%s1 + $0xb4] sm:$0xf]
  %v93 = vld [vmem:[%s1 + $0xb8] sm:$0xf]
  %v94 = vld [vmem:[%s1 + $0xbc] sm:$0xf]
  %v127 = vunpack.c.l.b16 %v15
  %v128 = vunpack.c.h.b16 %v15
  %v129 = vunpack.c.l.b16 %v16
  %v130 = vunpack.c.l.b16 %v17
  %v131 = vunpack.c.h.b16 %v17
  %v132 = vunpack.c.l.b16 %v18
  %v133 = vunpack.c.l.b16 %v19
  %v134 = vunpack.c.h.b16 %v19
  %v135 = vunpack.c.l.b16 %v20
  %v136 = vunpack.c.l.b16 %v21
  %v137 = vunpack.c.h.b16 %v21
  %v138 = vunpack.c.l.b16 %v22
  %v139 = vunpack.c.l.b16 %v23
  %v140 = vunpack.c.h.b16 %v23
  %v141 = vunpack.c.l.b16 %v24
  %v142 = vunpack.c.l.b16 %v25
  %v143 = vunpack.c.h.b16 %v25
  %v144 = vunpack.c.l.b16 %v26
  %v145 = vunpack.c.l.b16 %v27
  %v146 = vunpack.c.h.b16 %v27
  %v147 = vunpack.c.l.b16 %v28
  %v148 = vunpack.c.l.b16 %v29
  %v149 = vunpack.c.h.b16 %v29
  %v150 = vunpack.c.l.b16 %v30
  %v151 = vunpack.c.l.b16 %v31
  %v152 = vunpack.c.h.b16 %v31
  %v153 = vunpack.c.l.b16 %v32
  %v154 = vunpack.c.l.b16 %v33
  %v155 = vunpack.c.h.b16 %v33
  %v156 = vunpack.c.l.b16 %v34
  %v157 = vunpack.c.l.b16 %v35
  %v158 = vunpack.c.h.b16 %v35
  %v159 = vunpack.c.l.b16 %v36
  %v160 = vunpack.c.l.b16 %v37
  %v161 = vunpack.c.h.b16 %v37
  %v162 = vunpack.c.l.b16 %v38
  %v163 = vunpack.c.l.b16 %v39
  %v164 = vunpack.c.h.b16 %v39
  %v165 = vunpack.c.l.b16 %v40
  %v166 = vunpack.c.l.b16 %v41
  %v167 = vunpack.c.h.b16 %v41
  %v168 = vunpack.c.l.b16 %v42
  %v169 = vunpack.c.l.b16 %v43
  %v170 = vunpack.c.h.b16 %v43
  %v171 = vunpack.c.l.b16 %v44
  %v172 = vunpack.c.l.b16 %v45
  %v173 = vunpack.c.h.b16 %v45
  %v174 = vunpack.c.l.b16 %v46
  %v175 = vpack.c.b16 %v130, %v127
  %v176 = vpack.c.b16 %v131, %v128
  %v177 = vpack.c.b16 %v132, %v129
  %v178 = vpack.c.b16 %v136, %v133
  %v179 = vpack.c.b16 %v137, %v134
  %v180 = vpack.c.b16 %v138, %v135
  %v181 = vpack.c.b16 %v142, %v139
  %v182 = vpack.c.b16 %v143, %v140
  %v183 = vpack.c.b16 %v144, %v141
  %v184 = vpack.c.b16 %v148, %v145
  %v185 = vpack.c.b16 %v149, %v146
  %v186 = vpack.c.b16 %v150, %v147
  %v187 = vpack.c.b16 %v154, %v151
  %v188 = vpack.c.b16 %v155, %v152
  %v189 = vpack.c.b16 %v156, %v153
  %v190 = vpack.c.b16 %v160, %v157
  %v191 = vpack.c.b16 %v161, %v158
  %v192 = vpack.c.b16 %v162, %v159
  %v193 = vpack.c.b16 %v166, %v163
  %v194 = vpack.c.b16 %v167, %v164
  %v195 = vpack.c.b16 %v168, %v165
  %v196 = vpack.c.b16 %v172, %v169
  %v197 = vpack.c.b16 %v173, %v170
  %v198 = vpack.c.b16 %v174, %v171
  %v271 = vunpack.c.l.b16 %v47
  %v272 = vunpack.c.l.b16 %v48
  %v273 = vunpack.c.l.b16 %v49
  %v274 = vunpack.c.l.b16 %v50
  %v275 = vunpack.c.l.b16 %v51
  %v276 = vunpack.c.l.b16 %v52
  %v277 = vunpack.c.l.b16 %v53
  %v278 = vunpack.c.l.b16 %v54
  %v279 = vunpack.c.l.b16 %v55
  %v280 = vunpack.c.l.b16 %v56
  %v281 = vunpack.c.l.b16 %v57
  %v282 = vunpack.c.l.b16 %v58
  %v283 = vunpack.c.l.b16 %v59
  %v284 = vunpack.c.l.b16 %v60
  %v285 = vunpack.c.l.b16 %v61
  %v286 = vunpack.c.l.b16 %v62
  %v287 = vunpack.c.l.b16 %v63
  %v288 = vunpack.c.l.b16 %v64
  %v289 = vunpack.c.l.b16 %v65
  %v290 = vunpack.c.l.b16 %v66
  %v291 = vunpack.c.l.b16 %v67
  %v292 = vunpack.c.l.b16 %v68
  %v293 = vunpack.c.l.b16 %v69
  %v294 = vunpack.c.l.b16 %v70
  %v295 = vunpack.c.l.b16 %v71
  %v296 = vunpack.c.l.b16 %v72
  %v297 = vunpack.c.l.b16 %v73
  %v298 = vunpack.c.l.b16 %v74
  %v299 = vunpack.c.l.b16 %v75
  %v300 = vunpack.c.l.b16 %v76
  %v301 = vunpack.c.l.b16 %v77
  %v302 = vunpack.c.l.b16 %v78
  %v303 = vunpack.c.l.b16 %v79
  %v304 = vunpack.c.l.b16 %v80
  %v305 = vunpack.c.l.b16 %v81
  %v306 = vunpack.c.l.b16 %v82
  %v307 = vunpack.c.l.b16 %v83
  %v308 = vunpack.c.l.b16 %v84
  %v309 = vunpack.c.l.b16 %v85
  %v310 = vunpack.c.l.b16 %v86
  %v311 = vunpack.c.l.b16 %v87
  %v312 = vunpack.c.l.b16 %v88
  %v313 = vunpack.c.l.b16 %v89
  %v314 = vunpack.c.l.b16 %v90
  %v315 = vunpack.c.l.b16 %v91
  %v316 = vunpack.c.l.b16 %v92
  %v317 = vunpack.c.l.b16 %v93
  %v318 = vunpack.c.l.b16 %v94
  %v319 = vpack.c.b16 %v272, %v271
  %v320 = vpack.c.b16 %v274, %v273
  %v321 = vpack.c.b16 %v276, %v275
  %v322 = vpack.c.b16 %v278, %v277
  %v323 = vpack.c.b16 %v280, %v279
  %v324 = vpack.c.b16 %v282, %v281
  %v325 = vpack.c.b16 %v284, %v283
  %v326 = vpack.c.b16 %v286, %v285
  %v327 = vpack.c.b16 %v288, %v287
  %v328 = vpack.c.b16 %v290, %v289
  %v329 = vpack.c.b16 %v292, %v291
  %v330 = vpack.c.b16 %v294, %v293
  %v331 = vpack.c.b16 %v296, %v295
  %v332 = vpack.c.b16 %v298, %v297
  %v333 = vpack.c.b16 %v300, %v299
  %v334 = vpack.c.b16 %v302, %v301
  %v335 = vpack.c.b16 %v304, %v303
  %v336 = vpack.c.b16 %v306, %v305
  %v337 = vpack.c.b16 %v308, %v307
  %v338 = vpack.c.b16 %v310, %v309
  %v339 = vpack.c.b16 %v312, %v311
  %v340 = vpack.c.b16 %v314, %v313
  %v341 = vpack.c.b16 %v316, %v315
  %v342 = vpack.c.b16 %v318, %v317
  %367 = vmatprep.subr.bf16.mxu0 0
  %368 = vmatpush1.bf16.msra.mxu0 %v319
  %369 = vmatprep.subr.bf16.mxu0 0
  %370 = vmatpush1.bf16.msra.mxu0 %v320
  %371 = vmatprep.subr.bf16.mxu0 0
  %372 = vmatpush1.bf16.msra.mxu0 %v321
  %373 = vmatprep.subr.bf16.mxu0 0
  %374 = vmatpush1.bf16.msra.mxu0 %v322
  %375 = vmatprep.subr.bf16.mxu0 0
  %376 = vmatpush1.bf16.msra.mxu0 %v323
  %377 = vmatprep.subr.bf16.mxu0 0
  %378 = vmatpush1.bf16.msra.mxu0 %v324
  %379 = vmatprep.subr.bf16.mxu0 0
  %380 = vmatpush1.bf16.msra.mxu0 %v325
  %381 = vmatprep.subr.bf16.mxu0 0
  %382 = vmatpush1.bf16.msra.mxu0 %v326
  %383 = vmatprep.subr.bf16.mxu0 0
  %384 = vmatpush1.bf16.msra.mxu0 %v327
  %385 = vmatprep.subr.bf16.mxu0 0
  %386 = vmatpush1.bf16.msra.mxu0 %v328
  %387 = vmatprep.subr.bf16.mxu0 0
  %388 = vmatpush1.bf16.msra.mxu0 %v329
  %389 = vmatprep.subr.bf16.mxu0 0
  %390 = vmatpush1.bf16.msra.mxu0 %v330
  %391 = vmatprep.subr.bf16.mxu0 0
  %392 = vmatpush1.bf16.msra.mxu0 %v331
  %393 = vmatprep.subr.bf16.mxu0 0
  %394 = vmatpush1.bf16.msra.mxu0 %v332
  %395 = vmatprep.subr.bf16.mxu0 0
  %396 = vmatpush1.bf16.msra.mxu0 %v333
  %397 = vmatprep.subr.bf16.mxu0 0
  %398 = vmatpush1.bf16.msra.mxu0 %v334
  %399 = vmatprep.mubr.bf16.mxu0 %v176
  %400 = vmatmul.mubr.bf16.gmra.mrb[0].mxu0 %v175
  %v401 = vpop.f32.mrb[0].mxu0
  %v402 = vadd.f32 0.0, %v401
  %v403 = vpop.f32.mrb[0].mxu0
  %v404 = vpop.f32.mrb[0].mxu0
  %v405 = vadd.f32 0.0, %v404
  %v406 = vpop.f32.mrb[0].mxu0
  %407 = vmatprep.mubr.bf16.mxu0 %v179
  %408 = vmatmul.mubr.bf16.gmra.mrb[0].mxu0 %v178
  %v409 = vpop.f32.mrb[0].mxu0
  %v410 = vadd.f32 0.0, %v409
  %v411 = vpop.f32.mrb[0].mxu0
  %v412 = vpop.f32.mrb[0].mxu0
  %v413 = vadd.f32 0.0, %v412
  %v414 = vpop.f32.mrb[0].mxu0
  %415 = vmatprep.mubr.bf16.mxu0 %v182
  %416 = vmatmul.mubr.bf16.gmra.mrb[0].mxu0 %v181
  %v417 = vpop.f32.mrb[0].mxu0
  %v418 = vadd.f32 0.0, %v417
  %v419 = vpop.f32.mrb[0].mxu0
  %v420 = vpop.f32.mrb[0].mxu0
  %v421 = vadd.f32 0.0, %v420
  %v422 = vpop.f32.mrb[0].mxu0
  %423 = vmatprep.mubr.bf16.mxu0 %v185
  %424 = vmatmul.mubr.bf16.gmra.mrb[0].mxu0 %v184
  %v425 = vpop.f32.mrb[0].mxu0
  %v426 = vadd.f32 0.0, %v425
  %v427 = vpop.f32.mrb[0].mxu0
  %v428 = vpop.f32.mrb[0].mxu0
  %v429 = vadd.f32 0.0, %v428
  %v430 = vpop.f32.mrb[0].mxu0
  %431 = vmatprep.mubr.bf16.mxu0 %v188
  %432 = vmatmul.mubr.bf16.gmra.mrb[0].mxu0 %v187
  %v433 = vpop.f32.mrb[0].mxu0
  %v434 = vadd.f32 0.0, %v433
  %v435 = vpop.f32.mrb[0].mxu0
  %v436 = vpop.f32.mrb[0].mxu0
  %v437 = vadd.f32 0.0, %v436
  %v438 = vpop.f32.mrb[0].mxu0
  %439 = vmatprep.mubr.bf16.mxu0 %v191
  %440 = vmatmul.mubr.bf16.gmra.mrb[0].mxu0 %v190
  %v441 = vpop.f32.mrb[0].mxu0
  %v442 = vadd.f32 0.0, %v441
  %v443 = vpop.f32.mrb[0].mxu0
  %v444 = vpop.f32.mrb[0].mxu0
  %v445 = vadd.f32 0.0, %v444
  %v446 = vpop.f32.mrb[0].mxu0
  %447 = vmatprep.mubr.bf16.mxu0 %v194
  %448 = vmatmul.mubr.bf16.gmra.mrb[0].mxu0 %v193
  %v449 = vpop.f32.mrb[0].mxu0
  %v450 = vadd.f32 0.0, %v449
  %v451 = vpop.f32.mrb[0].mxu0
  %v452 = vpop.f32.mrb[0].mxu0
  %v453 = vadd.f32 0.0, %v452
  %v454 = vpop.f32.mrb[0].mxu0
  %455 = vmatprep.mubr.bf16.mxu0 %v197
  %456 = vmatmul.mubr.bf16.gmra.mrb[0].mxu0 %v196
  %v457 = vpop.f32.mrb[0].mxu0
  %v458 = vadd.f32 0.0, %v457
  %v459 = vpop.f32.mrb[0].mxu0
  %v460 = vpop.f32.mrb[0].mxu0
  %v461 = vadd.f32 0.0, %v460
  %v462 = vpop.f32.mrb[0].mxu0
  %463 = vdwg.mxu0
  %464 = vmatprep.subr.bf16.mxu0 0
  %465 = vmatpush1.bf16.msra.mxu0 %v335
  %466 = vmatprep.subr.bf16.mxu0 0
  %467 = vmatpush1.bf16.msra.mxu0 %v336
  %468 = vmatprep.subr.bf16.mxu0 0
  %469 = vmatpush1.bf16.msra.mxu0 %v337
  %470 = vmatprep.subr.bf16.mxu0 0
  %471 = vmatpush1.bf16.msra.mxu0 %v338
  %472 = vmatprep.subr.bf16.mxu0 0
  %473 = vmatpush1.bf16.msra.mxu0 %v339
  %474 = vmatprep.subr.bf16.mxu0 0
  %475 = vmatpush1.bf16.msra.mxu0 %v340
  %476 = vmatprep.subr.bf16.mxu0 0
  %477 = vmatpush1.bf16.msra.mxu0 %v341
  %478 = vmatprep.subr.bf16.mxu0 0
  %479 = vmatpush1.bf16.msra.mxu0 %v342
  %480 = vmatprep.subr.bf16.mxu0 0
  %481 = vmatpush1.bf16.msra.mxu0 0
  %482 = vmatprep.subr.bf16.mxu0 0
  %483 = vmatpush1.bf16.msra.mxu0 0
  %484 = vmatprep.subr.bf16.mxu0 0
  %485 = vmatpush1.bf16.msra.mxu0 0
  %486 = vmatprep.subr.bf16.mxu0 0
  %487 = vmatpush1.bf16.msra.mxu0 0
  %488 = vmatprep.subr.bf16.mxu0 0
  %489 = vmatpush1.bf16.msra.mxu0 0
  %490 = vmatprep.subr.bf16.mxu0 0
  %491 = vmatpush1.bf16.msra.mxu0 0
  %492 = vmatprep.subr.bf16.mxu0 0
  %493 = vmatpush1.bf16.msra.mxu0 0
  %494 = vmatprep.subr.bf16.mxu0 0
  %495 = vmatpush1.bf16.msra.mxu0 0
  %496 = vmatprep.mubr.bf16.mxu0 0
  %497 = vmatmul.mubr.bf16.gmra.mrb[0].mxu0 %v177
  %v498 = vpop.f32.mrb[0].mxu0
  %v499 = vadd.f32 %v402, %v498
  %v500 = vpop.f32.mrb[0].mxu0
  %v501 = vpop.f32.mrb[0].mxu0
  %v502 = vadd.f32 %v405, %v501
  %v503 = vpop.f32.mrb[0].mxu0
  %504 = vmatprep.mubr.bf16.mxu0 0
  %505 = vmatmul.mubr.bf16.gmra.mrb[0].mxu0 %v180
  %v506 = vpop.f32.mrb[0].mxu0
  %v507 = vadd.f32 %v410, %v506
  %v508 = vpop.f32.mrb[0].mxu0
  %v509 = vpop.f32.mrb[0].mxu0
  %v510 = vadd.f32 %v413, %v509
  %v511 = vpop.f32.mrb[0].mxu0
  %512 = vmatprep.mubr.bf16.mxu0 0
  %513 = vmatmul.mubr.bf16.gmra.mrb[0].mxu0 %v183
  %v514 = vpop.f32.mrb[0].mxu0
  %v515 = vadd.f32 %v418, %v514
  %v516 = vpop.f32.mrb[0].mxu0
  %v517 = vpop.f32.mrb[0].mxu0
  %v518 = vadd.f32 %v421, %v517
  %v519 = vpop.f32.mrb[0].mxu0
  %520 = vmatprep.mubr.bf16.mxu0 0
  %521 = vmatmul.mubr.bf16.gmra.mrb[0].mxu0 %v186
  %v522 = vpop.f32.mrb[0].mxu0
  %v523 = vadd.f32 %v426, %v522
  %v524 = vpop.f32.mrb[0].mxu0
  %v525 = vpop.f32.mrb[0].mxu0
  %v526 = vadd.f32 %v429, %v525
  %v527 = vpop.f32.mrb[0].mxu0
  %528 = vmatprep.mubr.bf16.mxu0 0
  %529 = vmatmul.mubr.bf16.gmra.mrb[0].mxu0 %v189
  %v530 = vpop.f32.mrb[0].mxu0
  %v531 = vadd.f32 %v434, %v530
  %v532 = vpop.f32.mrb[0].mxu0
  %v533 = vpop.f32.mrb[0].mxu0
  %v534 = vadd.f32 %v437, %v533
  %v535 = vpop.f32.mrb[0].mxu0
  %536 = vmatprep.mubr.bf16.mxu0 0
  %537 = vmatmul.mubr.bf16.gmra.mrb[0].mxu0 %v192
  %v538 = vpop.f32.mrb[0].mxu0
  %v539 = vadd.f32 %v442, %v538
  %v540 = vpop.f32.mrb[0].mxu0
  %v541 = vpop.f32.mrb[0].mxu0
  %v542 = vadd.f32 %v445, %v541
  %v543 = vpop.f32.mrb[0].mxu0
  %544 = vmatprep.mubr.bf16.mxu0 0
  %545 = vmatmul.mubr.bf16.gmra.mrb[0].mxu0 %v195
  %v546 = vpop.f32.mrb[0].mxu0
  %v547 = vadd.f32 %v450, %v546
  %v548 = vpop.f32.mrb[0].mxu0
  %v549 = vpop.f32.mrb[0].mxu0
  %v550 = vadd.f32 %v453, %v549
  %v551 = vpop.f32.mrb[0].mxu0
  %552 = vmatprep.mubr.bf16.mxu0 0
  %553 = vmatmul.mubr.bf16.gmra.mrb[0].mxu0 %v198
  %v554 = vpop.f32.mrb[0].mxu0
  %v555 = vadd.f32 %v458, %v554
  %v556 = vpop.f32.mrb[0].mxu0
  %v557 = vpop.f32.mrb[0].mxu0
  %v558 = vadd.f32 %v461, %v557
  %v559 = vpop.f32.mrb[0].mxu0
  %560 = vdwg.mxu0
  %561 = vst [vmem:[%s2] sm:$0xff] %v499
  %562 = vst [vmem:[%s2 + $0x8] sm:$0xff] %v502
  %563 = vst [vmem:[%s2 + $0x10] sm:$0xff] %v507
  %564 = vst [vmem:[%s2 + $0x18] sm:$0xff] %v510
  %565 = vst [vmem:[%s2 + $0x20] sm:$0xff] %v515
  %566 = vst [vmem:[%s2 + $0x28] sm:$0xff] %v518
  %567 = vst [vmem:[%s2 + $0x30] sm:$0xff] %v523
  %568 = vst [vmem:[%s2 + $0x38] sm:$0xff] %v526
  %569 = vst [vmem:[%s2 + $0x40] sm:$0xff] %v531
  %570 = vst [vmem:[%s2 + $0x48] sm:$0xff] %v534
  %571 = vst [vmem:[%s2 + $0x50] sm:$0xff] %v539
  %572 = vst [vmem:[%s2 + $0x58] sm:$0xff] %v542
  %573 = vst [vmem:[%s2 + $0x60] sm:$0xff] %v547
  %574 = vst [vmem:[%s2 + $0x68] sm:$0xff] %v550
  %575 = vst [vmem:[%s2 + $0x70] sm:$0xff] %v555
  %576 = vst [vmem:[%s2 + $0x78] sm:$0xff] %v558
  %p577 = scmp.eq.s32.totalorder 0, 0
  // Predicated region
  $region10: #{position_attention_forward.18} parent=0 // pred_check
    %p578 = pneg %p577
  $region11: #{position_attention_forward.18} parent=0 // pred_check_branch
    %580 = sbr.rel (%p578) target = $region13
  $region12: #{position_attention_forward.18} parent=0 // pred_region
    %581 = vst [vmem:[%s3] sm:$0x1] 0.0
    %582 = vst [vmem:[%s4] sm:$0x1] 0.0
  $region13: #{position_attention_forward.18} parent=0 // pred_fallthru
    _
  %v583 = vld [vmem:[%s3] sm:$0x1]
  %v584 = vadd.f32 %v499, %v502
  %v585 = vadd.f32 %v584, %v507
  %v586 = vadd.f32 %v585, %v510
  %v587 = vadd.f32 %v586, %v515
  %v588 = vadd.f32 %v587, %v518
  %v589 = vadd.f32 %v588, %v523
  %v590 = vadd.f32 %v589, %v526
  %v591 = vadd.f32 %v590, %v531
  %v592 = vadd.f32 %v591, %v534
  %v593 = vadd.f32 %v592, %v539
  %v594 = vadd.f32 %v593, %v542
  %v595 = vadd.f32 %v594, %v547
  %v596 = vadd.f32 %v595, %v550
  %v597 = vadd.f32 %v596, %v555
  %v598 = vadd.f32 %v597, %v558
  %v599 = vrot.slane %v598, 4
  %v600 = vadd.f32 %v598, %v599
  %v601 = vrot.slane %v600, 2
  %v602 = vadd.f32 %v600, %v601
  %v603 = vrot.slane %v602, 1
  %v604 = vadd.f32 %v602, %v603
  %v605 = vadd.f32 %v583, %v604
  %606 = vst [vmem:[%s3] sm:$0x1] %v605
  %v607 = vld [vmem:[%s4] sm:$0x1]
  %v608 = vmul.f32 %v499, %v499
  %v609 = vmul.f32 %v502, %v502
  %v610 = vmul.f32 %v507, %v507
  %v611 = vmul.f32 %v510, %v510
  %v612 = vmul.f32 %v515, %v515
  %v613 = vmul.f32 %v518, %v518
  %v614 = vmul.f32 %v523, %v523
  %v615 = vmul.f32 %v526, %v526
  %v616 = vmul.f32 %v531, %v531
  %v617 = vmul.f32 %v534, %v534
  %v618 = vmul.f32 %v539, %v539
  %v619 = vmul.f32 %v542, %v542
  %v620 = vmul.f32 %v547, %v547
  %v621 = vmul.f32 %v550, %v550
  %v622 = vmul.f32 %v555, %v555
  %v623 = vmul.f32 %v558, %v558
  %v624 = vadd.f32 %v608, %v609
  %v625 = vadd.f32 %v624, %v610
  %v626 = vadd.f32 %v625, %v611
  %v627 = vadd.f32 %v626, %v612
  %v628 = vadd.f32 %v627, %v613
  %v629 = vadd.f32 %v628, %v614
  %v630 = vadd.f32 %v629, %v615
  %v631 = vadd.f32 %v630, %v616
  %v632 = vadd.f32 %v631, %v617
  %v633 = vadd.f32 %v632, %v618
  %v634 = vadd.f32 %v633, %v619
  %v635 = vadd.f32 %v634, %v620
  %v636 = vadd.f32 %v635, %v621
  %v637 = vadd.f32 %v636, %v622
  %v638 = vadd.f32 %v637, %v623
  %v639 = vrot.slane %v638, 4
  %v640 = vadd.f32 %v638, %v639
  %v641 = vrot.slane %v640, 2
  %v642 = vadd.f32 %v640, %v641
  %v643 = vrot.slane %v642, 1
  %v644 = vadd.f32 %v642, %v643
  %v645 = vadd.f32 %v607, %v644
  %646 = vst [vmem:[%s4] sm:$0x1] %v645
  // Predicated region
  $region14: #{position_attention_forward.18} parent=0 // pred_check
    _
  $region15: #{position_attention_forward.18} parent=0 // pred_check_branch
    %648 = sbr.rel (0) target = $region17
  $region16: #{position_attention_forward.18} parent=0 // pred_region
    _
  $region17: #{position_attention_forward.18} parent=0 // pred_fallthru
    _
  // Predicated region
  $region18: #{position_attention_forward.18} parent=0 // pred_check
    _
  $region19: #{position_attention_forward.18} parent=0 // pred_check_branch
    %650 = sbr.rel (0) target = $region21
  $region20: #{position_attention_forward.18} parent=0 // pred_region
    _
  $region21: #{position_attention_forward.18} parent=0 // pred_fallthru
    _
  // Predicated region
  $region22: #{position_attention_forward.18} parent=0 // pred_check
    _
  $region23: #{position_attention_forward.18} parent=0 // pred_check_branch
    %652 = sbr.rel (0) target = $region25
  $region24: #{position_attention_forward.18} parent=0 // pred_region
    _
  $region25: #{position_attention_forward.18} parent=0 // pred_fallthru
    _
  // Predicated region
  $region26: #{position_attention_forward.18} parent=0 // pred_check
    _
  $region27: #{position_attention_forward.18} parent=0 // pred_check_branch
    %654 = sbr.rel (0) target = $region29
  $region28: #{position_attention_forward.18} parent=0 // pred_region
    _
  $region29: #{position_attention_forward.18} parent=0 // pred_fallthru
    _
  // Predicated region
  $region30: #{position_attention_forward.18} parent=0 // pred_check
    _
  $region31: #{position_attention_forward.18} parent=0 // pred_check_branch
    %656 = sbr.rel (0) target = $region33
  $region32: #{position_attention_forward.18} parent=0 // pred_region
    _
  $region33: #{position_attention_forward.18} parent=0 // pred_fallthru
    _
  // Predicated region
  $region34: #{position_attention_forward.18} parent=0 // pred_check
    _
  $region35: #{position_attention_forward.18} parent=0 // pred_check_branch
    %658 = sbr.rel (0) target = $region37
  $region36: #{position_attention_forward.18} parent=0 // pred_region
    _
  $region37: #{position_attention_forward.18} parent=0 // pred_fallthru
    _

// kernel: position_attention_forward.20
$region0: #{position_attention_forward.20}
  #allocation0 [shape = 'u32[]', space=smem, size = 0x4, offset = 0x4, fixed_abs, tag = 'smem constant byte address 0x4 - core index']
  #allocation1 [shape = 'u32[144,128]{1,0:T(1,128)}', space=vmem, size = 0x12000, scoped, tag = 'internal scratch']
  %s0 = inlined_call_operand.vmem [shape: bf16[32,128], index: 0, kind: input, shape index: {}]
  %s1 = inlined_call_operand.vmem [shape: bf16[128,128], index: 1, kind: input, shape index: {}]
  %s2 = inlined_call_operand.vmem [shape: f32[32,128], index: 2, kind: output, shape index: {0}]
  %s3 = inlined_call_operand.vmem [shape: f32[1,128], index: 3, kind: output, shape index: {1}]
  %s4 = inlined_call_operand.vmem [shape: f32[1,128], index: 4, kind: output, shape index: {2}]
  %5 = xla_tuple %s2, %s3, %s4
  %s6 = sld [smem:[#allocation0]]
  $region38: #{position_attention_forward.20} parent=0
    _
  %s8 = ssub.s32 1, %s6
  %s9 = scalar_select 0, %s8, %s6
  // Predicated region
  $region2: #{position_attention_forward.20} parent=0 // pred_check
    _
  $region3: #{position_attention_forward.20} parent=0 // pred_check_branch
    %11 = sbr.rel (0) target = $region5
  $region4: #{position_attention_forward.20} parent=0 // pred_region
    _
  $region5: #{position_attention_forward.20} parent=0 // pred_fallthru
    _
  // Predicated region
  $region6: #{position_attention_forward.20} parent=0 // pred_check
    _
  $region7: #{position_attention_forward.20} parent=0 // pred_check_branch
    %13 = sbr.rel (0) target = $region9
  $region8: #{position_attention_forward.20} parent=0 // pred_region
    _
  $region9: #{position_attention_forward.20} parent=0 // pred_fallthru
    _
  %v15 = vld [vmem:[%s0] sm:$0xf]
  %v16 = vld [vmem:[%s0 + $0x4] sm:$0xf]
  %v17 = vld [vmem:[%s0 + $0x8] sm:$0xf]
  %v18 = vld [vmem:[%s0 + $0xc] sm:$0xf]
  %v19 = vld [vmem:[%s1] sm:$0xf]
  %v20 = vld [vmem:[%s1 + $0x4] sm:$0xf]
  %v21 = vld [vmem:[%s1 + $0x8] sm:$0xf]
  %v22 = vld [vmem:[%s1 + $0xc] sm:$0xf]
  %v23 = vld [vmem:[%s1 + $0x10] sm:$0xf]
  %v24 = vld [vmem:[%s1 + $0x14] sm:$0xf]
  %v25 = vld [vmem:[%s1 + $0x18] sm:$0xf]
  %v26 = vld [vmem:[%s1 + $0x1c] sm:$0xf]
  %v27 = vld [vmem:[%s1 + $0x20] sm:$0xf]
  %v28 = vld [vmem:[%s1 + $0x24] sm:$0xf]
  %v29 = vld [vmem:[%s1 + $0x28] sm:$0xf]
  %v30 = vld [vmem:[%s1 + $0x2c] sm:$0xf]
  %v31 = vld [vmem:[%s1 + $0x30] sm:$0xf]
  %v32 = vld [vmem:[%s1 + $0x34] sm:$0xf]
  %v33 = vld [vmem:[%s1 + $0x38] sm:$0xf]
  %v34 = vld [vmem:[%s1 + $0x3c] sm:$0xf]
  %v39 = vunpack.c.l.b16 %v15
  %v40 = vunpack.c.l.b16 %v16
  %v41 = vunpack.c.l.b16 %v17
  %v42 = vunpack.c.l.b16 %v18
  %v43 = vpack.c.b16 %v40, %v39
  %v44 = vpack.c.b16 %v42, %v41
  %v63 = vunpack.c.l.b16 %v19
  %v64 = vunpack.c.l.b16 %v20
  %v65 = vunpack.c.l.b16 %v21
  %v66 = vunpack.c.l.b16 %v22
  %v67 = vunpack.c.l.b16 %v23
  %v68 = vunpack.c.l.b16 %v24
  %v69 = vunpack.c.l.b16 %v25
  %v70 = vunpack.c.l.b16 %v26
  %v71 = vunpack.c.l.b16 %v27
  %v72 = vunpack.c.l.b16 %v28
  %v73 = vunpack.c.l.b16 %v29
  %v74 = vunpack.c.l.b16 %v30
  %v75 = vunpack.c.l.b16 %v31
  %v76 = vunpack.c.l.b16 %v32
  %v77 = vunpack.c.l.b16 %v33
  %v78 = vunpack.c.l.b16 %v34
  %v79 = vpack.c.b16 %v64, %v63
  %v80 = vpack.c.b16 %v66, %v65
  %v81 = vpack.c.b16 %v68, %v67
  %v82 = vpack.c.b16 %v70, %v69
  %v83 = vpack.c.b16 %v72, %v71
  %v84 = vpack.c.b16 %v74, %v73
  %v85 = vpack.c.b16 %v76, %v75
  %v86 = vpack.c.b16 %v78, %v77
  %95 = vmatprep.subr.bf16.mxu0 0
  %96 = vmatpush1.bf16.msra.mxu0 %v79
  %97 = vmatprep.subr.bf16.mxu0 0
  %98 = vmatpush1.bf16.msra.mxu0 %v80
  %99 = vmatprep.subr.bf16.mxu0 0
  %100 = vmatpush1.bf16.msra.mxu0 %v81
  %101 = vmatprep.subr.bf16.mxu0 0
  %102 = vmatpush1.bf16.msra.mxu0 %v82
  %103 = vmatprep.subr.bf16.mxu0 0
  %104 = vmatpush1.bf16.msra.mxu0 %v83
  %105 = vmatprep.subr.bf16.mxu0 0
  %106 = vmatpush1.bf16.msra.mxu0 %v84
  %107 = vmatprep.subr.bf16.mxu0 0
  %108 = vmatpush1.bf16.msra.mxu0 %v85
  %109 = vmatprep.subr.bf16.mxu0 0
  %110 = vmatpush1.bf16.msra.mxu0 %v86
  %111 = vmatprep.subr.bf16.mxu0 0
  %112 = vmatpush1.bf16.msra.mxu0 0
  %113 = vmatprep.subr.bf16.mxu0 0
  %114 = vmatpush1.bf16.msra.mxu0 0
  %115 = vmatprep.subr.bf16.mxu0 0
  %116 = vmatpush1.bf16.msra.mxu0 0
  %117 = vmatprep.subr.bf16.mxu0 0
  %118 = vmatpush1.bf16.msra.mxu0 0
  %119 = vmatprep.subr.bf16.mxu0 0
  %120 = vmatpush1.bf16.msra.mxu0 0
  %121 = vmatprep.subr.bf16.mxu0 0
  %122 = vmatpush1.bf16.msra.mxu0 0
  %123 = vmatprep.subr.bf16.mxu0 0
  %124 = vmatpush1.bf16.msra.mxu0 0
  %125 = vmatprep.subr.bf16.mxu0 0
  %126 = vmatpush1.bf16.msra.mxu0 0
  %127 = vmatprep.mubr.bf16.mxu0 0
  %128 = vmatmul.mubr.bf16.gmra.mrb[0].mxu0 %v43
  %v129 = vpop.f32.mrb[0].mxu0
  %v130 = vadd.f32 0.0, %v129
  %v131 = vpop.f32.mrb[0].mxu0
  %v132 = vpop.f32.mrb[0].mxu0
  %v133 = vadd.f32 0.0, %v132
  %v134 = vpop.f32.mrb[0].mxu0
  %135 = vmatprep.mubr.bf16.mxu0 0
  %136 = vmatmul.mubr.bf16.gmra.mrb[0].mxu0 %v44
  %v137 = vpop.f32.mrb[0].mxu0
  %v138 = vadd.f32 0.0, %v137
  %v139 = vpop.f32.mrb[0].mxu0
  %v140 = vpop.f32.mrb[0].mxu0
  %v141 = vadd.f32 0.0, %v140
  %v142 = vpop.f32.mrb[0].mxu0
  %143 = vdwg.mxu0
  %144 = vst [vmem:[%s2] sm:$0xff] %v130
  %145 = vst [vmem:[%s2 + $0x8] sm:$0xff] %v133
  %146 = vst [vmem:[%s2 + $0x10] sm:$0xff] %v138
  %147 = vst [vmem:[%s2 + $0x18] sm:$0xff] %v141
  %p148 = scmp.eq.s32.totalorder 0, 0
  // Predicated region
  $region10: #{position_attention_forward.20} parent=0 // pred_check
    %p149 = pneg %p148
  $region11: #{position_attention_forward.20} parent=0 // pred_check_branch
    %151 = sbr.rel (%p149) target = $region13
  $region12: #{position_attention_forward.20} parent=0 // pred_region
    %152 = vst [vmem:[%s3] sm:$0x1] 0.0
    %153 = vst [vmem:[%s4] sm:$0x1] 0.0
  $region13: #{position_attention_forward.20} parent=0 // pred_fallthru
    _
  %v154 = vld [vmem:[%s3] sm:$0x1]
  %v155 = vadd.f32 %v130, %v133
  %v156 = vadd.f32 %v155, %v138
  %v157 = vadd.f32 %v156, %v141
  %v158 = vrot.slane %v157, 4
  %v159 = vadd.f32 %v157, %v158
  %v160 = vrot.slane %v159, 2
  %v161 = vadd.f32 %v159, %v160
  %v162 = vrot.slane %v161, 1
  %v163 = vadd.f32 %v161, %v162
  %v164 = vadd.f32 %v154, %v163
  %165 = vst [vmem:[%s3] sm:$0x1] %v164
  %v166 = vld [vmem:[%s4] sm:$0x1]
  %v167 = vmul.f32 %v130, %v130
  %v168 = vmul.f32 %v133, %v133
  %v169 = vmul.f32 %v138, %v138
  %v170 = vmul.f32 %v141, %v141
  %v171 = vadd.f32 %v167, %v168
  %v172 = vadd.f32 %v171, %v169
  %v173 = vadd.f32 %v172, %v170
  %v174 = vrot.slane %v173, 4
  %v175 = vadd.f32 %v173, %v174
  %v176 = vrot.slane %v175, 2
  %v177 = vadd.f32 %v175, %v176
  %v178 = vrot.slane %v177, 1
  %v179 = vadd.f32 %v177, %v178
  %v180 = vadd.f32 %v166, %v179
  %181 = vst [vmem:[%s4] sm:$0x1] %v180
  // Predicated region
  $region14: #{position_attention_forward.20} parent=0 // pred_check
    _
  $region15: #{position_attention_forward.20} parent=0 // pred_check_branch
    %183 = sbr.rel (0) target = $region17
  $region16: #{position_attention_forward.20} parent=0 // pred_region
    _
  $region17: #{position_attention_forward.20} parent=0 // pred_fallthru
    _
  // Predicated region
  $region18: #{position_attention_forward.20} parent=0 // pred_check
    _
  $region19: #{position_attention_forward.20} parent=0 // pred_check_branch
    %185 = sbr.rel (0) target = $region21
  $region20: #{position_attention_forward.20} parent=0 // pred_region
    _
  $region21: #{position_attention_forward.20} parent=0 // pred_fallthru
    _
  // Predicated region
  $region22: #{position_attention_forward.20} parent=0 // pred_check
    _
  $region23: #{position_attention_forward.20} parent=0 // pred_check_branch
    %187 = sbr.rel (0) target = $region25
  $region24: #{position_attention_forward.20} parent=0 // pred_region
    _
  $region25: #{position_attention_forward.20} parent=0 // pred_fallthru
    _
  // Predicated region
  $region26: #{position_attention_forward.20} parent=0 // pred_check
    _
  $region27: #{position_attention_forward.20} parent=0 // pred_check_branch
    %189 = sbr.rel (0) target = $region29
  $region28: #{position_attention_forward.20} parent=0 // pred_region
    _
  $region29: #{position_attention_forward.20} parent=0 // pred_fallthru
    _
  // Predicated region
  $region30: #{position_attention_forward.20} parent=0 // pred_check
    _
  $region31: #{position_attention_forward.20} parent=0 // pred_check_branch
    %191 = sbr.rel (0) target = $region33
  $region32: #{position_attention_forward.20} parent=0 // pred_region
    _
  $region33: #{position_attention_forward.20} parent=0 // pred_fallthru
    _
  // Predicated region
  $region34: #{position_attention_forward.20} parent=0 // pred_check
    _
  $region35: #{position_attention_forward.20} parent=0 // pred_check_branch
    %193 = sbr.rel (0) target = $region37
  $region36: #{position_attention_forward.20} parent=0 // pred_region
    _
  $region37: #{position_attention_forward.20} parent=0 // pred_fallthru
    _

// kernel: position_attention_forward.21
$region0: #{position_attention_forward.21}
  #allocation0 [shape = 'u32[]', space=smem, size = 0x4, offset = 0x4, fixed_abs, tag = 'smem constant byte address 0x4 - core index']
  #allocation1 [shape = 'u32[144,128]{1,0:T(1,128)}', space=vmem, size = 0x12000, scoped, tag = 'internal scratch']
  %s0 = inlined_call_operand.vmem [shape: f32[32,128], index: 0, kind: input, shape index: {}]
  %s1 = inlined_call_operand.vmem [shape: f32[1,128], index: 1, kind: input, shape index: {}]
  %s2 = inlined_call_operand.vmem [shape: f32[1,128], index: 2, kind: input, shape index: {}]
  %s3 = inlined_call_operand.vmem [shape: bf16[32,128], index: 3, kind: output, shape index: {}]
  %s4 = sld [smem:[#allocation0]]
  $region22: #{position_attention_forward.21} parent=0
    _
  %s6 = ssub.s32 1, %s4
  %s7 = scalar_select 0, %s6, %s4
  // Predicated region
  $region2: #{position_attention_forward.21} parent=0 // pred_check
    _
  $region3: #{position_attention_forward.21} parent=0 // pred_check_branch
    %9 = sbr.rel (0) target = $region5
  $region4: #{position_attention_forward.21} parent=0 // pred_region
    _
  $region5: #{position_attention_forward.21} parent=0 // pred_fallthru
    _
  // Predicated region
  $region6: #{position_attention_forward.21} parent=0 // pred_check
    _
  $region7: #{position_attention_forward.21} parent=0 // pred_check_branch
    %11 = sbr.rel (0) target = $region9
  $region8: #{position_attention_forward.21} parent=0 // pred_region
    _
  $region9: #{position_attention_forward.21} parent=0 // pred_fallthru
    _
  // Predicated region
  $region10: #{position_attention_forward.21} parent=0 // pred_check
    _
  $region11: #{position_attention_forward.21} parent=0 // pred_check_branch
    %13 = sbr.rel (0) target = $region13
  $region12: #{position_attention_forward.21} parent=0 // pred_region
    _
  $region13: #{position_attention_forward.21} parent=0 // pred_fallthru
    _
  %v14 = vld [vmem:[%s0] sm:$0xff]
  %v15 = vld [vmem:[%s0 + $0x8] sm:$0xff]
  %v16 = vld [vmem:[%s0 + $0x10] sm:$0xff]
  %v17 = vld [vmem:[%s0 + $0x18] sm:$0xff]
  %v18 = vld [vmem:[%s1] sm:$0x1]
  %v20 = vlaneseq
  %v21 = vshrl.u32 %v20, 7
  %v22 = vsub.s32 0, %v21
  %v23 = vrot.slane %v18, %v22
  %v25 = vmul.f32 %v14, %v23
  %v26 = vmul.f32 %v15, %v23
  %v27 = vmul.f32 %v16, %v23
  %v28 = vmul.f32 %v17, %v23
  %v29 = vld [vmem:[%s2] sm:$0x1]
  %v31 = vlaneseq
  %v32 = vshrl.u32 %v31, 7
  %v33 = vsub.s32 0, %v32
  %v34 = vrot.slane %v29, %v33
  %v36 = vadd.f32 %v25, %v34
  %v37 = vadd.f32 %v26, %v34
  %v38 = vadd.f32 %v27, %v34
  %v39 = vadd.f32 %v28, %v34
  %v40 = vmax.f32 %v36, 0.0
  %v41 = vmax.f32 %v37, 0.0
  %v42 = vmax.f32 %v38, 0.0
  %v43 = vmax.f32 %v39, 0.0
  %v44 = vpack.c.bf16 %v41, %v40
  %v45 = vpack.c.bf16 %v43, %v42
  %v48 = vunpack.c.l.b16 %v44
  %v49 = vunpack.c.h.b16 %v44
  %v50 = vunpack.c.l.b16 %v45
  %v51 = vunpack.c.h.b16 %v45
  %v52 = vpack.c.b16 %v48, %v48
  %v53 = vpack.c.b16 %v49, %v49
  %v54 = vpack.c.b16 %v50, %v50
  %v55 = vpack.c.b16 %v51, %v51
  %60 = vst [vmem:[%s3] sm:$0xf] %v52
  %61 = vst [vmem:[%s3 + $0x4] sm:$0xf] %v53
  %62 = vst [vmem:[%s3 + $0x8] sm:$0xf] %v54
  %63 = vst [vmem:[%s3 + $0xc] sm:$0xf] %v55
  // Predicated region
  $region14: #{position_attention_forward.21} parent=0 // pred_check
    _
  $region15: #{position_attention_forward.21} parent=0 // pred_check_branch
    %65 = sbr.rel (0) target = $region17
  $region16: #{position_attention_forward.21} parent=0 // pred_region
    _
  $region17: #{position_attention_forward.21} parent=0 // pred_fallthru
    _
  // Predicated region
  $region18: #{position_attention_forward.21} parent=0 // pred_check
    _
  $region19: #{position_attention_forward.21} parent=0 // pred_check_branch
    %67 = sbr.rel (0) target = $region21
  $region20: #{position_attention_forward.21} parent=0 // pred_region
    _
  $region21: #{position_attention_forward.21} parent=0 // pred_fallthru
    _

// kernel: position_attention_forward.23
$region0: #{position_attention_forward.23}
  #allocation0 [shape = 'u32[]', space=smem, size = 0x4, offset = 0x4, fixed_abs, tag = 'smem constant byte address 0x4 - core index']
  #allocation1 [shape = 'u32[144,128]{1,0:T(1,128)}', space=vmem, size = 0x12000, scoped, tag = 'internal scratch']
  %s0 = inlined_call_operand.vmem [shape: f32[8,128], index: 0, kind: input, shape index: {}]
  %s1 = inlined_call_operand.vmem [shape: f32[1,128], index: 1, kind: input, shape index: {}]
  %s2 = inlined_call_operand.vmem [shape: f32[1,128], index: 2, kind: input, shape index: {}]
  %s3 = inlined_call_operand.vmem [shape: bf16[8,128], index: 3, kind: output, shape index: {}]
  %s4 = sld [smem:[#allocation0]]
  $region22: #{position_attention_forward.23} parent=0
    _
  %s6 = ssub.s32 1, %s4
  %s7 = scalar_select 0, %s6, %s4
  // Predicated region
  $region2: #{position_attention_forward.23} parent=0 // pred_check
    _
  $region3: #{position_attention_forward.23} parent=0 // pred_check_branch
    %9 = sbr.rel (0) target = $region5
  $region4: #{position_attention_forward.23} parent=0 // pred_region
    _
  $region5: #{position_attention_forward.23} parent=0 // pred_fallthru
    _
  // Predicated region
  $region6: #{position_attention_forward.23} parent=0 // pred_check
    _
  $region7: #{position_attention_forward.23} parent=0 // pred_check_branch
    %11 = sbr.rel (0) target = $region9
  $region8: #{position_attention_forward.23} parent=0 // pred_region
    _
  $region9: #{position_attention_forward.23} parent=0 // pred_fallthru
    _
  // Predicated region
  $region10: #{position_attention_forward.23} parent=0 // pred_check
    _
  $region11: #{position_attention_forward.23} parent=0 // pred_check_branch
    %13 = sbr.rel (0) target = $region13
  $region12: #{position_attention_forward.23} parent=0 // pred_region
    _
  $region13: #{position_attention_forward.23} parent=0 // pred_fallthru
    _
  %v14 = vld [vmem:[%s0] sm:$0xff]
  %v15 = vld [vmem:[%s1] sm:$0x1]
  %v17 = vlaneseq
  %v18 = vshrl.u32 %v17, 7
  %v19 = vsub.s32 0, %v18
  %v20 = vrot.slane %v15, %v19
  %v22 = vmul.f32 %v14, %v20
  %v23 = vld [vmem:[%s2] sm:$0x1]
  %v25 = vlaneseq
  %v26 = vshrl.u32 %v25, 7
  %v27 = vsub.s32 0, %v26
  %v28 = vrot.slane %v23, %v27
  %v30 = vadd.f32 %v22, %v28
  %v31 = vmax.f32 %v30, 0.0
  %v32 = vpack.c.bf16 %v31, %v31
  %33 = vst [vmem:[%s3] sm:$0xf] %v32
  // Predicated region
  $region14: #{position_attention_forward.23} parent=0 // pred_check
    _
  $region15: #{position_attention_forward.23} parent=0 // pred_check_branch
    %35 = sbr.rel (0) target = $region17
  $region16: #{position_attention_forward.23} parent=0 // pred_region
    _
  $region17: #{position_attention_forward.23} parent=0 // pred_fallthru
    _
  // Predicated region
  $region18: #{position_attention_forward.23} parent=0 // pred_check
    _
  $region19: #{position_attention_forward.23} parent=0 // pred_check_branch
    %37 = sbr.rel (0) target = $region21
  $region20: #{position_attention_forward.23} parent=0 // pred_region
    _
  $region21: #{position_attention_forward.23} parent=0 // pred_fallthru
    _

// kernel: position_attention_forward.22
$region0: #{position_attention_forward.22}
  #allocation0 [shape = 'u32[]', space=smem, size = 0x4, offset = 0x4, fixed_abs, tag = 'smem constant byte address 0x4 - core index']
  #allocation1 [shape = 'u32[144,128]{1,0:T(1,128)}', space=vmem, size = 0x12000, scoped, tag = 'internal scratch']
  %s0 = inlined_call_operand.vmem [shape: bf16[8,128], index: 0, kind: input, shape index: {}]
  %s1 = inlined_call_operand.vmem [shape: bf16[128,128], index: 1, kind: input, shape index: {}]
  %s2 = inlined_call_operand.vmem [shape: f32[8,128], index: 2, kind: output, shape index: {0}]
  %s3 = inlined_call_operand.vmem [shape: f32[1,128], index: 3, kind: output, shape index: {1}]
  %s4 = inlined_call_operand.vmem [shape: f32[1,128], index: 4, kind: output, shape index: {2}]
  %5 = xla_tuple %s2, %s3, %s4
  %s6 = sld [smem:[#allocation0]]
  $region38: #{position_attention_forward.22} parent=0
    _
  %s8 = ssub.s32 1, %s6
  %s9 = scalar_select 0, %s8, %s6
  // Predicated region
  $region2: #{position_attention_forward.22} parent=0 // pred_check
    _
  $region3: #{position_attention_forward.22} parent=0 // pred_check_branch
    %11 = sbr.rel (0) target = $region5
  $region4: #{position_attention_forward.22} parent=0 // pred_region
    _
  $region5: #{position_attention_forward.22} parent=0 // pred_fallthru
    _
  // Predicated region
  $region6: #{position_attention_forward.22} parent=0 // pred_check
    _
  $region7: #{position_attention_forward.22} parent=0 // pred_check_branch
    %13 = sbr.rel (0) target = $region9
  $region8: #{position_attention_forward.22} parent=0 // pred_region
    _
  $region9: #{position_attention_forward.22} parent=0 // pred_fallthru
    _
  %v15 = vld [vmem:[%s0] sm:$0xf]
  %v16 = vld [vmem:[%s1] sm:$0xf]
  %v17 = vld [vmem:[%s1 + $0x4] sm:$0xf]
  %v18 = vld [vmem:[%s1 + $0x8] sm:$0xf]
  %v19 = vld [vmem:[%s1 + $0xc] sm:$0xf]
  %v20 = vld [vmem:[%s1 + $0x10] sm:$0xf]
  %v21 = vld [vmem:[%s1 + $0x14] sm:$0xf]
  %v22 = vld [vmem:[%s1 + $0x18] sm:$0xf]
  %v23 = vld [vmem:[%s1 + $0x1c] sm:$0xf]
  %v24 = vld [vmem:[%s1 + $0x20] sm:$0xf]
  %v25 = vld [vmem:[%s1 + $0x24] sm:$0xf]
  %v26 = vld [vmem:[%s1 + $0x28] sm:$0xf]
  %v27 = vld [vmem:[%s1 + $0x2c] sm:$0xf]
  %v28 = vld [vmem:[%s1 + $0x30] sm:$0xf]
  %v29 = vld [vmem:[%s1 + $0x34] sm:$0xf]
  %v30 = vld [vmem:[%s1 + $0x38] sm:$0xf]
  %v31 = vld [vmem:[%s1 + $0x3c] sm:$0xf]
  %v48 = vunpack.c.l.b16 %v16
  %v49 = vunpack.c.l.b16 %v17
  %v50 = vunpack.c.l.b16 %v18
  %v51 = vunpack.c.l.b16 %v19
  %v52 = vunpack.c.l.b16 %v20
  %v53 = vunpack.c.l.b16 %v21
  %v54 = vunpack.c.l.b16 %v22
  %v55 = vunpack.c.l.b16 %v23
  %v56 = vunpack.c.l.b16 %v24
  %v57 = vunpack.c.l.b16 %v25
  %v58 = vunpack.c.l.b16 %v26
  %v59 = vunpack.c.l.b16 %v27
  %v60 = vunpack.c.l.b16 %v28
  %v61 = vunpack.c.l.b16 %v29
  %v62 = vunpack.c.l.b16 %v30
  %v63 = vunpack.c.l.b16 %v31
  %v64 = vpack.c.b16 %v49, %v48
  %v65 = vpack.c.b16 %v51, %v50
  %v66 = vpack.c.b16 %v53, %v52
  %v67 = vpack.c.b16 %v55, %v54
  %v68 = vpack.c.b16 %v57, %v56
  %v69 = vpack.c.b16 %v59, %v58
  %v70 = vpack.c.b16 %v61, %v60
  %v71 = vpack.c.b16 %v63, %v62
  %80 = vmatprep.subr.bf16.mxu0 0
  %81 = vmatpush1.bf16.msra.mxu0 %v64
  %82 = vmatprep.subr.bf16.mxu0 0
  %83 = vmatpush1.bf16.msra.mxu0 %v65
  %84 = vmatprep.subr.bf16.mxu0 0
  %85 = vmatpush1.bf16.msra.mxu0 %v66
  %86 = vmatprep.subr.bf16.mxu0 0
  %87 = vmatpush1.bf16.msra.mxu0 %v67
  %88 = vmatprep.subr.bf16.mxu0 0
  %89 = vmatpush1.bf16.msra.mxu0 %v68
  %90 = vmatprep.subr.bf16.mxu0 0
  %91 = vmatpush1.bf16.msra.mxu0 %v69
  %92 = vmatprep.subr.bf16.mxu0 0
  %93 = vmatpush1.bf16.msra.mxu0 %v70
  %94 = vmatprep.subr.bf16.mxu0 0
  %95 = vmatpush1.bf16.msra.mxu0 %v71
  %96 = vmatprep.subr.bf16.mxu0 0
  %97 = vmatpush1.bf16.msra.mxu0 0
  %98 = vmatprep.subr.bf16.mxu0 0
  %99 = vmatpush1.bf16.msra.mxu0 0
  %100 = vmatprep.subr.bf16.mxu0 0
  %101 = vmatpush1.bf16.msra.mxu0 0
  %102 = vmatprep.subr.bf16.mxu0 0
  %103 = vmatpush1.bf16.msra.mxu0 0
  %104 = vmatprep.subr.bf16.mxu0 0
  %105 = vmatpush1.bf16.msra.mxu0 0
  %106 = vmatprep.subr.bf16.mxu0 0
  %107 = vmatpush1.bf16.msra.mxu0 0
  %108 = vmatprep.subr.bf16.mxu0 0
  %109 = vmatpush1.bf16.msra.mxu0 0
  %110 = vmatprep.subr.bf16.mxu0 0
  %111 = vmatpush1.bf16.msra.mxu0 0
  %112 = vmatprep.mubr.bf16.mxu0 0
  %113 = vmatmul.mubr.bf16.gmra.mrb[0].mxu0 %v15
  %v114 = vpop.f32.mrb[0].mxu0
  %v115 = vadd.f32 0.0, %v114
  %v116 = vpop.f32.mrb[0].mxu0
  %v117 = vpop.f32.mrb[0].mxu0
  %v118 = vpop.f32.mrb[0].mxu0
  %119 = vdwg.mxu0
  %120 = vst [vmem:[%s2] sm:$0xff] %v115
  %p121 = scmp.eq.s32.totalorder 0, 0
  // Predicated region
  $region10: #{position_attention_forward.22} parent=0 // pred_check
    %p122 = pneg %p121
  $region11: #{position_attention_forward.22} parent=0 // pred_check_branch
    %124 = sbr.rel (%p122) target = $region13
  $region12: #{position_attention_forward.22} parent=0 // pred_region
    %125 = vst [vmem:[%s3] sm:$0x1] 0.0
    %126 = vst [vmem:[%s4] sm:$0x1] 0.0
  $region13: #{position_attention_forward.22} parent=0 // pred_fallthru
    _
  %v127 = vld [vmem:[%s3] sm:$0x1]
  %v128 = vrot.slane %v115, 4
  %v129 = vadd.f32 %v115, %v128
  %v130 = vrot.slane %v129, 2
  %v131 = vadd.f32 %v129, %v130
  %v132 = vrot.slane %v131, 1
  %v133 = vadd.f32 %v131, %v132
  %v134 = vadd.f32 %v127, %v133
  %135 = vst [vmem:[%s3] sm:$0x1] %v134
  %v136 = vld [vmem:[%s4] sm:$0x1]
  %v137 = vmul.f32 %v115, %v115
  %v138 = vrot.slane %v137, 4
  %v139 = vadd.f32 %v137, %v138
  %v140 = vrot.slane %v139, 2
  %v141 = vadd.f32 %v139, %v140
  %v142 = vrot.slane %v141, 1
  %v143 = vadd.f32 %v141, %v142
  %v144 = vadd.f32 %v136, %v143
  %145 = vst [vmem:[%s4] sm:$0x1] %v144
  // Predicated region
  $region14: #{position_attention_forward.22} parent=0 // pred_check
    _
  $region15: #{position_attention_forward.22} parent=0 // pred_check_branch
    %147 = sbr.rel (0) target = $region17
  $region16: #{position_attention_forward.22} parent=0 // pred_region
    _
  $region17: #{position_attention_forward.22} parent=0 // pred_fallthru
    _
  // Predicated region
  $region18: #{position_attention_forward.22} parent=0 // pred_check
    _
  $region19: #{position_attention_forward.22} parent=0 // pred_check_branch
    %149 = sbr.rel (0) target = $region21
  $region20: #{position_attention_forward.22} parent=0 // pred_region
    _
  $region21: #{position_attention_forward.22} parent=0 // pred_fallthru
    _
  // Predicated region
  $region22: #{position_attention_forward.22} parent=0 // pred_check
    _
  $region23: #{position_attention_forward.22} parent=0 // pred_check_branch
    %151 = sbr.rel (0) target = $region25
  $region24: #{position_attention_forward.22} parent=0 // pred_region
    _
  $region25: #{position_attention_forward.22} parent=0 // pred_fallthru
    _
  // Predicated region
  $region26: #{position_attention_forward.22} parent=0 // pred_check
    _
  $region27: #{position_attention_forward.22} parent=0 // pred_check_branch
    %153 = sbr.rel (0) target = $region29
  $region28: #{position_attention_forward.22} parent=0 // pred_region
    _
  $region29: #{position_attention_forward.22} parent=0 // pred_fallthru
    _
  // Predicated region
  $region30: #{position_attention_forward.22} parent=0 // pred_check
    _
  $region31: #{position_attention_forward.22} parent=0 // pred_check_branch
    %155 = sbr.rel (0) target = $region33
  $region32: #{position_attention_forward.22} parent=0 // pred_region
    _
  $region33: #{position_attention_forward.22} parent=0 // pred_fallthru
    _
  // Predicated region
  $region34: #{position_attention_forward.22} parent=0 // pred_check
    _
  $region35: #{position_attention_forward.22} parent=0 // pred_check_branch
    %157 = sbr.rel (0) target = $region37
  $region36: #{position_attention_forward.22} parent=0 // pred_region
    _
  $region37: #{position_attention_forward.22} parent=0 // pred_fallthru
    _

// kernel: position_attention_forward.30
$region0: #{position_attention_forward.30}
  #allocation0 [shape = 'u32[]', space=smem, size = 0x4, offset = 0x4, fixed_abs, tag = 'smem constant byte address 0x4 - core index']
  #allocation1 [shape = 'u32[144,128]{1,0:T(1,128)}', space=vmem, size = 0x12000, scoped, tag = 'internal scratch']
  %s0 = inlined_call_operand.vmem [shape: bf16[128,128], index: 0, kind: input, shape index: {}]
  %s1 = inlined_call_operand.vmem [shape: bf16[128,128], index: 1, kind: input, shape index: {}]
  %s2 = inlined_call_operand.vmem [shape: f32[128,128], index: 2, kind: output, shape index: {0}]
  %s3 = inlined_call_operand.vmem [shape: f32[1,128], index: 3, kind: output, shape index: {1}]
  %s4 = inlined_call_operand.vmem [shape: f32[1,128], index: 4, kind: output, shape index: {2}]
  %5 = xla_tuple %s2, %s3, %s4
  %s6 = sld [smem:[#allocation0]]
  $region38: #{position_attention_forward.30} parent=0
    _
  %s8 = ssub.s32 1, %s6
  %s9 = scalar_select 0, %s8, %s6
  // Predicated region
  $region2: #{position_attention_forward.30} parent=0 // pred_check
    _
  $region3: #{position_attention_forward.30} parent=0 // pred_check_branch
    %11 = sbr.rel (0) target = $region5
  $region4: #{position_attention_forward.30} parent=0 // pred_region
    _
  $region5: #{position_attention_forward.30} parent=0 // pred_fallthru
    _
  // Predicated region
  $region6: #{position_attention_forward.30} parent=0 // pred_check
    _
  $region7: #{position_attention_forward.30} parent=0 // pred_check_branch
    %13 = sbr.rel (0) target = $region9
  $region8: #{position_attention_forward.30} parent=0 // pred_region
    _
  $region9: #{position_attention_forward.30} parent=0 // pred_fallthru
    _
  %v15 = vld [vmem:[%s0] sm:$0xf]
  %v16 = vld [vmem:[%s0 + $0x4] sm:$0xf]
  %v17 = vld [vmem:[%s0 + $0x8] sm:$0xf]
  %v18 = vld [vmem:[%s0 + $0xc] sm:$0xf]
  %v19 = vld [vmem:[%s0 + $0x10] sm:$0xf]
  %v20 = vld [vmem:[%s0 + $0x14] sm:$0xf]
  %v21 = vld [vmem:[%s0 + $0x18] sm:$0xf]
  %v22 = vld [vmem:[%s0 + $0x1c] sm:$0xf]
  %v23 = vld [vmem:[%s0 + $0x20] sm:$0xf]
  %v24 = vld [vmem:[%s0 + $0x24] sm:$0xf]
  %v25 = vld [vmem:[%s0 + $0x28] sm:$0xf]
  %v26 = vld [vmem:[%s0 + $0x2c] sm:$0xf]
  %v27 = vld [vmem:[%s0 + $0x30] sm:$0xf]
  %v28 = vld [vmem:[%s0 + $0x34] sm:$0xf]
  %v29 = vld [vmem:[%s0 + $0x38] sm:$0xf]
  %v30 = vld [vmem:[%s0 + $0x3c] sm:$0xf]
  %v31 = vld [vmem:[%s1] sm:$0xf]
  %v32 = vld [vmem:[%s1 + $0x4] sm:$0xf]
  %v33 = vld [vmem:[%s1 + $0x8] sm:$0xf]
  %v34 = vld [vmem:[%s1 + $0xc] sm:$0xf]
  %v35 = vld [vmem:[%s1 + $0x10] sm:$0xf]
  %v36 = vld [vmem:[%s1 + $0x14] sm:$0xf]
  %v37 = vld [vmem:[%s1 + $0x18] sm:$0xf]
  %v38 = vld [vmem:[%s1 + $0x1c] sm:$0xf]
  %v39 = vld [vmem:[%s1 + $0x20] sm:$0xf]
  %v40 = vld [vmem:[%s1 + $0x24] sm:$0xf]
  %v41 = vld [vmem:[%s1 + $0x28] sm:$0xf]
  %v42 = vld [vmem:[%s1 + $0x2c] sm:$0xf]
  %v43 = vld [vmem:[%s1 + $0x30] sm:$0xf]
  %v44 = vld [vmem:[%s1 + $0x34] sm:$0xf]
  %v45 = vld [vmem:[%s1 + $0x38] sm:$0xf]
  %v46 = vld [vmem:[%s1 + $0x3c] sm:$0xf]
  %v63 = vunpack.c.l.b16 %v15
  %v64 = vunpack.c.l.b16 %v16
  %v65 = vunpack.c.l.b16 %v17
  %v66 = vunpack.c.l.b16 %v18
  %v67 = vunpack.c.l.b16 %v19
  %v68 = vunpack.c.l.b16 %v20
  %v69 = vunpack.c.l.b16 %v21
  %v70 = vunpack.c.l.b16 %v22
  %v71 = vunpack.c.l.b16 %v23
  %v72 = vunpack.c.l.b16 %v24
  %v73 = vunpack.c.l.b16 %v25
  %v74 = vunpack.c.l.b16 %v26
  %v75 = vunpack.c.l.b16 %v27
  %v76 = vunpack.c.l.b16 %v28
  %v77 = vunpack.c.l.b16 %v29
  %v78 = vunpack.c.l.b16 %v30
  %v79 = vpack.c.b16 %v64, %v63
  %v80 = vpack.c.b16 %v66, %v65
  %v81 = vpack.c.b16 %v68, %v67
  %v82 = vpack.c.b16 %v70, %v69
  %v83 = vpack.c.b16 %v72, %v71
  %v84 = vpack.c.b16 %v74, %v73
  %v85 = vpack.c.b16 %v76, %v75
  %v86 = vpack.c.b16 %v78, %v77
  %v111 = vunpack.c.l.b16 %v31
  %v112 = vunpack.c.l.b16 %v32
  %v113 = vunpack.c.l.b16 %v33
  %v114 = vunpack.c.l.b16 %v34
  %v115 = vunpack.c.l.b16 %v35
  %v116 = vunpack.c.l.b16 %v36
  %v117 = vunpack.c.l.b16 %v37
  %v118 = vunpack.c.l.b16 %v38
  %v119 = vunpack.c.l.b16 %v39
  %v120 = vunpack.c.l.b16 %v40
  %v121 = vunpack.c.l.b16 %v41
  %v122 = vunpack.c.l.b16 %v42
  %v123 = vunpack.c.l.b16 %v43
  %v124 = vunpack.c.l.b16 %v44
  %v125 = vunpack.c.l.b16 %v45
  %v126 = vunpack.c.l.b16 %v46
  %v127 = vpack.c.b16 %v112, %v111
  %v128 = vpack.c.b16 %v114, %v113
  %v129 = vpack.c.b16 %v116, %v115
  %v130 = vpack.c.b16 %v118, %v117
  %v131 = vpack.c.b16 %v120, %v119
  %v132 = vpack.c.b16 %v122, %v121
  %v133 = vpack.c.b16 %v124, %v123
  %v134 = vpack.c.b16 %v126, %v125
  %143 = vmatprep.subr.bf16.mxu0 0
  %144 = vmatpush1.bf16.msra.mxu0 %v127
  %145 = vmatprep.subr.bf16.mxu0 0
  %146 = vmatpush1.bf16.msra.mxu0 %v128
  %147 = vmatprep.subr.bf16.mxu0 0
  %148 = vmatpush1.bf16.msra.mxu0 %v129
  %149 = vmatprep.subr.bf16.mxu0 0
  %150 = vmatpush1.bf16.msra.mxu0 %v130
  %151 = vmatprep.subr.bf16.mxu0 0
  %152 = vmatpush1.bf16.msra.mxu0 %v131
  %153 = vmatprep.subr.bf16.mxu0 0
  %154 = vmatpush1.bf16.msra.mxu0 %v132
  %155 = vmatprep.subr.bf16.mxu0 0
  %156 = vmatpush1.bf16.msra.mxu0 %v133
  %157 = vmatprep.subr.bf16.mxu0 0
  %158 = vmatpush1.bf16.msra.mxu0 %v134
  %159 = vmatprep.subr.bf16.mxu0 0
  %160 = vmatpush1.bf16.msra.mxu0 0
  %161 = vmatprep.subr.bf16.mxu0 0
  %162 = vmatpush1.bf16.msra.mxu0 0
  %163 = vmatprep.subr.bf16.mxu0 0
  %164 = vmatpush1.bf16.msra.mxu0 0
  %165 = vmatprep.subr.bf16.mxu0 0
  %166 = vmatpush1.bf16.msra.mxu0 0
  %167 = vmatprep.subr.bf16.mxu0 0
  %168 = vmatpush1.bf16.msra.mxu0 0
  %169 = vmatprep.subr.bf16.mxu0 0
  %170 = vmatpush1.bf16.msra.mxu0 0
  %171 = vmatprep.subr.bf16.mxu0 0
  %172 = vmatpush1.bf16.msra.mxu0 0
  %173 = vmatprep.subr.bf16.mxu0 0
  %174 = vmatpush1.bf16.msra.mxu0 0
  %175 = vmatprep.mubr.bf16.mxu0 0
  %176 = vmatmul.mubr.bf16.gmra.mrb[0].mxu0 %v79
  %v177 = vpop.f32.mrb[0].mxu0
  %v178 = vadd.f32 0.0, %v177
  %v179 = vpop.f32.mrb[0].mxu0
  %v180 = vpop.f32.mrb[0].mxu0
  %v181 = vadd.f32 0.0, %v180
  %v182 = vpop.f32.mrb[0].mxu0
  %183 = vmatprep.mubr.bf16.mxu0 0
  %184 = vmatmul.mubr.bf16.gmra.mrb[0].mxu0 %v80
  %v185 = vpop.f32.mrb[0].mxu0
  %v186 = vadd.f32 0.0, %v185
  %v187 = vpop.f32.mrb[0].mxu0
  %v188 = vpop.f32.mrb[0].mxu0
  %v189 = vadd.f32 0.0, %v188
  %v190 = vpop.f32.mrb[0].mxu0
  %191 = vmatprep.mubr.bf16.mxu0 0
  %192 = vmatmul.mubr.bf16.gmra.mrb[0].mxu0 %v81
  %v193 = vpop.f32.mrb[0].mxu0
  %v194 = vadd.f32 0.0, %v193
  %v195 = vpop.f32.mrb[0].mxu0
  %v196 = vpop.f32.mrb[0].mxu0
  %v197 = vadd.f32 0.0, %v196
  %v198 = vpop.f32.mrb[0].mxu0
  %199 = vmatprep.mubr.bf16.mxu0 0
  %200 = vmatmul.mubr.bf16.gmra.mrb[0].mxu0 %v82
  %v201 = vpop.f32.mrb[0].mxu0
  %v202 = vadd.f32 0.0, %v201
  %v203 = vpop.f32.mrb[0].mxu0
  %v204 = vpop.f32.mrb[0].mxu0
  %v205 = vadd.f32 0.0, %v204
  %v206 = vpop.f32.mrb[0].mxu0
  %207 = vmatprep.mubr.bf16.mxu0 0
  %208 = vmatmul.mubr.bf16.gmra.mrb[0].mxu0 %v83
  %v209 = vpop.f32.mrb[0].mxu0
  %v210 = vadd.f32 0.0, %v209
  %v211 = vpop.f32.mrb[0].mxu0
  %v212 = vpop.f32.mrb[0].mxu0
  %v213 = vadd.f32 0.0, %v212
  %v214 = vpop.f32.mrb[0].mxu0
  %215 = vmatprep.mubr.bf16.mxu0 0
  %216 = vmatmul.mubr.bf16.gmra.mrb[0].mxu0 %v84
  %v217 = vpop.f32.mrb[0].mxu0
  %v218 = vadd.f32 0.0, %v217
  %v219 = vpop.f32.mrb[0].mxu0
  %v220 = vpop.f32.mrb[0].mxu0
  %v221 = vadd.f32 0.0, %v220
  %v222 = vpop.f32.mrb[0].mxu0
  %223 = vmatprep.mubr.bf16.mxu0 0
  %224 = vmatmul.mubr.bf16.gmra.mrb[0].mxu0 %v85
  %v225 = vpop.f32.mrb[0].mxu0
  %v226 = vadd.f32 0.0, %v225
  %v227 = vpop.f32.mrb[0].mxu0
  %v228 = vpop.f32.mrb[0].mxu0
  %v229 = vadd.f32 0.0, %v228
  %v230 = vpop.f32.mrb[0].mxu0
  %231 = vmatprep.mubr.bf16.mxu0 0
  %232 = vmatmul.mubr.bf16.gmra.mrb[0].mxu0 %v86
  %v233 = vpop.f32.mrb[0].mxu0
  %v234 = vadd.f32 0.0, %v233
  %v235 = vpop.f32.mrb[0].mxu0
  %v236 = vpop.f32.mrb[0].mxu0
  %v237 = vadd.f32 0.0, %v236
  %v238 = vpop.f32.mrb[0].mxu0
  %239 = vdwg.mxu0
  %240 = vst [vmem:[%s2] sm:$0xff] %v178
  %241 = vst [vmem:[%s2 + $0x8] sm:$0xff] %v181
  %242 = vst [vmem:[%s2 + $0x10] sm:$0xff] %v186
  %243 = vst [vmem:[%s2 + $0x18] sm:$0xff] %v189
  %244 = vst [vmem:[%s2 + $0x20] sm:$0xff] %v194
  %245 = vst [vmem:[%s2 + $0x28] sm:$0xff] %v197
  %246 = vst [vmem:[%s2 + $0x30] sm:$0xff] %v202
  %247 = vst [vmem:[%s2 + $0x38] sm:$0xff] %v205
  %248 = vst [vmem:[%s2 + $0x40] sm:$0xff] %v210
  %249 = vst [vmem:[%s2 + $0x48] sm:$0xff] %v213
  %250 = vst [vmem:[%s2 + $0x50] sm:$0xff] %v218
  %251 = vst [vmem:[%s2 + $0x58] sm:$0xff] %v221
  %252 = vst [vmem:[%s2 + $0x60] sm:$0xff] %v226
  %253 = vst [vmem:[%s2 + $0x68] sm:$0xff] %v229
  %254 = vst [vmem:[%s2 + $0x70] sm:$0xff] %v234
  %255 = vst [vmem:[%s2 + $0x78] sm:$0xff] %v237
  %p256 = scmp.eq.s32.totalorder 0, 0
  // Predicated region
  $region10: #{position_attention_forward.30} parent=0 // pred_check
    %p257 = pneg %p256
  $region11: #{position_attention_forward.30} parent=0 // pred_check_branch
    %259 = sbr.rel (%p257) target = $region13
  $region12: #{position_attention_forward.30} parent=0 // pred_region
    %260 = vst [vmem:[%s3] sm:$0x1] 0.0
    %261 = vst [vmem:[%s4] sm:$0x1] 0.0
  $region13: #{position_attention_forward.30} parent=0 // pred_fallthru
    _
  %v262 = vld [vmem:[%s3] sm:$0x1]
  %v263 = vadd.f32 %v178, %v181
  %v264 = vadd.f32 %v263, %v186
  %v265 = vadd.f32 %v264, %v189
  %v266 = vadd.f32 %v265, %v194
  %v267 = vadd.f32 %v266, %v197
  %v268 = vadd.f32 %v267, %v202
  %v269 = vadd.f32 %v268, %v205
  %v270 = vadd.f32 %v269, %v210
  %v271 = vadd.f32 %v270, %v213
  %v272 = vadd.f32 %v271, %v218
  %v273 = vadd.f32 %v272, %v221
  %v274 = vadd.f32 %v273, %v226
  %v275 = vadd.f32 %v274, %v229
  %v276 = vadd.f32 %v275, %v234
  %v277 = vadd.f32 %v276, %v237
  %v278 = vrot.slane %v277, 4
  %v279 = vadd.f32 %v277, %v278
  %v280 = vrot.slane %v279, 2
  %v281 = vadd.f32 %v279, %v280
  %v282 = vrot.slane %v281, 1
  %v283 = vadd.f32 %v281, %v282
  %v284 = vadd.f32 %v262, %v283
  %285 = vst [vmem:[%s3] sm:$0x1] %v284
  %v286 = vld [vmem:[%s4] sm:$0x1]
  %v287 = vmul.f32 %v178, %v178
  %v288 = vmul.f32 %v181, %v181
  %v289 = vmul.f32 %v186, %v186
  %v290 = vmul.f32 %v189, %v189
  %v291 = vmul.f32 %v194, %v194
  %v292 = vmul.f32 %v197, %v197
  %v293 = vmul.f32 %v202, %v202
  %v294 = vmul.f32 %v205, %v205
  %v295 = vmul.f32 %v210, %v210
  %v296 = vmul.f32 %v213, %v213
  %v297 = vmul.f32 %v218, %v218
  %v298 = vmul.f32 %v221, %v221
  %v299 = vmul.f32 %v226, %v226
  %v300 = vmul.f32 %v229, %v229
  %v301 = vmul.f32 %v234, %v234
  %v302 = vmul.f32 %v237, %v237
  %v303 = vadd.f32 %v287, %v288
  %v304 = vadd.f32 %v303, %v289
  %v305 = vadd.f32 %v304, %v290
  %v306 = vadd.f32 %v305, %v291
  %v307 = vadd.f32 %v306, %v292
  %v308 = vadd.f32 %v307, %v293
  %v309 = vadd.f32 %v308, %v294
  %v310 = vadd.f32 %v309, %v295
  %v311 = vadd.f32 %v310, %v296
  %v312 = vadd.f32 %v311, %v297
  %v313 = vadd.f32 %v312, %v298
  %v314 = vadd.f32 %v313, %v299
  %v315 = vadd.f32 %v314, %v300
  %v316 = vadd.f32 %v315, %v301
  %v317 = vadd.f32 %v316, %v302
  %v318 = vrot.slane %v317, 4
  %v319 = vadd.f32 %v317, %v318
  %v320 = vrot.slane %v319, 2
  %v321 = vadd.f32 %v319, %v320
  %v322 = vrot.slane %v321, 1
  %v323 = vadd.f32 %v321, %v322
  %v324 = vadd.f32 %v286, %v323
  %325 = vst [vmem:[%s4] sm:$0x1] %v324
  // Predicated region
  $region14: #{position_attention_forward.30} parent=0 // pred_check
    _
  $region15: #{position_attention_forward.30} parent=0 // pred_check_branch
    %327 = sbr.rel (0) target = $region17
  $region16: #{position_attention_forward.30} parent=0 // pred_region
    _
  $region17: #{position_attention_forward.30} parent=0 // pred_fallthru
    _
  // Predicated region
  $region18: #{position_attention_forward.30} parent=0 // pred_check
    _
  $region19: #{position_attention_forward.30} parent=0 // pred_check_branch
    %329 = sbr.rel (0) target = $region21
  $region20: #{position_attention_forward.30} parent=0 // pred_region
    _
  $region21: #{position_attention_forward.30} parent=0 // pred_fallthru
    _
  // Predicated region
  $region22: #{position_attention_forward.30} parent=0 // pred_check
    _
  $region23: #{position_attention_forward.30} parent=0 // pred_check_branch
    %331 = sbr.rel (0) target = $region25
  $region24: #{position_attention_forward.30} parent=0 // pred_region
    _
  $region25: #{position_attention_forward.30} parent=0 // pred_fallthru
    _
  // Predicated region
  $region26: #{position_attention_forward.30} parent=0 // pred_check
    _
  $region27: #{position_attention_forward.30} parent=0 // pred_check_branch
    %333 = sbr.rel (0) target = $region29
  $region28: #{position_attention_forward.30} parent=0 // pred_region
    _
  $region29: #{position_attention_forward.30} parent=0 // pred_fallthru
    _
  // Predicated region
  $region30: #{position_attention_forward.30} parent=0 // pred_check
    _
  $region31: #{position_attention_forward.30} parent=0 // pred_check_branch
    %335 = sbr.rel (0) target = $region33
  $region32: #{position_attention_forward.30} parent=0 // pred_region
    _
  $region33: #{position_attention_forward.30} parent=0 // pred_fallthru
    _
  // Predicated region
  $region34: #{position_attention_forward.30} parent=0 // pred_check
    _
  $region35: #{position_attention_forward.30} parent=0 // pred_check_branch
    %337 = sbr.rel (0) target = $region37
  $region36: #{position_attention_forward.30} parent=0 // pred_region
    _
  $region37: #{position_attention_forward.30} parent=0 // pred_fallthru
    _

// kernel: position_attention_forward.33
$region0: #{position_attention_forward.33}
  #allocation0 [shape = 'u32[]', space=smem, size = 0x4, offset = 0x4, fixed_abs, tag = 'smem constant byte address 0x4 - core index']
  #allocation1 [shape = 'u32[144,128]{1,0:T(1,128)}', space=vmem, size = 0x12000, scoped, tag = 'internal scratch']
  %s0 = inlined_call_operand.vmem [shape: f32[256,128], index: 0, kind: input, shape index: {}]
  %s1 = inlined_call_operand.vmem [shape: f32[1,128], index: 1, kind: input, shape index: {}]
  %s2 = inlined_call_operand.vmem [shape: f32[1,128], index: 2, kind: input, shape index: {}]
  %s3 = inlined_call_operand.vmem [shape: bf16[256,128], index: 3, kind: output, shape index: {}]
  %s4 = sld [smem:[#allocation0]]
  $region45: #{position_attention_forward.33} parent=0
    _
  %s6 = ssub.s32 1, %s4
  %s7 = scalar_select 0, %s6, %s4
  loop: start=0, step=1, limit=4
  $region2: #{position_attention_forward.33} parent=0 // loop_pre_header
    _
  $region3: #{position_attention_forward.33} parent=0 // loop_header
    %s9 = sphi 0, %s13
    %p10 = scmp.ge.s32.totalorder %s9, 4
    %s19 = sphi 0, %s21
    %s22 = sphi 0, %s19
    %s23 = sphi 0, %s22
    %s39 = sphi 0, %s23
    %s43 = sphi 0, %s43
    %s45 = sphi 0, %s43
    %s46 = sphi 0, %s45
    %s60 = sphi 0, %s46
    %s64 = sphi 0, %s64
    %s66 = sphi 0, %s64
    %s67 = sphi 0, %s66
    %s81 = sphi 0, %s67
    %s87 = sphi 0, %s89
    %s90 = sphi 0, %s87
    %s91 = sphi 0, %s90
    %s107 = sphi 0, %s91
  $region4: #{position_attention_forward.33} parent=0 // loop_header_branch
    %12 = sbr.rel (%p10) target = $region8
  $region5: #{position_attention_forward.33} parent=0 // loop_body
    %s14 = ssub.s32 %s9, 1
    %s15 = ssub.s32 %s9, 2
    %s16 = sadd.s32 %s9, 1
    %s17 = ssub.s32 %s9, %s16
    %p18 = scmp.eq.s32.totalorder %s17, 0
    %s20 = sadd.s32 %s19, 1
    %s21 = scalar_select %p18, %s19, %s20
    %p24 = pneg %p18
    %p25 = scmp.eq.s32.totalorder %s9, 1
    %p26 = por %p24, %p25
    %p27 = scmp.ne.s32.totalorder %s19, %s22
    %p28 = scmp.eq.s32.totalorder %s9, 0
    %p29 = por %p27, %p28
    %p30 = scmp.ne.s32.totalorder %s19, %s22
    %p31 = scmp.eq.s32.totalorder %s14, 1
    %p32 = por %p30, %p31
    %p33 = scmp.ne.s32.totalorder %s22, %s23
    %p34 = scmp.eq.s32.totalorder %s14, 0
    %p35 = por %p33, %p34
    %p36 = scmp.ne.s32.totalorder %s22, %s23
    %p37 = scmp.eq.s32.totalorder %s15, 1
    %p38 = por %p36, %p37
    %p40 = scmp.ne.s32.totalorder %s23, %s39
    %p41 = scmp.eq.s32.totalorder %s15, 0
    %p42 = por %p40, %p41
    %s44 = sadd.s32 %s43, 1
    %p47 = scmp.eq.s32.totalorder %s9, 1
    %p48 = scmp.ne.s32.totalorder %s43, %s45
    %p49 = scmp.eq.s32.totalorder %s9, 0
    %p50 = por %p48, %p49
    %p51 = scmp.ne.s32.totalorder %s43, %s45
    %p52 = scmp.eq.s32.totalorder %s14, 1
    %p53 = por %p51, %p52
    %p54 = scmp.ne.s32.totalorder %s45, %s46
    %p55 = scmp.eq.s32.totalorder %s14, 0
    %p56 = por %p54, %p55
    %p57 = scmp.ne.s32.totalorder %s45, %s46
    %p58 = scmp.eq.s32.totalorder %s15, 1
    %p59 = por %p57, %p58
    %p61 = scmp.ne.s32.totalorder %s46, %s60
    %p62 = scmp.eq.s32.totalorder %s15, 0
    %p63 = por %p61, %p62
    %s65 = sadd.s32 %s64, 1
    %p68 = scmp.eq.s32.totalorder %s9, 1
    %p69 = scmp.ne.s32.totalorder %s64, %s66
    %p70 = scmp.eq.s32.totalorder %s9, 0
    %p71 = por %p69, %p70
    %p72 = scmp.ne.s32.totalorder %s64, %s66
    %p73 = scmp.eq.s32.totalorder %s14, 1
    %p74 = por %p72, %p73
    %p75 = scmp.ne.s32.totalorder %s66, %s67
    %p76 = scmp.eq.s32.totalorder %s14, 0
    %p77 = por %p75, %p76
    %p78 = scmp.ne.s32.totalorder %s66, %s67
    %p79 = scmp.eq.s32.totalorder %s15, 1
    %p80 = por %p78, %p79
    %p82 = scmp.ne.s32.totalorder %s67, %s81
    %p83 = scmp.eq.s32.totalorder %s15, 0
    %p84 = por %p82, %p83
    %s85 = ssub.s32 %s9, %s16
    %p86 = scmp.eq.s32.totalorder %s85, 0
    %s88 = sadd.s32 %s87, 1
    %s89 = scalar_select %p86, %s87, %s88
    %p92 = pneg %p86
    %p93 = scmp.eq.s32.totalorder %s9, 1
    %p94 = por %p92, %p93
    %p95 = scmp.ne.s32.totalorder %s87, %s90
    %p96 = scmp.eq.s32.totalorder %s9, 0
    %p97 = por %p95, %p96
    %p98 = scmp.ne.s32.totalorder %s87, %s90
    %p99 = scmp.eq.s32.totalorder %s14, 1
    %p100 = por %p98, %p99
    %p101 = scmp.ne.s32.totalorder %s90, %s91
    %p102 = scmp.eq.s32.totalorder %s14, 0
    %p103 = por %p101, %p102
    %p104 = scmp.ne.s32.totalorder %s90, %s91
    %p105 = scmp.eq.s32.totalorder %s15, 1
    %p106 = por %p104, %p105
    %p108 = scmp.ne.s32.totalorder %s91, %s107
    %p109 = scmp.eq.s32.totalorder %s15, 0
    %p110 = por %p108, %p109
    %p111 = scmp.le.s32.totalorder 1, %s9
    %p112 = scmp.lt.s32.totalorder %s9, 3
    %p113 = pnand %p111, %p112
    %p114 = pneg %p113
    // Predicated region
    $region9: #{position_attention_forward.33} parent=5 // pred_check
      _
    $region10: #{position_attention_forward.33} parent=5 // pred_check_branch
      %116 = sbr.rel (%p113) target = $region12
    $region11: #{position_attention_forward.33} parent=5 // pred_region
      %s117 = ssub.s32 %s9, 1
      // Predicated region
      $region13: #{position_attention_forward.33} parent=11 // pred_check
        %p118 = pneg %p56
      $region14: #{position_attention_forward.33} parent=11 // pred_check_branch
        %120 = sbr.rel (%p118) target = $region16
      $region15: #{position_attention_forward.33} parent=11 // pred_region
        _
      $region16: #{position_attention_forward.33} parent=11 // pred_fallthru
        _
      // Predicated region
      $region17: #{position_attention_forward.33} parent=11 // pred_check
        %p121 = pneg %p77
      $region18: #{position_attention_forward.33} parent=11 // pred_check_branch
        %123 = sbr.rel (%p121) target = $region20
      $region19: #{position_attention_forward.33} parent=11 // pred_region
        _
      $region20: #{position_attention_forward.33} parent=11 // pred_fallthru
        _
    $region12: #{position_attention_forward.33} parent=5 // pred_fallthru
      _
    %p124 = scmp.lt.s32.totalorder %s9, 2
    // Predicated region
    $region21: #{position_attention_forward.33} parent=5 // pred_check
      %p125 = pneg %p124
    $region22: #{position_attention_forward.33} parent=5 // pred_check_branch
      %127 = sbr.rel (%p125) target = $region24
    $region23: #{position_attention_forward.33} parent=5 // pred_region
      // Predicated region
      $region25: #{position_attention_forward.33} parent=23 // pred_check
        %p128 = pneg %p29
      $region26: #{position_attention_forward.33} parent=23 // pred_check_branch
        %130 = sbr.rel (%p128) target = $region28
      $region27: #{position_attention_forward.33} parent=23 // pred_region
        %s131 = smul.u32 16, %s9
        %p132 = scmp.lt.s32.totalorder %s131, 31
        %s133 = scalar_select %p132, %s131, 31
        %s134 = smul.addr %s133, 8
        %s135 = scalar_lea.vmem %s0, %s134
        %s136 = smul.u32 16, %s9
      $region28: #{position_attention_forward.33} parent=23 // pred_fallthru
        _
    $region24: #{position_attention_forward.33} parent=5 // pred_fallthru
      _
    %p137 = scmp.le.s32.totalorder 1, %s9
    %p138 = scmp.lt.s32.totalorder %s9, 3
    %p139 = pnand %p137, %p138
    %p140 = pneg %p139
    // Predicated region
    $region29: #{position_attention_forward.33} parent=5 // pred_check
      _
    $region30: #{position_attention_forward.33} parent=5 // pred_check_branch
      %142 = sbr.rel (%p139) target = $region32
    $region31: #{position_attention_forward.33} parent=5 // pred_region
      %s143 = ssub.s32 %s9, 1
      %s144 = smul.u32 16, %s14
      %p145 = scmp.lt.s32.totalorder %s144, 31
      %s146 = scalar_select %p145, %s144, 31
      %s147 = smul.addr %s146, 8
      %s148 = scalar_lea.vmem %s0, %s147
      %p149 = pneg %p35
      %p150 = pneg %p32
      %p151 = pneg %p56
      %p152 = pneg %p53
      %p153 = pneg %p77
      %p154 = pneg %p74
      %p155 = pneg %p103
      %p156 = pneg %p100
      %s157 = smul.u32 16, %s14
      %p158 = scmp.lt.s32.totalorder %s157, 31
      %s159 = scalar_select %p158, %s157, 31
      %s160 = smul.addr %s159, 4
      %s161 = scalar_lea.vmem %s3, %s160
      %s162 = smul.u32 16, %s14
      %p163 = scmp.lt.s32.totalorder %s162, 31
      %s164 = scalar_select %p163, %s162, 31
      %s165 = smul.addr %s164, 8
      %s166 = scalar_lea.vmem %s0, %s165
      %s167 = smul.u32 16, %s14
      %s168 = smul.u32 16, %s14
      %p169 = scmp.lt.s32.totalorder %s168, 31
      %s170 = scalar_select %p169, %s168, 31
      %s171 = smul.addr %s170, 4
      %s172 = scalar_lea.vmem %s3, %s171
      %s173 = smul.u32 16, %s14
      %v174 = vld [vmem:[%s166] sm:$0xff]
      %v175 = vld [vmem:[%s166 + $0x8] sm:$0xff]
      %v176 = vld [vmem:[%s166 + $0x10] sm:$0xff]
      %v177 = vld [vmem:[%s166 + $0x18] sm:$0xff]
      %v178 = vld [vmem:[%s166 + $0x20] sm:$0xff]
      %v179 = vld [vmem:[%s166 + $0x28] sm:$0xff]
      %v180 = vld [vmem:[%s166 + $0x30] sm:$0xff]
      %v181 = vld [vmem:[%s166 + $0x38] sm:$0xff]
      %v182 = vld [vmem:[%s166 + $0x40] sm:$0xff]
      %v183 = vld [vmem:[%s166 + $0x48] sm:$0xff]
      %v184 = vld [vmem:[%s166 + $0x50] sm:$0xff]
      %v185 = vld [vmem:[%s166 + $0x58] sm:$0xff]
      %v186 = vld [vmem:[%s166 + $0x60] sm:$0xff]
      %v187 = vld [vmem:[%s166 + $0x68] sm:$0xff]
      %v188 = vld [vmem:[%s166 + $0x70] sm:$0xff]
      %v189 = vld [vmem:[%s166 + $0x78] sm:$0xff]
      %v190 = vld [vmem:[%s1] sm:$0x1]
      %v192 = vlaneseq
      %v193 = vshrl.u32 %v192, 7
      %v194 = vsub.s32 0, %v193
      %v195 = vrot.slane %v190, %v194
      %v197 = vmul.f32 %v174, %v195
      %v198 = vmul.f32 %v175, %v195
      %v199 = vmul.f32 %v176, %v195
      %v200 = vmul.f32 %v177, %v195
      %v201 = vmul.f32 %v178, %v195
      %v202 = vmul.f32 %v179, %v195
      %v203 = vmul.f32 %v180, %v195
      %v204 = vmul.f32 %v181, %v195
      %v205 = vmul.f32 %v182, %v195
      %v206 = vmul.f32 %v183, %v195
      %v207 = vmul.f32 %v184, %v195
      %v208 = vmul.f32 %v185, %v195
      %v209 = vmul.f32 %v186, %v195
      %v210 = vmul.f32 %v187, %v195
      %v211 = vmul.f32 %v188, %v195
      %v212 = vmul.f32 %v189, %v195
      %v213 = vld [vmem:[%s2] sm:$0x1]
      %v215 = vlaneseq
      %v216 = vshrl.u32 %v215, 7
      %v217 = vsub.s32 0, %v216
      %v218 = vrot.slane %v213, %v217
      %v220 = vadd.f32 %v197, %v218
      %v221 = vadd.f32 %v198, %v218
      %v222 = vadd.f32 %v199, %v218
      %v223 = vadd.f32 %v200, %v218
      %v224 = vadd.f32 %v201, %v218
      %v225 = vadd.f32 %v202, %v218
      %v226 = vadd.f32 %v203, %v218
      %v227 = vadd.f32 %v204, %v218
      %v228 = vadd.f32 %v205, %v218
      %v229 = vadd.f32 %v206, %v218
      %v230 = vadd.f32 %v207, %v218
      %v231 = vadd.f32 %v208, %v218
      %v232 = vadd.f32 %v209, %v218
      %v233 = vadd.f32 %v210, %v218
      %v234 = vadd.f32 %v211, %v218
      %v235 = vadd.f32 %v212, %v218
      %v236 = vmax.f32 %v220, 0.0
      %v237 = vmax.f32 %v221, 0.0
      %v238 = vmax.f32 %v222, 0.0
      %v239 = vmax.f32 %v223, 0.0
      %v240 = vmax.f32 %v224, 0.0
      %v241 = vmax.f32 %v225, 0.0
      %v242 = vmax.f32 %v226, 0.0
      %v243 = vmax.f32 %v227, 0.0
      %v244 = vmax.f32 %v228, 0.0
      %v245 = vmax.f32 %v229, 0.0
      %v246 = vmax.f32 %v230, 0.0
      %v247 = vmax.f32 %v231, 0.0
      %v248 = vmax.f32 %v232, 0.0
      %v249 = vmax.f32 %v233, 0.0
      %v250 = vmax.f32 %v234, 0.0
      %v251 = vmax.f32 %v235, 0.0
      %v252 = vpack.c.bf16 %v237, %v236
      %v253 = vpack.c.bf16 %v239, %v238
      %v254 = vpack.c.bf16 %v241, %v240
      %v255 = vpack.c.bf16 %v243, %v242
      %v256 = vpack.c.bf16 %v245, %v244
      %v257 = vpack.c.bf16 %v247, %v246
      %v258 = vpack.c.bf16 %v249, %v248
      %v259 = vpack.c.bf16 %v251, %v250
      %v268 = vunpack.c.l.b16 %v252
      %v269 = vunpack.c.h.b16 %v252
      %v270 = vunpack.c.l.b16 %v253
      %v271 = vunpack.c.h.b16 %v253
      %v272 = vunpack.c.l.b16 %v254
      %v273 = vunpack.c.h.b16 %v254
      %v274 = vunpack.c.l.b16 %v255
      %v275 = vunpack.c.h.b16 %v255
      %v276 = vunpack.c.l.b16 %v256
      %v277 = vunpack.c.h.b16 %v256
      %v278 = vunpack.c.l.b16 %v257
      %v279 = vunpack.c.h.b16 %v257
      %v280 = vunpack.c.l.b16 %v258
      %v281 = vunpack.c.h.b16 %v258
      %v282 = vunpack.c.l.b16 %v259
      %v283 = vunpack.c.h.b16 %v259
      %v284 = vpack.c.b16 %v268, %v268
      %v285 = vpack.c.b16 %v269, %v269
      %v286 = vpack.c.b16 %v270, %v270
      %v287 = vpack.c.b16 %v271, %v271
      %v288 = vpack.c.b16 %v272, %v272
      %v289 = vpack.c.b16 %v273, %v273
      %v290 = vpack.c.b16 %v274, %v274
      %v291 = vpack.c.b16 %v275, %v275
      %v292 = vpack.c.b16 %v276, %v276
      %v293 = vpack.c.b16 %v277, %v277
      %v294 = vpack.c.b16 %v278, %v278
      %v295 = vpack.c.b16 %v279, %v279
      %v296 = vpack.c.b16 %v280, %v280
      %v297 = vpack.c.b16 %v281, %v281
      %v298 = vpack.c.b16 %v282, %v282
      %v299 = vpack.c.b16 %v283, %v283
      %316 = vst [vmem:[%s172] sm:$0xf] %v284
      %317 = vst [vmem:[%s172 + $0x4] sm:$0xf] %v285
      %318 = vst [vmem:[%s172 + $0x8] sm:$0xf] %v286
      %319 = vst [vmem:[%s172 + $0xc] sm:$0xf] %v287
      %320 = vst [vmem:[%s172 + $0x10] sm:$0xf] %v288
      %321 = vst [vmem:[%s172 + $0x14] sm:$0xf] %v289
      %322 = vst [vmem:[%s172 + $0x18] sm:$0xf] %v290
      %323 = vst [vmem:[%s172 + $0x1c] sm:$0xf] %v291
      %324 = vst [vmem:[%s172 + $0x20] sm:$0xf] %v292
      %325 = vst [vmem:[%s172 + $0x24] sm:$0xf] %v293
      %326 = vst [vmem:[%s172 + $0x28] sm:$0xf] %v294
      %327 = vst [vmem:[%s172 + $0x2c] sm:$0xf] %v295
      %328 = vst [vmem:[%s172 + $0x30] sm:$0xf] %v296
      %329 = vst [vmem:[%s172 + $0x34] sm:$0xf] %v297
      %330 = vst [vmem:[%s172 + $0x38] sm:$0xf] %v298
      %331 = vst [vmem:[%s172 + $0x3c] sm:$0xf] %v299
      %s332 = smul.u32 16, %s14
      %p333 = scmp.lt.s32.totalorder %s332, 31
      %s334 = scalar_select %p333, %s332, 31
      %s335 = smul.addr %s334, 4
      %s336 = scalar_lea.vmem %s3, %s335
      // Predicated region
      $region33: #{position_attention_forward.33} parent=31 // pred_check
        %p337 = pneg %p100
      $region34: #{position_attention_forward.33} parent=31 // pred_check_branch
        %339 = sbr.rel (%p337) target = $region36
      $region35: #{position_attention_forward.33} parent=31 // pred_region
        %s340 = smul.u32 16, %s14
      $region36: #{position_attention_forward.33} parent=31 // pred_fallthru
        _
    $region32: #{position_attention_forward.33} parent=5 // pred_fallthru
      _
    %p341 = scmp.le.s32.totalorder 2, %s9
    // Predicated region
    $region37: #{position_attention_forward.33} parent=5 // pred_check
      %p342 = pneg %p341
    $region38: #{position_attention_forward.33} parent=5 // pred_check_branch
      %344 = sbr.rel (%p342) target = $region40
    $region39: #{position_attention_forward.33} parent=5 // pred_region
      %s345 = ssub.s32 %s9, 2
      // Predicated region
      $region41: #{position_attention_forward.33} parent=39 // pred_check
        %p346 = pneg %p106
      $region42: #{position_attention_forward.33} parent=39 // pred_check_branch
        %348 = sbr.rel (%p346) target = $region44
      $region43: #{position_attention_forward.33} parent=39 // pred_region
        %s349 = smul.u32 16, %s15
        %p350 = scmp.lt.s32.totalorder %s349, 31
        %s351 = scalar_select %p350, %s349, 31
        %s352 = smul.addr %s351, 4
        %s353 = scalar_lea.vmem %s3, %s352
      $region44: #{position_attention_forward.33} parent=39 // pred_fallthru
        _
    $region40: #{position_attention_forward.33} parent=5 // pred_fallthru
      _
  $region6: #{position_attention_forward.33} parent=0 // loop_footer
    %s13 = sadd.s32 1, %s9
  $region7: #{position_attention_forward.33} parent=0 // loop_footer_branch
    %8 = sbr.rel target = $region3
  $region8: #{position_attention_forward.33} parent=0 // loop_exit
    _

// kernel: position_attention_forward.32
$region0: #{position_attention_forward.32}
  #allocation0 [shape = 'u32[]', space=smem, size = 0x4, offset = 0x4, fixed_abs, tag = 'smem constant byte address 0x4 - core index']
  #allocation1 [shape = 'u32[144,128]{1,0:T(1,128)}', space=vmem, size = 0x12000, scoped, tag = 'internal scratch']
  %s0 = inlined_call_operand.vmem [shape: bf16[256,128], index: 0, kind: input, shape index: {}]
  %s1 = inlined_call_operand.vmem [shape: bf16[128,128], index: 1, kind: input, shape index: {}]
  %s2 = inlined_call_operand.vmem [shape: f32[256,128], index: 2, kind: output, shape index: {0}]
  %s3 = inlined_call_operand.vmem [shape: f32[1,128], index: 3, kind: output, shape index: {1}]
  %s4 = inlined_call_operand.vmem [shape: f32[1,128], index: 4, kind: output, shape index: {2}]
  %5 = xla_tuple %s2, %s3, %s4
  %s6 = sld [smem:[#allocation0]]
  $region61: #{position_attention_forward.32} parent=0
    _
  %s8 = ssub.s32 1, %s6
  %s9 = scalar_select 0, %s8, %s6
  loop: start=0, step=1, limit=4
  $region2: #{position_attention_forward.32} parent=0 // loop_pre_header
    _
  $region3: #{position_attention_forward.32} parent=0 // loop_header
    %s11 = sphi 0, %s15
    %p12 = scmp.ge.s32.totalorder %s11, 4
    %s21 = sphi 0, %s23
    %s24 = sphi 0, %s21
    %s25 = sphi 0, %s24
    %s41 = sphi 0, %s25
    %s45 = sphi 0, %s45
    %s47 = sphi 0, %s45
    %s48 = sphi 0, %s47
    %s62 = sphi 0, %s48
    %s68 = sphi 0, %s70
    %s71 = sphi 0, %s68
    %s72 = sphi 0, %s71
    %s88 = sphi 0, %s72
    %s92 = sphi 0, %s92
    %s94 = sphi 0, %s92
    %s95 = sphi 0, %s94
    %s109 = sphi 0, %s95
    %s113 = sphi 0, %s113
    %s115 = sphi 0, %s113
    %s116 = sphi 0, %s115
    %s130 = sphi 0, %s116
  $region4: #{position_attention_forward.32} parent=0 // loop_header_branch
    %14 = sbr.rel (%p12) target = $region8
  $region5: #{position_attention_forward.32} parent=0 // loop_body
    %s16 = ssub.s32 %s11, 1
    %s17 = ssub.s32 %s11, 2
    %s18 = sadd.s32 %s11, 1
    %s19 = ssub.s32 %s11, %s18
    %p20 = scmp.eq.s32.totalorder %s19, 0
    %s22 = sadd.s32 %s21, 1
    %s23 = scalar_select %p20, %s21, %s22
    %p26 = pneg %p20
    %p27 = scmp.eq.s32.totalorder %s11, 1
    %p28 = por %p26, %p27
    %p29 = scmp.ne.s32.totalorder %s21, %s24
    %p30 = scmp.eq.s32.totalorder %s11, 0
    %p31 = por %p29, %p30
    %p32 = scmp.ne.s32.totalorder %s21, %s24
    %p33 = scmp.eq.s32.totalorder %s16, 1
    %p34 = por %p32, %p33
    %p35 = scmp.ne.s32.totalorder %s24, %s25
    %p36 = scmp.eq.s32.totalorder %s16, 0
    %p37 = por %p35, %p36
    %p38 = scmp.ne.s32.totalorder %s24, %s25
    %p39 = scmp.eq.s32.totalorder %s17, 1
    %p40 = por %p38, %p39
    %p42 = scmp.ne.s32.totalorder %s25, %s41
    %p43 = scmp.eq.s32.totalorder %s17, 0
    %p44 = por %p42, %p43
    %s46 = sadd.s32 %s45, 1
    %p49 = scmp.eq.s32.totalorder %s11, 1
    %p50 = scmp.ne.s32.totalorder %s45, %s47
    %p51 = scmp.eq.s32.totalorder %s11, 0
    %p52 = por %p50, %p51
    %p53 = scmp.ne.s32.totalorder %s45, %s47
    %p54 = scmp.eq.s32.totalorder %s16, 1
    %p55 = por %p53, %p54
    %p56 = scmp.ne.s32.totalorder %s47, %s48
    %p57 = scmp.eq.s32.totalorder %s16, 0
    %p58 = por %p56, %p57
    %p59 = scmp.ne.s32.totalorder %s47, %s48
    %p60 = scmp.eq.s32.totalorder %s17, 1
    %p61 = por %p59, %p60
    %p63 = scmp.ne.s32.totalorder %s48, %s62
    %p64 = scmp.eq.s32.totalorder %s17, 0
    %p65 = por %p63, %p64
    %s66 = ssub.s32 %s11, %s18
    %p67 = scmp.eq.s32.totalorder %s66, 0
    %s69 = sadd.s32 %s68, 1
    %s70 = scalar_select %p67, %s68, %s69
    %p73 = pneg %p67
    %p74 = scmp.eq.s32.totalorder %s11, 1
    %p75 = por %p73, %p74
    %p76 = scmp.ne.s32.totalorder %s68, %s71
    %p77 = scmp.eq.s32.totalorder %s11, 0
    %p78 = por %p76, %p77
    %p79 = scmp.ne.s32.totalorder %s68, %s71
    %p80 = scmp.eq.s32.totalorder %s16, 1
    %p81 = por %p79, %p80
    %p82 = scmp.ne.s32.totalorder %s71, %s72
    %p83 = scmp.eq.s32.totalorder %s16, 0
    %p84 = por %p82, %p83
    %p85 = scmp.ne.s32.totalorder %s71, %s72
    %p86 = scmp.eq.s32.totalorder %s17, 1
    %p87 = por %p85, %p86
    %p89 = scmp.ne.s32.totalorder %s72, %s88
    %p90 = scmp.eq.s32.totalorder %s17, 0
    %p91 = por %p89, %p90
    %s93 = sadd.s32 %s92, 1
    %p96 = scmp.eq.s32.totalorder %s11, 1
    %p97 = scmp.ne.s32.totalorder %s92, %s94
    %p98 = scmp.eq.s32.totalorder %s11, 0
    %p99 = por %p97, %p98
    %p100 = scmp.ne.s32.totalorder %s92, %s94
    %p101 = scmp.eq.s32.totalorder %s16, 1
    %p102 = por %p100, %p101
    %p103 = scmp.ne.s32.totalorder %s94, %s95
    %p104 = scmp.eq.s32.totalorder %s16, 0
    %p105 = por %p103, %p104
    %p106 = scmp.ne.s32.totalorder %s94, %s95
    %p107 = scmp.eq.s32.totalorder %s17, 1
    %p108 = por %p106, %p107
    %p110 = scmp.ne.s32.totalorder %s95, %s109
    %p111 = scmp.eq.s32.totalorder %s17, 0
    %p112 = por %p110, %p111
    %s114 = sadd.s32 %s113, 1
    %p117 = scmp.eq.s32.totalorder %s11, 1
    %p118 = scmp.ne.s32.totalorder %s113, %s115
    %p119 = scmp.eq.s32.totalorder %s11, 0
    %p120 = por %p118, %p119
    %p121 = scmp.ne.s32.totalorder %s113, %s115
    %p122 = scmp.eq.s32.totalorder %s16, 1
    %p123 = por %p121, %p122
    %p124 = scmp.ne.s32.totalorder %s115, %s116
    %p125 = scmp.eq.s32.totalorder %s16, 0
    %p126 = por %p124, %p125
    %p127 = scmp.ne.s32.totalorder %s115, %s116
    %p128 = scmp.eq.s32.totalorder %s17, 1
    %p129 = por %p127, %p128
    %p131 = scmp.ne.s32.totalorder %s116, %s130
    %p132 = scmp.eq.s32.totalorder %s17, 0
    %p133 = por %p131, %p132
    %p134 = scmp.le.s32.totalorder 1, %s11
    %p135 = scmp.lt.s32.totalorder %s11, 3
    %p136 = pnand %p134, %p135
    %p137 = pneg %p136
    // Predicated region
    $region9: #{position_attention_forward.32} parent=5 // pred_check
      _
    $region10: #{position_attention_forward.32} parent=5 // pred_check_branch
      %139 = sbr.rel (%p136) target = $region12
    $region11: #{position_attention_forward.32} parent=5 // pred_region
      %s140 = ssub.s32 %s11, 1
      // Predicated region
      $region13: #{position_attention_forward.32} parent=11 // pred_check
        %p141 = pneg %p58
      $region14: #{position_attention_forward.32} parent=11 // pred_check_branch
        %143 = sbr.rel (%p141) target = $region16
      $region15: #{position_attention_forward.32} parent=11 // pred_region
        _
      $region16: #{position_attention_forward.32} parent=11 // pred_fallthru
        _
    $region12: #{position_attention_forward.32} parent=5 // pred_fallthru
      _
    %p144 = scmp.lt.s32.totalorder %s11, 2
    // Predicated region
    $region17: #{position_attention_forward.32} parent=5 // pred_check
      %p145 = pneg %p144
    $region18: #{position_attention_forward.32} parent=5 // pred_check_branch
      %147 = sbr.rel (%p145) target = $region20
    $region19: #{position_attention_forward.32} parent=5 // pred_region
      // Predicated region
      $region21: #{position_attention_forward.32} parent=19 // pred_check
        %p148 = pneg %p31
      $region22: #{position_attention_forward.32} parent=19 // pred_check_branch
        %150 = sbr.rel (%p148) target = $region24
      $region23: #{position_attention_forward.32} parent=19 // pred_region
        %s151 = smul.u32 16, %s11
        %p152 = scmp.lt.s32.totalorder %s151, 31
        %s153 = scalar_select %p152, %s151, 31
        %s154 = smul.addr %s153, 4
        %s155 = scalar_lea.vmem %s0, %s154
        %s156 = smul.u32 16, %s11
      $region24: #{position_attention_forward.32} parent=19 // pred_fallthru
        _
    $region20: #{position_attention_forward.32} parent=5 // pred_fallthru
      _
    %p157 = scmp.le.s32.totalorder 1, %s11
    %p158 = scmp.lt.s32.totalorder %s11, 3
    %p159 = pnand %p157, %p158
    %p160 = pneg %p159
    // Predicated region
    $region25: #{position_attention_forward.32} parent=5 // pred_check
      _
    $region26: #{position_attention_forward.32} parent=5 // pred_check_branch
      %162 = sbr.rel (%p159) target = $region28
    $region27: #{position_attention_forward.32} parent=5 // pred_region
      %s163 = ssub.s32 %s11, 1
      %s164 = smul.u32 16, %s16
      %p165 = scmp.lt.s32.totalorder %s164, 31
      %s166 = scalar_select %p165, %s164, 31
      %s167 = smul.addr %s166, 4
      %s168 = scalar_lea.vmem %s0, %s167
      %p169 = pneg %p37
      %p170 = pneg %p34
      %p171 = pneg %p58
      %p172 = pneg %p55
      %p173 = pneg %p84
      %p174 = pneg %p81
      %s175 = smul.u32 16, %s16
      %p176 = scmp.lt.s32.totalorder %s175, 31
      %s177 = scalar_select %p176, %s175, 31
      %s178 = smul.addr %s177, 8
      %s179 = scalar_lea.vmem %s2, %s178
      %p180 = pneg %p105
      %p181 = pneg %p102
      %p182 = pneg %p126
      %p183 = pneg %p123
      %s184 = smul.u32 16, %s16
      %p185 = scmp.lt.s32.totalorder %s184, 31
      %s186 = scalar_select %p185, %s184, 31
      %s187 = smul.addr %s186, 4
      %s188 = scalar_lea.vmem %s0, %s187
      %s189 = smul.u32 16, %s16
      %s190 = smul.u32 16, %s16
      %p191 = scmp.lt.s32.totalorder %s190, 31
      %s192 = scalar_select %p191, %s190, 31
      %s193 = smul.addr %s192, 8
      %s194 = scalar_lea.vmem %s2, %s193
      %s195 = smul.u32 16, %s16
      %v197 = vld [vmem:[%s188] sm:$0xf]
      %v198 = vld [vmem:[%s188 + $0x4] sm:$0xf]
      %v199 = vld [vmem:[%s188 + $0x8] sm:$0xf]
      %v200 = vld [vmem:[%s188 + $0xc] sm:$0xf]
      %v201 = vld [vmem:[%s188 + $0x10] sm:$0xf]
      %v202 = vld [vmem:[%s188 + $0x14] sm:$0xf]
      %v203 = vld [vmem:[%s188 + $0x18] sm:$0xf]
      %v204 = vld [vmem:[%s188 + $0x1c] sm:$0xf]
      %v205 = vld [vmem:[%s188 + $0x20] sm:$0xf]
      %v206 = vld [vmem:[%s188 + $0x24] sm:$0xf]
      %v207 = vld [vmem:[%s188 + $0x28] sm:$0xf]
      %v208 = vld [vmem:[%s188 + $0x2c] sm:$0xf]
      %v209 = vld [vmem:[%s188 + $0x30] sm:$0xf]
      %v210 = vld [vmem:[%s188 + $0x34] sm:$0xf]
      %v211 = vld [vmem:[%s188 + $0x38] sm:$0xf]
      %v212 = vld [vmem:[%s188 + $0x3c] sm:$0xf]
      %v213 = vld [vmem:[%s1] sm:$0xf]
      %v214 = vld [vmem:[%s1 + $0x4] sm:$0xf]
      %v215 = vld [vmem:[%s1 + $0x8] sm:$0xf]
      %v216 = vld [vmem:[%s1 + $0xc] sm:$0xf]
      %v217 = vld [vmem:[%s1 + $0x10] sm:$0xf]
      %v218 = vld [vmem:[%s1 + $0x14] sm:$0xf]
      %v219 = vld [vmem:[%s1 + $0x18] sm:$0xf]
      %v220 = vld [vmem:[%s1 + $0x1c] sm:$0xf]
      %v221 = vld [vmem:[%s1 + $0x20] sm:$0xf]
      %v222 = vld [vmem:[%s1 + $0x24] sm:$0xf]
      %v223 = vld [vmem:[%s1 + $0x28] sm:$0xf]
      %v224 = vld [vmem:[%s1 + $0x2c] sm:$0xf]
      %v225 = vld [vmem:[%s1 + $0x30] sm:$0xf]
      %v226 = vld [vmem:[%s1 + $0x34] sm:$0xf]
      %v227 = vld [vmem:[%s1 + $0x38] sm:$0xf]
      %v228 = vld [vmem:[%s1 + $0x3c] sm:$0xf]
      %v245 = vunpack.c.l.b16 %v197
      %v246 = vunpack.c.l.b16 %v198
      %v247 = vunpack.c.l.b16 %v199
      %v248 = vunpack.c.l.b16 %v200
      %v249 = vunpack.c.l.b16 %v201
      %v250 = vunpack.c.l.b16 %v202
      %v251 = vunpack.c.l.b16 %v203
      %v252 = vunpack.c.l.b16 %v204
      %v253 = vunpack.c.l.b16 %v205
      %v254 = vunpack.c.l.b16 %v206
      %v255 = vunpack.c.l.b16 %v207
      %v256 = vunpack.c.l.b16 %v208
      %v257 = vunpack.c.l.b16 %v209
      %v258 = vunpack.c.l.b16 %v210
      %v259 = vunpack.c.l.b16 %v211
      %v260 = vunpack.c.l.b16 %v212
      %v261 = vpack.c.b16 %v246, %v245
      %v262 = vpack.c.b16 %v248, %v247
      %v263 = vpack.c.b16 %v250, %v249
      %v264 = vpack.c.b16 %v252, %v251
      %v265 = vpack.c.b16 %v254, %v253
      %v266 = vpack.c.b16 %v256, %v255
      %v267 = vpack.c.b16 %v258, %v257
      %v268 = vpack.c.b16 %v260, %v259
      %v293 = vunpack.c.l.b16 %v213
      %v294 = vunpack.c.l.b16 %v214
      %v295 = vunpack.c.l.b16 %v215
      %v296 = vunpack.c.l.b16 %v216
      %v297 = vunpack.c.l.b16 %v217
      %v298 = vunpack.c.l.b16 %v218
      %v299 = vunpack.c.l.b16 %v219
      %v300 = vunpack.c.l.b16 %v220
      %v301 = vunpack.c.l.b16 %v221
      %v302 = vunpack.c.l.b16 %v222
      %v303 = vunpack.c.l.b16 %v223
      %v304 = vunpack.c.l.b16 %v224
      %v305 = vunpack.c.l.b16 %v225
      %v306 = vunpack.c.l.b16 %v226
      %v307 = vunpack.c.l.b16 %v227
      %v308 = vunpack.c.l.b16 %v228
      %v309 = vpack.c.b16 %v294, %v293
      %v310 = vpack.c.b16 %v296, %v295
      %v311 = vpack.c.b16 %v298, %v297
      %v312 = vpack.c.b16 %v300, %v299
      %v313 = vpack.c.b16 %v302, %v301
      %v314 = vpack.c.b16 %v304, %v303
      %v315 = vpack.c.b16 %v306, %v305
      %v316 = vpack.c.b16 %v308, %v307
      %325 = vmatprep.subr.bf16.mxu0 0
      %326 = vmatpush1.bf16.msra.mxu0 %v309
      %327 = vmatprep.subr.bf16.mxu0 0
      %328 = vmatpush1.bf16.msra.mxu0 %v310
      %329 = vmatprep.subr.bf16.mxu0 0
      %330 = vmatpush1.bf16.msra.mxu0 %v311
      %331 = vmatprep.subr.bf16.mxu0 0
      %332 = vmatpush1.bf16.msra.mxu0 %v312
      %333 = vmatprep.subr.bf16.mxu0 0
      %334 = vmatpush1.bf16.msra.mxu0 %v313
      %335 = vmatprep.subr.bf16.mxu0 0
      %336 = vmatpush1.bf16.msra.mxu0 %v314
      %337 = vmatprep.subr.bf16.mxu0 0
      %338 = vmatpush1.bf16.msra.mxu0 %v315
      %339 = vmatprep.subr.bf16.mxu0 0
      %340 = vmatpush1.bf16.msra.mxu0 %v316
      %341 = vmatprep.subr.bf16.mxu0 0
      %342 = vmatpush1.bf16.msra.mxu0 0
      %343 = vmatprep.subr.bf16.mxu0 0
      %344 = vmatpush1.bf16.msra.mxu0 0
      %345 = vmatprep.subr.bf16.mxu0 0
      %346 = vmatpush1.bf16.msra.mxu0 0
      %347 = vmatprep.subr.bf16.mxu0 0
      %348 = vmatpush1.bf16.msra.mxu0 0
      %349 = vmatprep.subr.bf16.mxu0 0
      %350 = vmatpush1.bf16.msra.mxu0 0
      %351 = vmatprep.subr.bf16.mxu0 0
      %352 = vmatpush1.bf16.msra.mxu0 0
      %353 = vmatprep.subr.bf16.mxu0 0
      %354 = vmatpush1.bf16.msra.mxu0 0
      %355 = vmatprep.subr.bf16.mxu0 0
      %356 = vmatpush1.bf16.msra.mxu0 0
      %357 = vmatprep.mubr.bf16.mxu0 0
      %358 = vmatmul.mubr.bf16.gmra.mrb[0].mxu0 %v261
      %v359 = vpop.f32.mrb[0].mxu0
      %v360 = vadd.f32 0.0, %v359
      %v361 = vpop.f32.mrb[0].mxu0
      %v362 = vpop.f32.mrb[0].mxu0
      %v363 = vadd.f32 0.0, %v362
      %v364 = vpop.f32.mrb[0].mxu0
      %365 = vmatprep.mubr.bf16.mxu0 0
      %366 = vmatmul.mubr.bf16.gmra.mrb[0].mxu0 %v262
      %v367 = vpop.f32.mrb[0].mxu0
      %v368 = vadd.f32 0.0, %v367
      %v369 = vpop.f32.mrb[0].mxu0
      %v370 = vpop.f32.mrb[0].mxu0
      %v371 = vadd.f32 0.0, %v370
      %v372 = vpop.f32.mrb[0].mxu0
      %373 = vmatprep.mubr.bf16.mxu0 0
      %374 = vmatmul.mubr.bf16.gmra.mrb[0].mxu0 %v263
      %v375 = vpop.f32.mrb[0].mxu0
      %v376 = vadd.f32 0.0, %v375
      %v377 = vpop.f32.mrb[0].mxu0
      %v378 = vpop.f32.mrb[0].mxu0
      %v379 = vadd.f32 0.0, %v378
      %v380 = vpop.f32.mrb[0].mxu0
      %381 = vmatprep.mubr.bf16.mxu0 0
      %382 = vmatmul.mubr.bf16.gmra.mrb[0].mxu0 %v264
      %v383 = vpop.f32.mrb[0].mxu0
      %v384 = vadd.f32 0.0, %v383
      %v385 = vpop.f32.mrb[0].mxu0
      %v386 = vpop.f32.mrb[0].mxu0
      %v387 = vadd.f32 0.0, %v386
      %v388 = vpop.f32.mrb[0].mxu0
      %389 = vmatprep.mubr.bf16.mxu0 0
      %390 = vmatmul.mubr.bf16.gmra.mrb[0].mxu0 %v265
      %v391 = vpop.f32.mrb[0].mxu0
      %v392 = vadd.f32 0.0, %v391
      %v393 = vpop.f32.mrb[0].mxu0
      %v394 = vpop.f32.mrb[0].mxu0
      %v395 = vadd.f32 0.0, %v394
      %v396 = vpop.f32.mrb[0].mxu0
      %397 = vmatprep.mubr.bf16.mxu0 0
      %398 = vmatmul.mubr.bf16.gmra.mrb[0].mxu0 %v266
      %v399 = vpop.f32.mrb[0].mxu0
      %v400 = vadd.f32 0.0, %v399
      %v401 = vpop.f32.mrb[0].mxu0
      %v402 = vpop.f32.mrb[0].mxu0
      %v403 = vadd.f32 0.0, %v402
      %v404 = vpop.f32.mrb[0].mxu0
      %405 = vmatprep.mubr.bf16.mxu0 0
      %406 = vmatmul.mubr.bf16.gmra.mrb[0].mxu0 %v267
      %v407 = vpop.f32.mrb[0].mxu0
      %v408 = vadd.f32 0.0, %v407
      %v409 = vpop.f32.mrb[0].mxu0
      %v410 = vpop.f32.mrb[0].mxu0
      %v411 = vadd.f32 0.0, %v410
      %v412 = vpop.f32.mrb[0].mxu0
      %413 = vmatprep.mubr.bf16.mxu0 0
      %414 = vmatmul.mubr.bf16.gmra.mrb[0].mxu0 %v268
      %v415 = vpop.f32.mrb[0].mxu0
      %v416 = vadd.f32 0.0, %v415
      %v417 = vpop.f32.mrb[0].mxu0
      %v418 = vpop.f32.mrb[0].mxu0
      %v419 = vadd.f32 0.0, %v418
      %v420 = vpop.f32.mrb[0].mxu0
      %421 = vdwg.mxu0
      %422 = vst [vmem:[%s194] sm:$0xff] %v360
      %423 = vst [vmem:[%s194 + $0x8] sm:$0xff] %v363
      %424 = vst [vmem:[%s194 + $0x10] sm:$0xff] %v368
      %425 = vst [vmem:[%s194 + $0x18] sm:$0xff] %v371
      %426 = vst [vmem:[%s194 + $0x20] sm:$0xff] %v376
      %427 = vst [vmem:[%s194 + $0x28] sm:$0xff] %v379
      %428 = vst [vmem:[%s194 + $0x30] sm:$0xff] %v384
      %429 = vst [vmem:[%s194 + $0x38] sm:$0xff] %v387
      %430 = vst [vmem:[%s194 + $0x40] sm:$0xff] %v392
      %431 = vst [vmem:[%s194 + $0x48] sm:$0xff] %v395
      %432 = vst [vmem:[%s194 + $0x50] sm:$0xff] %v400
      %433 = vst [vmem:[%s194 + $0x58] sm:$0xff] %v403
      %434 = vst [vmem:[%s194 + $0x60] sm:$0xff] %v408
      %435 = vst [vmem:[%s194 + $0x68] sm:$0xff] %v411
      %436 = vst [vmem:[%s194 + $0x70] sm:$0xff] %v416
      %437 = vst [vmem:[%s194 + $0x78] sm:$0xff] %v419
      %p438 = scmp.eq.s32.totalorder %s16, 0
      // Predicated region
      $region29: #{position_attention_forward.32} parent=27 // pred_check
        %p439 = pneg %p438
      $region30: #{position_attention_forward.32} parent=27 // pred_check_branch
        %441 = sbr.rel (%p439) target = $region32
      $region31: #{position_attention_forward.32} parent=27 // pred_region
        %442 = vst [vmem:[%s3] sm:$0x1] 0.0
        %443 = vst [vmem:[%s4] sm:$0x1] 0.0
      $region32: #{position_attention_forward.32} parent=27 // pred_fallthru
        _
      %v444 = vld [vmem:[%s3] sm:$0x1]
      %v445 = vadd.f32 %v360, %v363
      %v446 = vadd.f32 %v445, %v368
      %v447 = vadd.f32 %v446, %v371
      %v448 = vadd.f32 %v447, %v376
      %v449 = vadd.f32 %v448, %v379
      %v450 = vadd.f32 %v449, %v384
      %v451 = vadd.f32 %v450, %v387
      %v452 = vadd.f32 %v451, %v392
      %v453 = vadd.f32 %v452, %v395
      %v454 = vadd.f32 %v453, %v400
      %v455 = vadd.f32 %v454, %v403
      %v456 = vadd.f32 %v455, %v408
      %v457 = vadd.f32 %v456, %v411
      %v458 = vadd.f32 %v457, %v416
      %v459 = vadd.f32 %v458, %v419
      %v460 = vrot.slane %v459, 4
      %v461 = vadd.f32 %v459, %v460
      %v462 = vrot.slane %v461, 2
      %v463 = vadd.f32 %v461, %v462
      %v464 = vrot.slane %v463, 1
      %v465 = vadd.f32 %v463, %v464
      %v466 = vadd.f32 %v444, %v465
      %467 = vst [vmem:[%s3] sm:$0x1] %v466
      %v468 = vld [vmem:[%s4] sm:$0x1]
      %v469 = vmul.f32 %v360, %v360
      %v470 = vmul.f32 %v363, %v363
      %v471 = vmul.f32 %v368, %v368
      %v472 = vmul.f32 %v371, %v371
      %v473 = vmul.f32 %v376, %v376
      %v474 = vmul.f32 %v379, %v379
      %v475 = vmul.f32 %v384, %v384
      %v476 = vmul.f32 %v387, %v387
      %v477 = vmul.f32 %v392, %v392
      %v478 = vmul.f32 %v395, %v395
      %v479 = vmul.f32 %v400, %v400
      %v480 = vmul.f32 %v403, %v403
      %v481 = vmul.f32 %v408, %v408
      %v482 = vmul.f32 %v411, %v411
      %v483 = vmul.f32 %v416, %v416
      %v484 = vmul.f32 %v419, %v419
      %v485 = vadd.f32 %v469, %v470
      %v486 = vadd.f32 %v485, %v471
      %v487 = vadd.f32 %v486, %v472
      %v488 = vadd.f32 %v487, %v473
      %v489 = vadd.f32 %v488, %v474
      %v490 = vadd.f32 %v489, %v475
      %v491 = vadd.f32 %v490, %v476
      %v492 = vadd.f32 %v491, %v477
      %v493 = vadd.f32 %v492, %v478
      %v494 = vadd.f32 %v493, %v479
      %v495 = vadd.f32 %v494, %v480
      %v496 = vadd.f32 %v495, %v481
      %v497 = vadd.f32 %v496, %v482
      %v498 = vadd.f32 %v497, %v483
      %v499 = vadd.f32 %v498, %v484
      %v500 = vrot.slane %v499, 4
      %v501 = vadd.f32 %v499, %v500
      %v502 = vrot.slane %v501, 2
      %v503 = vadd.f32 %v501, %v502
      %v504 = vrot.slane %v503, 1
      %v505 = vadd.f32 %v503, %v504
      %v506 = vadd.f32 %v468, %v505
      %507 = vst [vmem:[%s4] sm:$0x1] %v506
      %s508 = smul.u32 16, %s16
      %p509 = scmp.lt.s32.totalorder %s508, 31
      %s510 = scalar_select %p509, %s508, 31
      %s511 = smul.addr %s510, 8
      %s512 = scalar_lea.vmem %s2, %s511
      // Predicated region
      $region33: #{position_attention_forward.32} parent=27 // pred_check
        %p513 = pneg %p81
      $region34: #{position_attention_forward.32} parent=27 // pred_check_branch
        %515 = sbr.rel (%p513) target = $region36
      $region35: #{position_attention_forward.32} parent=27 // pred_region
        %s516 = smul.u32 16, %s16
      $region36: #{position_attention_forward.32} parent=27 // pred_fallthru
        _
      // Predicated region
      $region37: #{position_attention_forward.32} parent=27 // pred_check
        %p517 = pneg %p102
      $region38: #{position_attention_forward.32} parent=27 // pred_check_branch
        %519 = sbr.rel (%p517) target = $region40
      $region39: #{position_attention_forward.32} parent=27 // pred_region
        _
      $region40: #{position_attention_forward.32} parent=27 // pred_fallthru
        _
      // Predicated region
      $region41: #{position_attention_forward.32} parent=27 // pred_check
        %p520 = pneg %p123
      $region42: #{position_attention_forward.32} parent=27 // pred_check_branch
        %522 = sbr.rel (%p520) target = $region44
      $region43: #{position_attention_forward.32} parent=27 // pred_region
        _
      $region44: #{position_attention_forward.32} parent=27 // pred_fallthru
        _
      // Predicated region
      $region45: #{position_attention_forward.32} parent=27 // pred_check
        %p523 = pneg %p102
      $region46: #{position_attention_forward.32} parent=27 // pred_check_branch
        %525 = sbr.rel (%p523) target = $region48
      $region47: #{position_attention_forward.32} parent=27 // pred_region
        _
      $region48: #{position_attention_forward.32} parent=27 // pred_fallthru
        _
      // Predicated region
      $region49: #{position_attention_forward.32} parent=27 // pred_check
        %p526 = pneg %p123
      $region50: #{position_attention_forward.32} parent=27 // pred_check_branch
        %528 = sbr.rel (%p526) target = $region52
      $region51: #{position_attention_forward.32} parent=27 // pred_region
        _
      $region52: #{position_attention_forward.32} parent=27 // pred_fallthru
        _
    $region28: #{position_attention_forward.32} parent=5 // pred_fallthru
      _
    %p529 = scmp.le.s32.totalorder 2, %s11
    // Predicated region
    $region53: #{position_attention_forward.32} parent=5 // pred_check
      %p530 = pneg %p529
    $region54: #{position_attention_forward.32} parent=5 // pred_check_branch
      %532 = sbr.rel (%p530) target = $region56
    $region55: #{position_attention_forward.32} parent=5 // pred_region
      %s533 = ssub.s32 %s11, 2
      // Predicated region
      $region57: #{position_attention_forward.32} parent=55 // pred_check
        %p534 = pneg %p87
      $region58: #{position_attention_forward.32} parent=55 // pred_check_branch
        %536 = sbr.rel (%p534) target = $region60
      $region59: #{position_attention_forward.32} parent=55 // pred_region
        %s537 = smul.u32 16, %s17
        %p538 = scmp.lt.s32.totalorder %s537, 31
        %s539 = scalar_select %p538, %s537, 31
        %s540 = smul.addr %s539, 8
        %s541 = scalar_lea.vmem %s2, %s540
      $region60: #{position_attention_forward.32} parent=55 // pred_fallthru
        _
    $region56: #{position_attention_forward.32} parent=5 // pred_fallthru
      _
  $region6: #{position_attention_forward.32} parent=0 // loop_footer
    %s15 = sadd.s32 1, %s11
  $region7: #{position_attention_forward.32} parent=0 // loop_footer_branch
    %10 = sbr.rel target = $region3
  $region8: #{position_attention_forward.32} parent=0 // loop_exit
    _

// kernel: position_attention_forward.34
$region0: #{position_attention_forward.34}
  #allocation0 [shape = 'u32[]', space=smem, size = 0x4, offset = 0x4, fixed_abs, tag = 'smem constant byte address 0x4 - core index']
  #allocation1 [shape = 'u32[144,128]{1,0:T(1,128)}', space=vmem, size = 0x12000, scoped, tag = 'internal scratch']
  %s0 = inlined_call_operand.vmem [shape: bf16[8,32], index: 0, kind: input, shape index: {}]
  %s1 = inlined_call_operand.vmem [shape: bf16[32,32], index: 1, kind: input, shape index: {}]
  %s2 = inlined_call_operand.vmem [shape: f32[1,32], index: 2, kind: input, shape index: {}]
  %s3 = inlined_call_operand.vmem [shape: bf16[8,32], index: 3, kind: output, shape index: {}]
  %s4 = sld [smem:[#allocation0]]
  $region22: #{position_attention_forward.34} parent=0
    _
  %s6 = ssub.s32 1, %s4
  %s7 = scalar_select 0, %s6, %s4
  // Predicated region
  $region2: #{position_attention_forward.34} parent=0 // pred_check
    _
  $region3: #{position_attention_forward.34} parent=0 // pred_check_branch
    %9 = sbr.rel (0) target = $region5
  $region4: #{position_attention_forward.34} parent=0 // pred_region
    _
  $region5: #{position_attention_forward.34} parent=0 // pred_fallthru
    _
  // Predicated region
  $region6: #{position_attention_forward.34} parent=0 // pred_check
    _
  $region7: #{position_attention_forward.34} parent=0 // pred_check_branch
    %11 = sbr.rel (0) target = $region9
  $region8: #{position_attention_forward.34} parent=0 // pred_region
    _
  $region9: #{position_attention_forward.34} parent=0 // pred_fallthru
    _
  // Predicated region
  $region10: #{position_attention_forward.34} parent=0 // pred_check
    _
  $region11: #{position_attention_forward.34} parent=0 // pred_check_branch
    %13 = sbr.rel (0) target = $region13
  $region12: #{position_attention_forward.34} parent=0 // pred_region
    _
  $region13: #{position_attention_forward.34} parent=0 // pred_fallthru
    _
  %v15 = vld [vmem:[%s0] sm:$0xf]
  %v16 = vld [vmem:[%s1] sm:$0xf]
  %v17 = vld [vmem:[%s1 + $0x4] sm:$0xf]
  %v18 = vld [vmem:[%s1 + $0x8] sm:$0xf]
  %v19 = vld [vmem:[%s1 + $0xc] sm:$0xf]
  %v20 = vld [vmem:[%s2] sm:$0x1]
  %v22 = vlaneseq
  %v23 = vshrl.u32 %v22, 7
  %v24 = vsub.s32 0, %v23
  %v25 = vrot.slane %v20, %v24
  %v31 = vunpack.c.l.b16 %v16
  %v32 = vunpack.c.l.b16 %v17
  %v33 = vunpack.c.l.b16 %v18
  %v34 = vunpack.c.l.b16 %v19
  %v35 = vpack.c.b16 %v32, %v31
  %v36 = vpack.c.b16 %v34, %v33
  %vm39 = vcmask 261120
  %v41 = vsel %vm39, %v15, 0
  %43 = vmatprep.subr.bf16.mxu0 0
  %44 = vmatpush1.bf16.msra.mxu0 %v35
  %45 = vmatprep.subr.bf16.mxu0 0
  %46 = vmatpush1.bf16.msra.mxu0 %v36
  %47 = vmatprep.subr.bf16.mxu0 0
  %48 = vmatpush1.bf16.msra.mxu0 0
  %49 = vmatprep.subr.bf16.mxu0 0
  %50 = vmatpush1.bf16.msra.mxu0 0
  %51 = vmatprep.subr.bf16.mxu0 0
  %52 = vmatpush1.bf16.msra.mxu0 0
  %53 = vmatprep.subr.bf16.mxu0 0
  %54 = vmatpush1.bf16.msra.mxu0 0
  %55 = vmatprep.subr.bf16.mxu0 0
  %56 = vmatpush1.bf16.msra.mxu0 0
  %57 = vmatprep.subr.bf16.mxu0 0
  %58 = vmatpush1.bf16.msra.mxu0 0
  %59 = vmatprep.subr.bf16.mxu0 0
  %60 = vmatpush1.bf16.msra.mxu0 0
  %61 = vmatprep.subr.bf16.mxu0 0
  %62 = vmatpush1.bf16.msra.mxu0 0
  %63 = vmatprep.subr.bf16.mxu0 0
  %64 = vmatpush1.bf16.msra.mxu0 0
  %65 = vmatprep.subr.bf16.mxu0 0
  %66 = vmatpush1.bf16.msra.mxu0 0
  %67 = vmatprep.subr.bf16.mxu0 0
  %68 = vmatpush1.bf16.msra.mxu0 0
  %69 = vmatprep.subr.bf16.mxu0 0
  %70 = vmatpush1.bf16.msra.mxu0 0
  %71 = vmatprep.subr.bf16.mxu0 0
  %72 = vmatpush1.bf16.msra.mxu0 0
  %73 = vmatprep.subr.bf16.mxu0 0
  %74 = vmatpush1.bf16.msra.mxu0 0
  %75 = vmatprep.mubr.bf16.mxu0 0
  %76 = vmatmul.mubr.bf16.gmra.mrb[0].mxu0 %v41
  %v77 = vpop.f32.mrb[0].mxu0
  %v78 = vadd.f32 %v25, %v77
  %v79 = vpop.f32.mrb[0].mxu0
  %v80 = vpop.f32.mrb[0].mxu0
  %v81 = vpop.f32.mrb[0].mxu0
  %82 = vdwg.mxu0
  %v83 = vpack.c.bf16 %v78, %v78
  %vm84 = vcmask 257024
  %85 = vst.msk [vmem:[%s3] sm:$0xf] %vm84, %v83
  // Predicated region
  $region14: #{position_attention_forward.34} parent=0 // pred_check
    _
  $region15: #{position_attention_forward.34} parent=0 // pred_check_branch
    %87 = sbr.rel (0) target = $region17
  $region16: #{position_attention_forward.34} parent=0 // pred_region
    _
  $region17: #{position_attention_forward.34} parent=0 // pred_fallthru
    _
  // Predicated region
  $region18: #{position_attention_forward.34} parent=0 // pred_check
    _
  $region19: #{position_attention_forward.34} parent=0 // pred_check_branch
    %89 = sbr.rel (0) target = $region21
  $region20: #{position_attention_forward.34} parent=0 // pred_region
    _
  $region21: #{position_attention_forward.34} parent=0 // pred_fallthru
    _

// kernel: position_attention_forward.35
$region0: #{position_attention_forward.35}
  #allocation0 [shape = 'u32[]', space=smem, size = 0x4, offset = 0x4, fixed_abs, tag = 'smem constant byte address 0x4 - core index']
  #allocation1 [shape = 'u32[144,128]{1,0:T(1,128)}', space=vmem, size = 0x12000, scoped, tag = 'internal scratch']
  %s0 = inlined_call_operand.vmem [shape: bf16[8,32], index: 0, kind: input, shape index: {}]
  %s1 = inlined_call_operand.vmem [shape: bf16[2,128,32], index: 1, kind: input, shape index: {}]
  %s2 = inlined_call_operand.vmem [shape: bf16[2,128,32], index: 2, kind: input, shape index: {}]
  %s3 = inlined_call_operand.hbm [shape: f32[2,8,32], index: 3, kind: output, shape index: {0}]
  %s4 = inlined_call_operand.vmem [shape: f32[2,8,128], index: 4, kind: output, shape index: {1}]
  %5 = xla_tuple %s3, %s4
  %s6 = sld [smem:[#allocation0]]
  $region53: #{position_attention_forward.35} parent=0
    _
  %s8 = ssub.s32 1, %s6
  %s9 = scalar_select 0, %s8, %s6
  $region1: #{position_attention_forward.35} parent=0
    #allocation2 [shape = 'u8[8192]{0}', space=vmem, size = 0x2000, scoped, tag = 'output window, operand 0']
    #allocation3 [shape = 's32[2]{0}', space=sflag, size = 0x8, scoped, tag = 'scoped memory for position_attention_forward.35']
    %10 = vsyncpa [#allocation3], 0
    %s11 = scalar_lea.sflag [#allocation3], 1
    %12 = vsyncpa %s11, 0
    loop: start=0, step=1, limit=4
    $region2: #{position_attention_forward.35} parent=1 // loop_pre_header
      _
    $region3: #{position_attention_forward.35} parent=1 // loop_header
      %s14 = sphi 0, %s18
      %p15 = scmp.ge.s32.totalorder %s14, 4
      %s22 = sphi 0, %s22
      %s24 = sphi 0, %s22
      %s25 = sphi 0, %s24
      %s39 = sphi 0, %s25
      %s45 = sphi 0, %s47
      %s48 = sphi 0, %s45
      %s49 = sphi 0, %s48
      %s65 = sphi 0, %s49
      %s71 = sphi 0, %s73
      %s74 = sphi 0, %s71
      %s75 = sphi 0, %s74
      %s91 = sphi 0, %s75
      %s97 = sphi 0, %s99
      %s100 = sphi 0, %s97
      %s101 = sphi 0, %s100
      %s117 = sphi 0, %s101
      %s123 = sphi 0, %s125
      %s126 = sphi 0, %s123
      %s127 = sphi 0, %s126
      %s143 = sphi 0, %s127
    $region4: #{position_attention_forward.35} parent=1 // loop_header_branch
      %17 = sbr.rel (%p15) target = $region8
    $region5: #{position_attention_forward.35} parent=1 // loop_body
      %s19 = ssub.s32 %s14, 1
      %s20 = ssub.s32 %s14, 2
      %s21 = sadd.s32 %s14, 1
      %s23 = sadd.s32 %s22, 1
      %p26 = scmp.eq.s32.totalorder %s14, 1
      %p27 = scmp.ne.s32.totalorder %s22, %s24
      %p28 = scmp.eq.s32.totalorder %s14, 0
      %p29 = por %p27, %p28
      %p30 = scmp.ne.s32.totalorder %s22, %s24
      %p31 = scmp.eq.s32.totalorder %s19, 1
      %p32 = por %p30, %p31
      %p33 = scmp.ne.s32.totalorder %s24, %s25
      %p34 = scmp.eq.s32.totalorder %s19, 0
      %p35 = por %p33, %p34
      %p36 = scmp.ne.s32.totalorder %s24, %s25
      %p37 = scmp.eq.s32.totalorder %s20, 1
      %p38 = por %p36, %p37
      %p40 = scmp.ne.s32.totalorder %s25, %s39
      %p41 = scmp.eq.s32.totalorder %s20, 0
      %p42 = por %p40, %p41
      %s43 = ssub.s32 %s14, %s21
      %p44 = scmp.eq.s32.totalorder %s43, 0
      %s46 = sadd.s32 %s45, 1
      %s47 = scalar_select %p44, %s45, %s46
      %p50 = pneg %p44
      %p51 = scmp.eq.s32.totalorder %s14, 1
      %p52 = por %p50, %p51
      %p53 = scmp.ne.s32.totalorder %s45, %s48
      %p54 = scmp.eq.s32.totalorder %s14, 0
      %p55 = por %p53, %p54
      %p56 = scmp.ne.s32.totalorder %s45, %s48
      %p57 = scmp.eq.s32.totalorder %s19, 1
      %p58 = por %p56, %p57
      %p59 = scmp.ne.s32.totalorder %s48, %s49
      %p60 = scmp.eq.s32.totalorder %s19, 0
      %p61 = por %p59, %p60
      %p62 = scmp.ne.s32.totalorder %s48, %s49
      %p63 = scmp.eq.s32.totalorder %s20, 1
      %p64 = por %p62, %p63
      %p66 = scmp.ne.s32.totalorder %s49, %s65
      %p67 = scmp.eq.s32.totalorder %s20, 0
      %p68 = por %p66, %p67
      %s69 = ssub.s32 %s14, %s21
      %p70 = scmp.eq.s32.totalorder %s69, 0
      %s72 = sadd.s32 %s71, 1
      %s73 = scalar_select %p70, %s71, %s72
      %p76 = pneg %p70
      %p77 = scmp.eq.s32.totalorder %s14, 1
      %p78 = por %p76, %p77
      %p79 = scmp.ne.s32.totalorder %s71, %s74
      %p80 = scmp.eq.s32.totalorder %s14, 0
      %p81 = por %p79, %p80
      %p82 = scmp.ne.s32.totalorder %s71, %s74
      %p83 = scmp.eq.s32.totalorder %s19, 1
      %p84 = por %p82, %p83
      %p85 = scmp.ne.s32.totalorder %s74, %s75
      %p86 = scmp.eq.s32.totalorder %s19, 0
      %p87 = por %p85, %p86
      %p88 = scmp.ne.s32.totalorder %s74, %s75
      %p89 = scmp.eq.s32.totalorder %s20, 1
      %p90 = por %p88, %p89
      %p92 = scmp.ne.s32.totalorder %s75, %s91
      %p93 = scmp.eq.s32.totalorder %s20, 0
      %p94 = por %p92, %p93
      %s95 = ssub.s32 %s14, %s21
      %p96 = scmp.eq.s32.totalorder %s95, 0
      %s98 = sadd.s32 %s97, 1
      %s99 = scalar_select %p96, %s97, %s98
      %p102 = pneg %p96
      %p103 = scmp.eq.s32.totalorder %s14, 1
      %p104 = por %p102, %p103
      %p105 = scmp.ne.s32.totalorder %s97, %s100
      %p106 = scmp.eq.s32.totalorder %s14, 0
      %p107 = por %p105, %p106
      %p108 = scmp.ne.s32.totalorder %s97, %s100
      %p109 = scmp.eq.s32.totalorder %s19, 1
      %p110 = por %p108, %p109
      %p111 = scmp.ne.s32.totalorder %s100, %s101
      %p112 = scmp.eq.s32.totalorder %s19, 0
      %p113 = por %p111, %p112
      %p114 = scmp.ne.s32.totalorder %s100, %s101
      %p115 = scmp.eq.s32.totalorder %s20, 1
      %p116 = por %p114, %p115
      %p118 = scmp.ne.s32.totalorder %s101, %s117
      %p119 = scmp.eq.s32.totalorder %s20, 0
      %p120 = por %p118, %p119
      %s121 = ssub.s32 %s14, %s21
      %p122 = scmp.eq.s32.totalorder %s121, 0
      %s124 = sadd.s32 %s123, 1
      %s125 = scalar_select %p122, %s123, %s124
      %p128 = pneg %p122
      %p129 = scmp.eq.s32.totalorder %s14, 1
      %p130 = por %p128, %p129
      %p131 = scmp.ne.s32.totalorder %s123, %s126
      %p132 = scmp.eq.s32.totalorder %s14, 0
      %p133 = por %p131, %p132
      %p134 = scmp.ne.s32.totalorder %s123, %s126
      %p135 = scmp.eq.s32.totalorder %s19, 1
      %p136 = por %p134, %p135
      %p137 = scmp.ne.s32.totalorder %s126, %s127
      %p138 = scmp.eq.s32.totalorder %s19, 0
      %p139 = por %p137, %p138
      %p140 = scmp.ne.s32.totalorder %s126, %s127
      %p141 = scmp.eq.s32.totalorder %s20, 1
      %p142 = por %p140, %p141
      %p144 = scmp.ne.s32.totalorder %s127, %s143
      %p145 = scmp.eq.s32.totalorder %s20, 0
      %p146 = por %p144, %p145
      %p147 = scmp.le.s32.totalorder 1, %s14
      %p148 = scmp.lt.s32.totalorder %s14, 3
      %p149 = pnand %p147, %p148
      %p150 = pneg %p149
      // Predicated region
      $region9: #{position_attention_forward.35} parent=5 // pred_check
        _
      $region10: #{position_attention_forward.35} parent=5 // pred_check_branch
        %152 = sbr.rel (%p149) target = $region12
      $region11: #{position_attention_forward.35} parent=5 // pred_region
        %s153 = ssub.s32 %s14, 1
        // Predicated region
        $region13: #{position_attention_forward.35} parent=11 // pred_check
          %p154 = pneg %p35
        $region14: #{position_attention_forward.35} parent=11 // pred_check_branch
          %156 = sbr.rel (%p154) target = $region16
        $region15: #{position_attention_forward.35} parent=11 // pred_region
          _
        $region16: #{position_attention_forward.35} parent=11 // pred_fallthru
          _
      $region12: #{position_attention_forward.35} parent=5 // pred_fallthru
        _
      %p157 = scmp.lt.s32.totalorder %s14, 2
      // Predicated region
      $region17: #{position_attention_forward.35} parent=5 // pred_check
        %p158 = pneg %p157
      $region18: #{position_attention_forward.35} parent=5 // pred_check_branch
        %160 = sbr.rel (%p158) target = $region20
      $region19: #{position_attention_forward.35} parent=5 // pred_region
        // Predicated region
        $region21: #{position_attention_forward.35} parent=19 // pred_check
          %p161 = pneg %p55
        $region22: #{position_attention_forward.35} parent=19 // pred_check_branch
          %163 = sbr.rel (%p161) target = $region24
        $region23: #{position_attention_forward.35} parent=19 // pred_region
          %p164 = scmp.lt.s32.totalorder %s14, 1
          %s165 = scalar_select %p164, %s14, 1
          %s166 = smul.addr %s165, 16
          %s167 = smul.addr %s166, 4
          %s168 = scalar_lea.vmem %s1, %s167
        $region24: #{position_attention_forward.35} parent=19 // pred_fallthru
          _
        // Predicated region
        $region25: #{position_attention_forward.35} parent=19 // pred_check
          %p169 = pneg %p81
        $region26: #{position_attention_forward.35} parent=19 // pred_check_branch
          %171 = sbr.rel (%p169) target = $region28
        $region27: #{position_attention_forward.35} parent=19 // pred_region
          %p172 = scmp.lt.s32.totalorder %s14, 1
          %s173 = scalar_select %p172, %s14, 1
          %s174 = smul.addr %s173, 16
          %s175 = smul.addr %s174, 4
          %s176 = scalar_lea.vmem %s2, %s175
        $region28: #{position_attention_forward.35} parent=19 // pred_fallthru
          _
      $region20: #{position_attention_forward.35} parent=5 // pred_fallthru
        _
      %p177 = scmp.le.s32.totalorder 1, %s14
      %p178 = scmp.lt.s32.totalorder %s14, 3
      %p179 = pnand %p177, %p178
      %p180 = pneg %p179
      // Predicated region
      $region29: #{position_attention_forward.35} parent=5 // pred_check
        _
      $region30: #{position_attention_forward.35} parent=5 // pred_check_branch
        %182 = sbr.rel (%p179) target = $region32
      $region31: #{position_attention_forward.35} parent=5 // pred_region
        %s183 = ssub.s32 %s14, 1
        %p184 = pneg %p35
        %p185 = pneg %p32
        %p186 = scmp.lt.s32.totalorder %s19, 1
        %s187 = scalar_select %p186, %s19, 1
        %s188 = smul.addr %s187, 16
        %s189 = smul.addr %s188, 4
        %s190 = scalar_lea.vmem %s1, %s189
        %p191 = pneg %p61
        %p192 = pneg %p58
        %p193 = scmp.lt.s32.totalorder %s19, 1
        %s194 = scalar_select %p193, %s19, 1
        %s195 = smul.addr %s194, 16
        %s196 = smul.addr %s195, 4
        %s197 = scalar_lea.vmem %s2, %s196
        %p198 = pneg %p87
        %p199 = pneg %p84
        %p200 = pneg %p113
        %p201 = pneg %p110
        %s202 = sand.u32 %s100, 1
        %s203 = scalar_lea.sflag [#allocation3], %s202
        %s204 = sand.u32 %s100, 1
        %s205 = smul.addr %s204, 8
        %s206 = scalar_lea.vmem [#allocation2], %s205
        %p207 = pneg %p139
        %p208 = pneg %p136
        %p209 = scmp.lt.s32.totalorder %s19, 1
        %s210 = scalar_select %p209, %s19, 1
        %s211 = smul.addr %s210, 8
        %s212 = scalar_lea.vmem %s4, %s211
        %p213 = scmp.lt.s32.totalorder %s19, 1
        %s214 = scalar_select %p213, %s19, 1
        %s215 = smul.addr %s214, 16
        %s216 = smul.addr %s215, 4
        %s217 = scalar_lea.vmem %s1, %s216
        %p218 = scmp.lt.s32.totalorder %s19, 1
        %s219 = scalar_select %p218, %s19, 1
        %s220 = smul.addr %s219, 16
        %s221 = smul.addr %s220, 4
        %s222 = scalar_lea.vmem %s2, %s221
        %p223 = scmp.lt.s32.totalorder %s19, 1
        %s224 = scalar_select %p223, %s19, 1
        %s225 = smul.addr %s224, 8
        %s226 = scalar_lea.vmem %s4, %s225
        %v228 = vld [vmem:[%s0] sm:$0xf]
        %v229 = vld [vmem:[%s217] sm:$0xf]
        %v230 = vld [vmem:[%s217 + $0x4] sm:$0xf]
        %v231 = vld [vmem:[%s217 + $0x8] sm:$0xf]
        %v232 = vld [vmem:[%s217 + $0xc] sm:$0xf]
        %v233 = vld [vmem:[%s217 + $0x10] sm:$0xf]
        %v234 = vld [vmem:[%s217 + $0x14] sm:$0xf]
        %v235 = vld [vmem:[%s217 + $0x18] sm:$0xf]
        %v236 = vld [vmem:[%s217 + $0x1c] sm:$0xf]
        %v237 = vld [vmem:[%s217 + $0x20] sm:$0xf]
        %v238 = vld [vmem:[%s217 + $0x24] sm:$0xf]
        %v239 = vld [vmem:[%s217 + $0x28] sm:$0xf]
        %v240 = vld [vmem:[%s217 + $0x2c] sm:$0xf]
        %v241 = vld [vmem:[%s217 + $0x30] sm:$0xf]
        %v242 = vld [vmem:[%s217 + $0x34] sm:$0xf]
        %v243 = vld [vmem:[%s217 + $0x38] sm:$0xf]
        %v244 = vld [vmem:[%s217 + $0x3c] sm:$0xf]
        %v261 = vunpack.c.l.b16 %v229
        %v262 = vunpack.c.l.b16 %v230
        %v263 = vunpack.c.l.b16 %v231
        %v264 = vunpack.c.l.b16 %v232
        %v265 = vunpack.c.l.b16 %v233
        %v266 = vunpack.c.l.b16 %v234
        %v267 = vunpack.c.l.b16 %v235
        %v268 = vunpack.c.l.b16 %v236
        %v269 = vunpack.c.l.b16 %v237
        %v270 = vunpack.c.l.b16 %v238
        %v271 = vunpack.c.l.b16 %v239
        %v272 = vunpack.c.l.b16 %v240
        %v273 = vunpack.c.l.b16 %v241
        %v274 = vunpack.c.l.b16 %v242
        %v275 = vunpack.c.l.b16 %v243
        %v276 = vunpack.c.l.b16 %v244
        %v277 = vpack.c.b16 %v262, %v261
        %v278 = vpack.c.b16 %v264, %v263
        %v279 = vpack.c.b16 %v266, %v265
        %v280 = vpack.c.b16 %v268, %v267
        %v281 = vpack.c.b16 %v270, %v269
        %v282 = vpack.c.b16 %v272, %v271
        %v283 = vpack.c.b16 %v274, %v273
        %v284 = vpack.c.b16 %v276, %v275
        %vm285 = vcmask 261120
        %v287 = vsel %vm285, %v228, 0
        %v290 = vsel %vm285, %v277, 0
        %v293 = vsel %vm285, %v278, 0
        %v296 = vsel %vm285, %v279, 0
        %v299 = vsel %vm285, %v280, 0
        %v302 = vsel %vm285, %v281, 0
        %v305 = vsel %vm285, %v282, 0
        %v308 = vsel %vm285, %v283, 0
        %v311 = vsel %vm285, %v284, 0
        %313 = vmatprep.subr.bf16.mxu0 0
        %314 = vmatpush1.bf16.xpose.msra.mxu0 %v290
        %315 = vmatprep.subr.bf16.mxu0 0
        %316 = vmatpush1.bf16.xpose.msra.mxu0 %v293
        %317 = vmatprep.subr.bf16.mxu0 0
        %318 = vmatpush1.bf16.xpose.msra.mxu0 %v296
        %319 = vmatprep.subr.bf16.mxu0 0
        %320 = vmatpush1.bf16.xpose.msra.mxu0 %v299
        %321 = vmatprep.subr.bf16.mxu0 0
        %322 = vmatpush1.bf16.xpose.msra.mxu0 %v302
        %323 = vmatprep.subr.bf16.mxu0 0
        %324 = vmatpush1.bf16.xpose.msra.mxu0 %v305
        %325 = vmatprep.subr.bf16.mxu0 0
        %326 = vmatpush1.bf16.xpose.msra.mxu0 %v308
        %327 = vmatprep.subr.bf16.mxu0 0
        %328 = vmatpush1.bf16.xpose.msra.mxu0 %v311
        %329 = vmatprep.subr.bf16.mxu0 0
        %330 = vmatpush1.bf16.xpose.msra.mxu0 0
        %331 = vmatprep.subr.bf16.mxu0 0
        %332 = vmatpush1.bf16.xpose.msra.mxu0 0
        %333 = vmatprep.subr.bf16.mxu0 0
        %334 = vmatpush1.bf16.xpose.msra.mxu0 0
        %335 = vmatprep.subr.bf16.mxu0 0
        %336 = vmatpush1.bf16.xpose.msra.mxu0 0
        %337 = vmatprep.subr.bf16.mxu0 0
        %338 = vmatpush1.bf16.xpose.msra.mxu0 0
        %339 = vmatprep.subr.bf16.mxu0 0
        %340 = vmatpush1.bf16.xpose.msra.mxu0 0
        %341 = vmatprep.subr.bf16.mxu0 0
        %342 = vmatpush1.bf16.xpose.msra.mxu0 0
        %343 = vmatprep.subr.bf16.mxu0 0
        %344 = vmatpush1.bf16.xpose.msra.mxu0 0
        %345 = vmatprep.mubr.bf16.mxu0 0
        %346 = vmatmul.mubr.bf16.gmra.mrb[0].mxu0 %v287
        %v347 = vpop.f32.mrb[0].mxu0
        %v348 = vadd.f32 0.0, %v347
        %v349 = vpop.f32.mrb[0].mxu0
        %v350 = vpop.f32.mrb[0].mxu0
        %v351 = vpop.f32.mrb[0].mxu0
        %352 = vdwg.mxu0
        %v353 = vmul.f32 %v348, 0.17677669
        %354 = vmax.xlane.f32.xlu0 %v353
        %v355 = vpop.xlane.xlu0 %354
        %v356 = vsub.f32 %v353, %v355
        %v357 = vmul.f32 %v356, 1.442695
        %v358 = vpow.pop %v357
        %359 = vadd.xlane.f32.xlu0 %v358
        %v360 = vpop.xlane.xlu0 %359
        %v361 = vrcp.pop %v360
        %v362 = vmul.f32 %v358, %v361
        %363 = vst [vmem:[%s226] sm:$0xff] %v362
        %v364 = vpack.c.bf16 %v362, %v362
        %v365 = vld [vmem:[%s222] sm:$0xf]
        %v366 = vld [vmem:[%s222 + $0x4] sm:$0xf]
        %v367 = vld [vmem:[%s222 + $0x8] sm:$0xf]
        %v368 = vld [vmem:[%s222 + $0xc] sm:$0xf]
        %v369 = vld [vmem:[%s222 + $0x10] sm:$0xf]
        %v370 = vld [vmem:[%s222 + $0x14] sm:$0xf]
        %v371 = vld [vmem:[%s222 + $0x18] sm:$0xf]
        %v372 = vld [vmem:[%s222 + $0x1c] sm:$0xf]
        %v373 = vld [vmem:[%s222 + $0x20] sm:$0xf]
        %v374 = vld [vmem:[%s222 + $0x24] sm:$0xf]
        %v375 = vld [vmem:[%s222 + $0x28] sm:$0xf]
        %v376 = vld [vmem:[%s222 + $0x2c] sm:$0xf]
        %v377 = vld [vmem:[%s222 + $0x30] sm:$0xf]
        %v378 = vld [vmem:[%s222 + $0x34] sm:$0xf]
        %v379 = vld [vmem:[%s222 + $0x38] sm:$0xf]
        %v380 = vld [vmem:[%s222 + $0x3c] sm:$0xf]
        %v397 = vunpack.c.l.b16 %v365
        %v398 = vunpack.c.l.b16 %v366
        %v399 = vunpack.c.l.b16 %v367
        %v400 = vunpack.c.l.b16 %v368
        %v401 = vunpack.c.l.b16 %v369
        %v402 = vunpack.c.l.b16 %v370
        %v403 = vunpack.c.l.b16 %v371
        %v404 = vunpack.c.l.b16 %v372
        %v405 = vunpack.c.l.b16 %v373
        %v406 = vunpack.c.l.b16 %v374
        %v407 = vunpack.c.l.b16 %v375
        %v408 = vunpack.c.l.b16 %v376
        %v409 = vunpack.c.l.b16 %v377
        %v410 = vunpack.c.l.b16 %v378
        %v411 = vunpack.c.l.b16 %v379
        %v412 = vunpack.c.l.b16 %v380
        %v413 = vpack.c.b16 %v398, %v397
        %v414 = vpack.c.b16 %v400, %v399
        %v415 = vpack.c.b16 %v402, %v401
        %v416 = vpack.c.b16 %v404, %v403
        %v417 = vpack.c.b16 %v406, %v405
        %v418 = vpack.c.b16 %v408, %v407
        %v419 = vpack.c.b16 %v410, %v409
        %v420 = vpack.c.b16 %v412, %v411
        %429 = vmatprep.subr.bf16.mxu0 0
        %430 = vmatpush1.bf16.msra.mxu0 %v413
        %431 = vmatprep.subr.bf16.mxu0 0
        %432 = vmatpush1.bf16.msra.mxu0 %v414
        %433 = vmatprep.subr.bf16.mxu0 0
        %434 = vmatpush1.bf16.msra.mxu0 %v415
        %435 = vmatprep.subr.bf16.mxu0 0
        %436 = vmatpush1.bf16.msra.mxu0 %v416
        %437 = vmatprep.subr.bf16.mxu0 0
        %438 = vmatpush1.bf16.msra.mxu0 %v417
        %439 = vmatprep.subr.bf16.mxu0 0
        %440 = vmatpush1.bf16.msra.mxu0 %v418
        %441 = vmatprep.subr.bf16.mxu0 0
        %442 = vmatpush1.bf16.msra.mxu0 %v419
        %443 = vmatprep.subr.bf16.mxu0 0
        %444 = vmatpush1.bf16.msra.mxu0 %v420
        %445 = vmatprep.subr.bf16.mxu0 0
        %446 = vmatpush1.bf16.msra.mxu0 0
        %447 = vmatprep.subr.bf16.mxu0 0
        %448 = vmatpush1.bf16.msra.mxu0 0
        %449 = vmatprep.subr.bf16.mxu0 0
        %450 = vmatpush1.bf16.msra.mxu0 0
        %451 = vmatprep.subr.bf16.mxu0 0
        %452 = vmatpush1.bf16.msra.mxu0 0
        %453 = vmatprep.subr.bf16.mxu0 0
        %454 = vmatpush1.bf16.msra.mxu0 0
        %455 = vmatprep.subr.bf16.mxu0 0
        %456 = vmatpush1.bf16.msra.mxu0 0
        %457 = vmatprep.subr.bf16.mxu0 0
        %458 = vmatpush1.bf16.msra.mxu0 0
        %459 = vmatprep.subr.bf16.mxu0 0
        %460 = vmatpush1.bf16.msra.mxu0 0
        %461 = vmatprep.mubr.bf16.mxu0 0
        %462 = vmatmul.mubr.bf16.gmra.mrb[0].mxu0 %v364
        %v463 = vpop.f32.mrb[0].mxu0
        %v464 = vadd.f32 0.0, %v463
        %v465 = vpop.f32.mrb[0].mxu0
        %v466 = vpop.f32.mrb[0].mxu0
        %v467 = vpop.f32.mrb[0].mxu0
        %468 = vdwg.mxu0
        %469 = vst.msk [vmem:[%s206] sm:$0xff] %vm285, %v464
        %s470 = sand.u32 %s100, 1
        %s471 = scalar_lea.sflag [#allocation3], %s470
        %s472 = sand.u32 %s100, 1
        %s473 = smul.addr %s472, 8
        %s474 = scalar_lea.vmem [#allocation2], %s473
        %p475 = scmp.lt.s32.totalorder %s19, 1
        %s476 = scalar_select %p475, %s19, 1
        %s477 = smul.addr %s476, 8
        %s478 = scalar_lea.vmem %s4, %s477
        // Predicated region
        $region33: #{position_attention_forward.35} parent=31 // pred_check
          %p479 = pneg %p110
        $region34: #{position_attention_forward.35} parent=31 // pred_check_branch
          %481 = sbr.rel (%p479) target = $region36
        $region35: #{position_attention_forward.35} parent=31 // pred_region
          %s483 = ssub.s32 128, 128
          %484 = vsyncadd %s471, %s483
          %s485 = smul.addr %s19, 128
          %s486 = scalar_lea.hbm %s3, %s485
          %s488 = sshll.u32 %s474, 4
          %s489 = int_to_ptr.vmem [resolvable:$true] %s488
          %491 = dma.vmem_to_hbm [thread:$0]  %s489, 128, %s486, %s471
        $region36: #{position_attention_forward.35} parent=31 // pred_fallthru
          _
        // Predicated region
        $region37: #{position_attention_forward.35} parent=31 // pred_check
          %p492 = pneg %p136
        $region38: #{position_attention_forward.35} parent=31 // pred_check_branch
          %494 = sbr.rel (%p492) target = $region40
        $region39: #{position_attention_forward.35} parent=31 // pred_region
          _
        $region40: #{position_attention_forward.35} parent=31 // pred_fallthru
          _
      $region32: #{position_attention_forward.35} parent=5 // pred_fallthru
        _
      %p495 = scmp.le.s32.totalorder 2, %s14
      // Predicated region
      $region41: #{position_attention_forward.35} parent=5 // pred_check
        %p496 = pneg %p495
      $region42: #{position_attention_forward.35} parent=5 // pred_check_branch
        %498 = sbr.rel (%p496) target = $region44
      $region43: #{position_attention_forward.35} parent=5 // pred_region
        %s499 = ssub.s32 %s14, 2
        // Predicated region
        $region45: #{position_attention_forward.35} parent=43 // pred_check
          %p500 = pneg %p116
        $region46: #{position_attention_forward.35} parent=43 // pred_check_branch
          %502 = sbr.rel (%p500) target = $region48
        $region47: #{position_attention_forward.35} parent=43 // pred_region
          %s503 = sand.u32 %s101, 1
          %s504 = scalar_lea.sflag [#allocation3], %s503
          %s505 = sand.u32 %s101, 1
          %s506 = smul.addr %s505, 8
          %s507 = scalar_lea.vmem [#allocation2], %s506
          %508 = dma.done %s504, 128
        $region48: #{position_attention_forward.35} parent=43 // pred_fallthru
          _
        // Predicated region
        $region49: #{position_attention_forward.35} parent=43 // pred_check
          %p509 = pneg %p142
        $region50: #{position_attention_forward.35} parent=43 // pred_check_branch
          %511 = sbr.rel (%p509) target = $region52
        $region51: #{position_attention_forward.35} parent=43 // pred_region
          %p512 = scmp.lt.s32.totalorder %s20, 1
          %s513 = scalar_select %p512, %s20, 1
          %s514 = smul.addr %s513, 8
          %s515 = scalar_lea.vmem %s4, %s514
        $region52: #{position_attention_forward.35} parent=43 // pred_fallthru
          _
      $region44: #{position_attention_forward.35} parent=5 // pred_fallthru
        _
    $region6: #{position_attention_forward.35} parent=1 // loop_footer
      %s18 = sadd.s32 1, %s14
    $region7: #{position_attention_forward.35} parent=1 // loop_footer_branch
      %13 = sbr.rel target = $region3
    $region8: #{position_attention_forward.35} parent=1 // loop_exit
      _
    %516 = vsyncpa [#allocation3], 1
    %s517 = scalar_lea.sflag [#allocation3], 1
    %518 = vsyncpa %s517, 1

</llo_original>
